<compile_context>
chip_gen: v7x
topology: tpu7x:2x2x1
jax: 0.10.0
libtpu: 0.0.40
codegen_flags: <defaults>
</compile_context>

<pallas_src>
import math

import jax
import jax.numpy as jnp
from jax.experimental import pallas as pl
from jax.experimental.pallas import tpu as pltpu


# ----------------------------------------------------------------------------
# Fused kernel: full encoder stack + decoder for one batch element.
# grid = (B,) ; every weight is a full-extent block (constant index_map -> resident).
# ----------------------------------------------------------------------------
def transformer_kernel(x_ref, mask_ref,
                       wqkv_ref, bqkv_ref, wo_ref, bo_ref,
                       ln1w_ref, ln1b_ref, ln2w_ref, ln2b_ref,
                       w1_ref, b1_ref, w2_ref, b2_ref,
                       dec_w_ref, dec_b_ref,
                       out_ref):
    x = x_ref[0]                                   # (S, D) f32, embedded + pos-encoded
    S, D = x.shape
    L = wqkv_ref.shape[0]
    nhead = wqkv_ref.shape[1]
    hd = wqkv_ref.shape[-1] // 3
    bf16 = jnp.bfloat16

    # additive key-padding mask, broadcast once (not per head / per layer op chain)
    mask3 = jnp.broadcast_to(mask_ref[0][None, :, :], (nhead, S, S))   # (H, S, S) f32

    def layer_norm(y, w, b):
        mu = jnp.mean(y, axis=-1, keepdims=True)
        var = jnp.mean((y - mu) ** 2, axis=-1, keepdims=True)
        return (y - mu) * jax.lax.rsqrt(var + 1e-5) * w + b

    for l in range(L):                             # static unroll; weights stay in VMEM
        # ---- multi-head self attention: all heads in batched contractions ----------
        xh = jnp.broadcast_to(x.astype(bf16)[None], (nhead, S, D))      # (H, S, D) bf16
        # per-head qkv projection; 1/sqrt(hd) already folded into the q columns
        qkvh = jnp.einsum('hsd,hdf->hsf', xh, wqkv_ref[l],
                          preferred_element_type=jnp.float32) + bqkv_ref[l]  # (H,S,3hd)
        qh = qkvh[:, :, 0:hd]
        kh = qkvh[:, :, hd:2 * hd]
        vh = qkvh[:, :, 2 * hd:3 * hd]

        s = jnp.einsum('hqd,hkd->hqk', qh.astype(bf16), kh.astype(bf16),
                       preferred_element_type=jnp.float32) + mask3          # (H, S, S)
        s = s - jnp.max(s, axis=-1, keepdims=True)
        p = jnp.exp(s)
        p = p * pl.reciprocal(jnp.sum(p, axis=-1, keepdims=True), approx=True)

        ctx = jnp.einsum('hqk,hkd->hqd', p.astype(bf16), vh.astype(bf16),
                         preferred_element_type=jnp.float32)                # (H, S, hd)
        # output projection: per-head (hd, D) blocks, summed over heads (no concat)
        attn = jnp.einsum('hsd,hdf->hsf', ctx.astype(bf16), wo_ref[l],
                          preferred_element_type=jnp.float32).sum(axis=0) + bo_ref[l]
        x = layer_norm(x + attn, ln1w_ref[l], ln1b_ref[l])

        # ---- feed-forward -----------------------------------------------------------
        h1 = jnp.dot(x.astype(bf16), w1_ref[l],
                     preferred_element_type=jnp.float32) + b1_ref[l]
        h1 = jnp.maximum(h1, 0.0)                                           # ReLU
        ff = jnp.dot(h1.astype(bf16), w2_ref[l],
                     preferred_element_type=jnp.float32) + b2_ref[l]
        x = layer_norm(x + ff, ln2w_ref[l], ln2b_ref[l])

    # ---- fused decoder: lane-dense output (ntoken padded to a multiple of 128) ------
    out_ref[0] = (jnp.dot(x.astype(bf16), dec_w_ref[...],
                          preferred_element_type=jnp.float32) + dec_b_ref[...])


def transformer_encoder_decoder_pallas(x, mask_add, params):
    """x: [B, S, D] f32, mask_add: [B, 1, S] f32 additive. Returns [B, S, nt_pad] f32."""
    B, S, D = x.shape
    nt_pad = params["dec_w"].shape[1]

    def full_spec(arr):
        nd = arr.ndim
        return pl.BlockSpec(arr.shape, lambda b, _nd=nd: (0,) * _nd)

    in_specs = [
        pl.BlockSpec((1, S, D), lambda b: (b, 0, 0)),     # x
        pl.BlockSpec((1, 1, S), lambda b: (b, 0, 0)),     # additive key-padding mask
        full_spec(params["wqkv"]), full_spec(params["bqkv"]),
        full_spec(params["wo"]), full_spec(params["bo"]),
        full_spec(params["ln1w"]), full_spec(params["ln1b"]),
        full_spec(params["ln2w"]), full_spec(params["ln2b"]),
        full_spec(params["w1"]), full_spec(params["b1"]),
        full_spec(params["w2"]), full_spec(params["b2"]),
        full_spec(params["dec_w"]), full_spec(params["dec_b"]),
    ]
    out_specs = pl.BlockSpec((1, S, nt_pad), lambda b: (b, 0, 0))

    return pl.pallas_call(
        transformer_kernel,
        out_shape=jax.ShapeDtypeStruct((B, S, nt_pad), jnp.float32),
        grid_spec=pltpu.PrefetchScalarGridSpec(
            num_scalar_prefetch=0,
            grid=(B,),
            in_specs=in_specs,
            out_specs=out_specs),
        compiler_params=pltpu.CompilerParams(
            dimension_semantics=("parallel",)),
    )(x, mask_add,
      params["wqkv"], params["bqkv"], params["wo"], params["bo"],
      params["ln1w"], params["ln1b"], params["ln2w"], params["ln2b"],
      params["w1"], params["b1"], params["w2"], params["b2"],
      params["dec_w"], params["dec_b"])


# ----------------------------------------------------------------------------
# Full forward (glue: embedding gather, positional encoding, layout)
# ----------------------------------------------------------------------------
def transformer_model_forward(src_tokens, key_padding_mask, params):
    """src_tokens: [S, B] int32 (PyTorch layout), key_padding_mask: [B, S] bool (True = pad).
    Returns [B, S, ntoken] (matches the PyTorch output after .transpose(0, 1))."""
    S, B = src_tokens.shape
    D = params["emb"].shape[1]
    ntoken = params["ntoken"]
    emb = params["emb"][src_tokens]                                      # [S, B, D]
    x = emb * math.sqrt(D) + params["pe"][:S]                            # dropout = identity
    x = jnp.transpose(x, (1, 0, 2)).astype(jnp.float32)                  # -> [B, S, D]
    mask_add = jnp.where(key_padding_mask, -1e9, 0.0).astype(jnp.float32)[:, None, :]
    out_pad = transformer_encoder_decoder_pallas(x, mask_add, params)    # [B, S, nt_pad]
    # TODO(synk): postprocess() depends on external `token.tonote`; not translatable.
    return out_pad[:, :, :ntoken]


# ----------------------------------------------------------------------------
# Deterministic parameter init (PyTorch layouts generated, then rearranged once on the
# host into the kernel's pre-transposed / head-batched / lane-padded layouts).
# ----------------------------------------------------------------------------
def init_params(key, ntoken, d_model, nhead, d_hid, nlayers, max_len=64):
    ks = jax.random.split(key, 8)
    u = lambda k, shape, r: jax.random.uniform(k, shape, jnp.float32, -r, r)
    hd = d_model // nhead
    scale = 1.0 / math.sqrt(hd)
    L = nlayers
    bf16 = jnp.bfloat16

    # positional encoding buffer pe: [max_len, 1, d_model]
    position = jnp.arange(max_len, dtype=jnp.float32)[:, None]
    div_term = jnp.exp(jnp.arange(0, d_model, 2, dtype=jnp.float32)
                       * (-math.log(10000.0) / d_model))
    pe = jnp.zeros((max_len, 1, d_model), jnp.float32)
    pe = pe.at[:, 0, 0::2].set(jnp.sin(position * div_term))
    pe = pe.at[:, 0, 1::2].set(jnp.cos(position * div_term))

    # --- attention in_proj in PyTorch layout (3D, D), then fold scale + head-batch ----
    wqkv = u(ks[1], (L, 3 * d_model, d_model), 1.0 / math.sqrt(d_model))
    bqkv = jnp.zeros((L, 3 * d_model), jnp.float32)
    wqkv = wqkv.at[:, :d_model, :].multiply(scale)       # fold 1/sqrt(hd) into q weights
    bqkv = bqkv.at[:, :d_model].multiply(scale)

    def head_w(w):   # (L, d_model, d_model) -> (L, H, D, hd), pre-transposed (x @ w)
        return w.reshape(L, nhead, hd, d_model).transpose(0, 1, 3, 2)

    def head_b(b):   # (L, d_model) -> (L, H, 1, hd)
        return b.reshape(L, nhead, 1, hd)

    wq, wk, wv = wqkv[:, :d_model], wqkv[:, d_model:2 * d_model], wqkv[:, 2 * d_model:]
    bq, bk, bv = bqkv[:, :d_model], bqkv[:, d_model:2 * d_model], bqkv[:, 2 * d_model:]
    wqkv_h = jnp.concatenate([head_w(wq), head_w(wk), head_w(wv)], axis=-1)  # (L,H,D,3hd)
    bqkv_h = jnp.concatenate([head_b(bq), head_b(bk), head_b(bv)], axis=-1)  # (L,H,1,3hd)

    # out_proj (D, D): attn = concat_heads @ wo.T  ->  per-head (hd, D) blocks of wo.T
    wo = u(ks[2], (L, d_model, d_model), 1.0 / math.sqrt(d_model))
    wo_h = wo.transpose(0, 2, 1).reshape(L, nhead, hd, d_model)              # (L,H,hd,D)

    # feed-forward weights, pre-transposed so the kernel computes x @ w
    w1 = u(ks[3], (L, d_hid, d_model), 1.0 / math.sqrt(d_model)).transpose(0, 2, 1)
    w2 = u(ks[4], (L, d_model, d_hid), 1.0 / math.sqrt(d_hid)).transpose(0, 2, 1)

    # decoder: pre-transposed (D, ntoken) and lane-padded to a multiple of 128
    nt_pad = ((ntoken + 127) // 128) * 128
    dec_w = u(ks[5], (ntoken, d_model), 0.1).T                               # (D, ntoken)
    dec_w = jnp.pad(dec_w, ((0, 0), (0, nt_pad - ntoken)))
    dec_b = jnp.zeros((1, nt_pad), jnp.float32)                              # decoder bias = 0

    params = {
        "ntoken": ntoken,
        "emb": u(ks[0], (ntoken, d_model), 0.1),     # nn.Embedding, uniform(-.1,.1)
        "pe": pe,
        # bf16 matmul operands (MXU), f32 biases / LayerNorm params (VPU)
        "wqkv": wqkv_h.astype(bf16), "bqkv": bqkv_h,
        "wo": wo_h.astype(bf16), "bo": jnp.zeros((L, 1, d_model), jnp.float32),
        "ln1w": jnp.ones((L, 1, d_model), jnp.float32),
        "ln1b": jnp.zeros((L, 1, d_model), jnp.float32),
        "ln2w": jnp.ones((L, 1, d_model), jnp.float32),
        "ln2b": jnp.zeros((L, 1, d_model), jnp.float32),
        "w1": w1.astype(bf16), "b1": jnp.zeros((L, 1, d_hid), jnp.float32),
        "w2": w2.astype(bf16), "b2": jnp.zeros((L, 1, d_model), jnp.float32),
        "dec_w": dec_w.astype(bf16), "dec_b": dec_b,
    }
    return params


if __name__ == "__main__":
    # small shapes consistent with the module's forward
    ntoken, d_model, nhead_, d_hid_, nlayers_ = 48, 32, 8, 64, 2
    S, B = 8, 2

    key = jax.random.PRNGKey(0)
    k_params, k_tokens = jax.random.split(key)
    params = init_params(k_params, ntoken, d_model, nhead_, d_hid_, nlayers_)

    src = jax.random.randint(k_tokens, (S, B), 0, ntoken, dtype=jnp.int32)   # [seq, batch]
    pad_mask = jnp.zeros((B, S), dtype=bool).at[1, -2:].set(True)            # [batch, seq]

    out = transformer_model_forward(src, pad_mask, params)
    out = jax.block_until_ready(out)

    assert out.shape == (B, S, ntoken), out.shape
    assert bool(jnp.all(jnp.isfinite(out)))
    print("KERNEL_OK")
</pallas_src>

<mosaic_0001>
module attributes {stable_mosaic.version = 11 : i64} {
  func.func @transformer_kernel(%arg0: i32, %arg1: memref<1x8x32xf32, #tpu.memory_space<vmem>>, %arg2: memref<1x1x8xf32, #tpu.memory_space<vmem>>, %arg3: memref<2x8x32x12xbf16, #tpu.memory_space<vmem>>, %arg4: memref<2x8x1x12xf32, #tpu.memory_space<vmem>>, %arg5: memref<2x8x4x32xbf16, #tpu.memory_space<vmem>>, %arg6: memref<2x1x32xf32, #tpu.memory_space<vmem>>, %arg7: memref<2x1x32xf32, #tpu.memory_space<vmem>>, %arg8: memref<2x1x32xf32, #tpu.memory_space<vmem>>, %arg9: memref<2x1x32xf32, #tpu.memory_space<vmem>>, %arg10: memref<2x1x32xf32, #tpu.memory_space<vmem>>, %arg11: memref<2x32x64xbf16, #tpu.memory_space<vmem>>, %arg12: memref<2x1x64xf32, #tpu.memory_space<vmem>>, %arg13: memref<2x64x32xbf16, #tpu.memory_space<vmem>>, %arg14: memref<2x1x32xf32, #tpu.memory_space<vmem>>, %arg15: memref<32x128xbf16, #tpu.memory_space<vmem>>, %arg16: memref<1x128xf32, #tpu.memory_space<vmem>>, %arg17: memref<1x8x128xf32, #tpu.memory_space<vmem>>) attributes {dimension_semantics = [#tpu.dimension_semantics<parallel>], iteration_bounds = array<i64: 2>, scalar_prefetch = 0 : i64, scratch_operands = 0 : i64, tpu.core_type = #tpu.core_type<tc>, window_params = [{transform_indices = @transform_0, window_bounds = array<i64: 1, 8, 32>}, {transform_indices = @transform_1, window_bounds = array<i64: 1, 1, 8>}, {pipeline_mode = #tpu.pipeline_mode<synchronous>, transform_indices = @transform_2, window_bounds = array<i64: 2, 8, 32, 12>}, {pipeline_mode = #tpu.pipeline_mode<synchronous>, transform_indices = @transform_3, window_bounds = array<i64: 2, 8, 1, 12>}, {pipeline_mode = #tpu.pipeline_mode<synchronous>, transform_indices = @transform_4, window_bounds = array<i64: 2, 8, 4, 32>}, {pipeline_mode = #tpu.pipeline_mode<synchronous>, transform_indices = @transform_5, window_bounds = array<i64: 2, 1, 32>}, {pipeline_mode = #tpu.pipeline_mode<synchronous>, transform_indices = @transform_6, window_bounds = array<i64: 2, 1, 32>}, {pipeline_mode = #tpu.pipeline_mode<synchronous>, transform_indices = @transform_7, window_bounds = array<i64: 2, 1, 32>}, {pipeline_mode = #tpu.pipeline_mode<synchronous>, transform_indices = @transform_8, window_bounds = array<i64: 2, 1, 32>}, {pipeline_mode = #tpu.pipeline_mode<synchronous>, transform_indices = @transform_9, window_bounds = array<i64: 2, 1, 32>}, {pipeline_mode = #tpu.pipeline_mode<synchronous>, transform_indices = @transform_10, window_bounds = array<i64: 2, 32, 64>}, {pipeline_mode = #tpu.pipeline_mode<synchronous>, transform_indices = @transform_11, window_bounds = array<i64: 2, 1, 64>}, {pipeline_mode = #tpu.pipeline_mode<synchronous>, transform_indices = @transform_12, window_bounds = array<i64: 2, 64, 32>}, {pipeline_mode = #tpu.pipeline_mode<synchronous>, transform_indices = @transform_13, window_bounds = array<i64: 2, 1, 32>}, {pipeline_mode = #tpu.pipeline_mode<synchronous>, transform_indices = @transform_14, window_bounds = array<i64: 32, 128>}, {pipeline_mode = #tpu.pipeline_mode<synchronous>, transform_indices = @transform_15, window_bounds = array<i64: 1, 128>}, {transform_indices = @transform_16, window_bounds = array<i64: 1, 8, 128>}]} {
    %c0 = arith.constant 0 : index
    %c0_0 = arith.constant 0 : index
    %c0_1 = arith.constant 0 : index
    %0 = vector.load %arg1[%c0, %c0_0, %c0_1] : memref<1x8x32xf32, #tpu.memory_space<vmem>>, vector<1x8x32xf32>
    %1 = vector.shape_cast %0 : vector<1x8x32xf32> to vector<8x32xf32>
    %c0_2 = arith.constant 0 : index
    %c0_3 = arith.constant 0 : index
    %c0_4 = arith.constant 0 : index
    %2 = vector.load %arg2[%c0_2, %c0_3, %c0_4] : memref<1x1x8xf32, #tpu.memory_space<vmem>>, vector<1x1x8xf32>
    %3 = vector.shape_cast %2 : vector<1x1x8xf32> to vector<1x8xf32>
    %4 = vector.shape_cast %3 : vector<1x8xf32> to vector<1x1x8xf32>
    %5 = vector.shape_cast %4 : vector<1x1x8xf32> to vector<1x1x8xf32>
    %6 = vector.broadcast %5 : vector<1x1x8xf32> to vector<8x8x8xf32>
    %7 = arith.truncf %1 : vector<8x32xf32> to vector<8x32xbf16>
    %8 = vector.shape_cast %7 : vector<8x32xbf16> to vector<1x8x32xbf16>
    %9 = vector.shape_cast %8 : vector<1x8x32xbf16> to vector<1x8x32xbf16>
    %10 = vector.broadcast %9 : vector<1x8x32xbf16> to vector<8x8x32xbf16>
    %c0_5 = arith.constant 0 : index
    %c0_6 = arith.constant 0 : index
    %c0_7 = arith.constant 0 : index
    %c0_8 = arith.constant 0 : index
    %11 = vector.load %arg3[%c0_5, %c0_6, %c0_7, %c0_8] : memref<2x8x32x12xbf16, #tpu.memory_space<vmem>>, vector<1x8x32x12xbf16>
    %12 = vector.shape_cast %11 : vector<1x8x32x12xbf16> to vector<8x32x12xbf16>
    "tpu.trace_start"() <{level = 10 : i32, message = "hsd,hdf->hsf"}> : () -> ()
    %cst = arith.constant dense<0.000000e+00> : vector<8x8x12xf32>
    %13 = tpu.matmul %10, %12, %cst {dimension_numbers = #tpu.dot_dimension_numbers<[2], [1], [1], [2], [0, 0, 0, 1, 1, 2], [0], [0]>} : vector<8x8x32xbf16>, vector<8x32x12xbf16>, vector<8x8x12xf32> -> vector<8x8x12xf32>
    "tpu.trace_stop"() : () -> ()
    %c0_9 = arith.constant 0 : index
    %c0_10 = arith.constant 0 : index
    %c0_11 = arith.constant 0 : index
    %c0_12 = arith.constant 0 : index
    %14 = vector.load %arg4[%c0_9, %c0_10, %c0_11, %c0_12] : memref<2x8x1x12xf32, #tpu.memory_space<vmem>>, vector<1x8x1x12xf32>
    %15 = vector.shape_cast %14 : vector<1x8x1x12xf32> to vector<8x1x12xf32>
    %16 = vector.broadcast %15 : vector<8x1x12xf32> to vector<8x8x12xf32>
    %17 = arith.addf %13, %16 : vector<8x8x12xf32>
    %18 = vector.extract_strided_slice %17 {offsets = [0, 0, 0], sizes = [8, 8, 4], strides = [1, 1, 1]} : vector<8x8x12xf32> to vector<8x8x4xf32>
    %19 = vector.extract_strided_slice %17 {offsets = [0, 0, 4], sizes = [8, 8, 4], strides = [1, 1, 1]} : vector<8x8x12xf32> to vector<8x8x4xf32>
    %20 = vector.extract_strided_slice %17 {offsets = [0, 0, 8], sizes = [8, 8, 4], strides = [1, 1, 1]} : vector<8x8x12xf32> to vector<8x8x4xf32>
    %21 = arith.truncf %18 : vector<8x8x4xf32> to vector<8x8x4xbf16>
    %22 = arith.truncf %19 : vector<8x8x4xf32> to vector<8x8x4xbf16>
    "tpu.trace_start"() <{level = 10 : i32, message = "hqd,hkd->hqk"}> : () -> ()
    %cst_13 = arith.constant dense<0.000000e+00> : vector<8x8x8xf32>
    %23 = tpu.matmul %21, %22, %cst_13 {dimension_numbers = #tpu.dot_dimension_numbers<[2], [2], [1], [1], [0, 0, 0, 1, 1, 1], [0], [0]>} : vector<8x8x4xbf16>, vector<8x8x4xbf16>, vector<8x8x8xf32> -> vector<8x8x8xf32>
    "tpu.trace_stop"() : () -> ()
    %24 = arith.addf %23, %6 : vector<8x8x8xf32>
    %cst_14 = arith.constant dense<0xFF800000> : vector<8x8xf32>
    %25 = vector.multi_reduction <maximumf>, %24, %cst_14 [2] : vector<8x8x8xf32> to vector<8x8xf32>
    %26 = vector.shape_cast %25 : vector<8x8xf32> to vector<8x8x1xf32>
    %27 = vector.broadcast %26 : vector<8x8x1xf32> to vector<8x8x8xf32>
    %28 = arith.subf %24, %27 : vector<8x8x8xf32>
    %29 = math.exp %28 : vector<8x8x8xf32>
    %cst_15 = arith.constant dense<0.000000e+00> : vector<8x8xf32>
    %30 = vector.multi_reduction <add>, %29, %cst_15 [2] : vector<8x8x8xf32> to vector<8x8xf32>
    %31 = vector.shape_cast %30 : vector<8x8xf32> to vector<8x8x1xf32>
    %32 = tpu.reciprocal %31 {approx = true} : vector<8x8x1xf32> -> vector<8x8x1xf32>
    %33 = vector.broadcast %32 : vector<8x8x1xf32> to vector<8x8x8xf32>
    %34 = arith.mulf %29, %33 : vector<8x8x8xf32>
    %35 = arith.truncf %34 : vector<8x8x8xf32> to vector<8x8x8xbf16>
    %36 = arith.truncf %20 : vector<8x8x4xf32> to vector<8x8x4xbf16>
    "tpu.trace_start"() <{level = 10 : i32, message = "hqk,hkd->hqd"}> : () -> ()
    %cst_16 = arith.constant dense<0.000000e+00> : vector<8x8x4xf32>
    %37 = tpu.matmul %35, %36, %cst_16 {dimension_numbers = #tpu.dot_dimension_numbers<[2], [1], [1], [2], [0, 0, 0, 1, 1, 2], [0], [0]>} : vector<8x8x8xbf16>, vector<8x8x4xbf16>, vector<8x8x4xf32> -> vector<8x8x4xf32>
    "tpu.trace_stop"() : () -> ()
    %38 = arith.truncf %37 : vector<8x8x4xf32> to vector<8x8x4xbf16>
    %c0_17 = arith.constant 0 : index
    %c0_18 = arith.constant 0 : index
    %c0_19 = arith.constant 0 : index
    %c0_20 = arith.constant 0 : index
    %39 = vector.load %arg5[%c0_17, %c0_18, %c0_19, %c0_20] : memref<2x8x4x32xbf16, #tpu.memory_space<vmem>>, vector<1x8x4x32xbf16>
    %40 = vector.shape_cast %39 : vector<1x8x4x32xbf16> to vector<8x4x32xbf16>
    "tpu.trace_start"() <{level = 10 : i32, message = "hsd,hdf->hsf"}> : () -> ()
    %cst_21 = arith.constant dense<0.000000e+00> : vector<8x8x32xf32>
    %41 = tpu.matmul %38, %40, %cst_21 {dimension_numbers = #tpu.dot_dimension_numbers<[2], [1], [1], [2], [0, 0, 0, 1, 1, 2], [0], [0]>} : vector<8x8x4xbf16>, vector<8x4x32xbf16>, vector<8x8x32xf32> -> vector<8x8x32xf32>
    "tpu.trace_stop"() : () -> ()
    %cst_22 = arith.constant dense<0.000000e+00> : vector<8x32xf32>
    %42 = vector.multi_reduction <add>, %41, %cst_22 [0] : vector<8x8x32xf32> to vector<8x32xf32>
    %c0_23 = arith.constant 0 : index
    %c0_24 = arith.constant 0 : index
    %c0_25 = arith.constant 0 : index
    %43 = vector.load %arg6[%c0_23, %c0_24, %c0_25] : memref<2x1x32xf32, #tpu.memory_space<vmem>>, vector<1x1x32xf32>
    %44 = vector.shape_cast %43 : vector<1x1x32xf32> to vector<1x32xf32>
    %45 = vector.broadcast %44 : vector<1x32xf32> to vector<8x32xf32>
    %46 = arith.addf %42, %45 : vector<8x32xf32>
    %47 = arith.addf %1, %46 : vector<8x32xf32>
    %c0_26 = arith.constant 0 : index
    %c0_27 = arith.constant 0 : index
    %c0_28 = arith.constant 0 : index
    %48 = vector.load %arg7[%c0_26, %c0_27, %c0_28] : memref<2x1x32xf32, #tpu.memory_space<vmem>>, vector<1x1x32xf32>
    %49 = vector.shape_cast %48 : vector<1x1x32xf32> to vector<1x32xf32>
    %c0_29 = arith.constant 0 : index
    %c0_30 = arith.constant 0 : index
    %c0_31 = arith.constant 0 : index
    %50 = vector.load %arg8[%c0_29, %c0_30, %c0_31] : memref<2x1x32xf32, #tpu.memory_space<vmem>>, vector<1x1x32xf32>
    %51 = vector.shape_cast %50 : vector<1x1x32xf32> to vector<1x32xf32>
    %cst_32 = arith.constant dense<0.000000e+00> : vector<8xf32>
    %52 = vector.multi_reduction <add>, %47, %cst_32 [1] : vector<8x32xf32> to vector<8xf32>
    %53 = vector.shape_cast %52 : vector<8xf32> to vector<8x1xf32>
    %cst_33 = arith.constant 3.200000e+01 : f32
    %54 = vector.broadcast %cst_33 : f32 to vector<8x1xf32>
    %55 = arith.divf %53, %54 : vector<8x1xf32>
    %56 = vector.broadcast %55 : vector<8x1xf32> to vector<8x32xf32>
    %57 = arith.subf %47, %56 : vector<8x32xf32>
    %58 = arith.mulf %57, %57 : vector<8x32xf32>
    %cst_34 = arith.constant dense<0.000000e+00> : vector<8xf32>
    %59 = vector.multi_reduction <add>, %58, %cst_34 [1] : vector<8x32xf32> to vector<8xf32>
    %60 = vector.shape_cast %59 : vector<8xf32> to vector<8x1xf32>
    %cst_35 = arith.constant 3.200000e+01 : f32
    %61 = vector.broadcast %cst_35 : f32 to vector<8x1xf32>
    %62 = arith.divf %60, %61 : vector<8x1xf32>
    %63 = vector.broadcast %55 : vector<8x1xf32> to vector<8x32xf32>
    %64 = arith.subf %47, %63 : vector<8x32xf32>
    %cst_36 = arith.constant 9.99999974E-6 : f32
    %65 = vector.broadcast %cst_36 : f32 to vector<8x1xf32>
    %66 = arith.addf %62, %65 : vector<8x1xf32>
    %67 = math.rsqrt %66 : vector<8x1xf32>
    %68 = vector.broadcast %67 : vector<8x1xf32> to vector<8x32xf32>
    %69 = arith.mulf %64, %68 : vector<8x32xf32>
    %70 = vector.broadcast %49 : vector<1x32xf32> to vector<8x32xf32>
    %71 = arith.mulf %69, %70 : vector<8x32xf32>
    %72 = vector.broadcast %51 : vector<1x32xf32> to vector<8x32xf32>
    %73 = arith.addf %71, %72 : vector<8x32xf32>
    %74 = arith.truncf %73 : vector<8x32xf32> to vector<8x32xbf16>
    %c0_37 = arith.constant 0 : index
    %c0_38 = arith.constant 0 : index
    %c0_39 = arith.constant 0 : index
    %75 = vector.load %arg11[%c0_37, %c0_38, %c0_39] : memref<2x32x64xbf16, #tpu.memory_space<vmem>>, vector<1x32x64xbf16>
    %76 = vector.shape_cast %75 : vector<1x32x64xbf16> to vector<32x64xbf16>
    %cst_40 = arith.constant dense<0.000000e+00> : vector<8x64xf32>
    %77 = tpu.matmul %74, %76, %cst_40 {dimension_numbers = #tpu.dot_dimension_numbers<[1], [0], [0], [1], [0, 0, 1, 1], [], []>} : vector<8x32xbf16>, vector<32x64xbf16>, vector<8x64xf32> -> vector<8x64xf32>
    %c0_41 = arith.constant 0 : index
    %c0_42 = arith.constant 0 : index
    %c0_43 = arith.constant 0 : index
    %78 = vector.load %arg12[%c0_41, %c0_42, %c0_43] : memref<2x1x64xf32, #tpu.memory_space<vmem>>, vector<1x1x64xf32>
    %79 = vector.shape_cast %78 : vector<1x1x64xf32> to vector<1x64xf32>
    %80 = vector.broadcast %79 : vector<1x64xf32> to vector<8x64xf32>
    %81 = arith.addf %77, %80 : vector<8x64xf32>
    %cst_44 = arith.constant 0.000000e+00 : f32
    %82 = vector.broadcast %cst_44 : f32 to vector<8x64xf32>
    %83 = arith.maximumf %81, %82 : vector<8x64xf32>
    %84 = arith.truncf %83 : vector<8x64xf32> to vector<8x64xbf16>
    %c0_45 = arith.constant 0 : index
    %c0_46 = arith.constant 0 : index
    %c0_47 = arith.constant 0 : index
    %85 = vector.load %arg13[%c0_45, %c0_46, %c0_47] : memref<2x64x32xbf16, #tpu.memory_space<vmem>>, vector<1x64x32xbf16>
    %86 = vector.shape_cast %85 : vector<1x64x32xbf16> to vector<64x32xbf16>
    %cst_48 = arith.constant dense<0.000000e+00> : vector<8x32xf32>
    %87 = tpu.matmul %84, %86, %cst_48 {dimension_numbers = #tpu.dot_dimension_numbers<[1], [0], [0], [1], [0, 0, 1, 1], [], []>} : vector<8x64xbf16>, vector<64x32xbf16>, vector<8x32xf32> -> vector<8x32xf32>
    %c0_49 = arith.constant 0 : index
    %c0_50 = arith.constant 0 : index
    %c0_51 = arith.constant 0 : index
    %88 = vector.load %arg14[%c0_49, %c0_50, %c0_51] : memref<2x1x32xf32, #tpu.memory_space<vmem>>, vector<1x1x32xf32>
    %89 = vector.shape_cast %88 : vector<1x1x32xf32> to vector<1x32xf32>
    %90 = vector.broadcast %89 : vector<1x32xf32> to vector<8x32xf32>
    %91 = arith.addf %87, %90 : vector<8x32xf32>
    %92 = arith.addf %73, %91 : vector<8x32xf32>
    %c0_52 = arith.constant 0 : index
    %c0_53 = arith.constant 0 : index
    %c0_54 = arith.constant 0 : index
    %93 = vector.load %arg9[%c0_52, %c0_53, %c0_54] : memref<2x1x32xf32, #tpu.memory_space<vmem>>, vector<1x1x32xf32>
    %94 = vector.shape_cast %93 : vector<1x1x32xf32> to vector<1x32xf32>
    %c0_55 = arith.constant 0 : index
    %c0_56 = arith.constant 0 : index
    %c0_57 = arith.constant 0 : index
    %95 = vector.load %arg10[%c0_55, %c0_56, %c0_57] : memref<2x1x32xf32, #tpu.memory_space<vmem>>, vector<1x1x32xf32>
    %96 = vector.shape_cast %95 : vector<1x1x32xf32> to vector<1x32xf32>
    %cst_58 = arith.constant dense<0.000000e+00> : vector<8xf32>
    %97 = vector.multi_reduction <add>, %92, %cst_58 [1] : vector<8x32xf32> to vector<8xf32>
    %98 = vector.shape_cast %97 : vector<8xf32> to vector<8x1xf32>
    %cst_59 = arith.constant 3.200000e+01 : f32
    %99 = vector.broadcast %cst_59 : f32 to vector<8x1xf32>
    %100 = arith.divf %98, %99 : vector<8x1xf32>
    %101 = vector.broadcast %100 : vector<8x1xf32> to vector<8x32xf32>
    %102 = arith.subf %92, %101 : vector<8x32xf32>
    %103 = arith.mulf %102, %102 : vector<8x32xf32>
    %cst_60 = arith.constant dense<0.000000e+00> : vector<8xf32>
    %104 = vector.multi_reduction <add>, %103, %cst_60 [1] : vector<8x32xf32> to vector<8xf32>
    %105 = vector.shape_cast %104 : vector<8xf32> to vector<8x1xf32>
    %cst_61 = arith.constant 3.200000e+01 : f32
    %106 = vector.broadcast %cst_61 : f32 to vector<8x1xf32>
    %107 = arith.divf %105, %106 : vector<8x1xf32>
    %108 = vector.broadcast %100 : vector<8x1xf32> to vector<8x32xf32>
    %109 = arith.subf %92, %108 : vector<8x32xf32>
    %cst_62 = arith.constant 9.99999974E-6 : f32
    %110 = vector.broadcast %cst_62 : f32 to vector<8x1xf32>
    %111 = arith.addf %107, %110 : vector<8x1xf32>
    %112 = math.rsqrt %111 : vector<8x1xf32>
    %113 = vector.broadcast %112 : vector<8x1xf32> to vector<8x32xf32>
    %114 = arith.mulf %109, %113 : vector<8x32xf32>
    %115 = vector.broadcast %94 : vector<1x32xf32> to vector<8x32xf32>
    %116 = arith.mulf %114, %115 : vector<8x32xf32>
    %117 = vector.broadcast %96 : vector<1x32xf32> to vector<8x32xf32>
    %118 = arith.addf %116, %117 : vector<8x32xf32>
    %119 = arith.truncf %118 : vector<8x32xf32> to vector<8x32xbf16>
    %120 = vector.shape_cast %119 : vector<8x32xbf16> to vector<1x8x32xbf16>
    %121 = vector.shape_cast %120 : vector<1x8x32xbf16> to vector<1x8x32xbf16>
    %122 = vector.broadcast %121 : vector<1x8x32xbf16> to vector<8x8x32xbf16>
    %c1 = arith.constant 1 : index
    %c0_63 = arith.constant 0 : index
    %c0_64 = arith.constant 0 : index
    %c0_65 = arith.constant 0 : index
    %123 = vector.load %arg3[%c1, %c0_63, %c0_64, %c0_65] : memref<2x8x32x12xbf16, #tpu.memory_space<vmem>>, vector<1x8x32x12xbf16>
    %124 = vector.shape_cast %123 : vector<1x8x32x12xbf16> to vector<8x32x12xbf16>
    "tpu.trace_start"() <{level = 10 : i32, message = "hsd,hdf->hsf"}> : () -> ()
    %cst_66 = arith.constant dense<0.000000e+00> : vector<8x8x12xf32>
    %125 = tpu.matmul %122, %124, %cst_66 {dimension_numbers = #tpu.dot_dimension_numbers<[2], [1], [1], [2], [0, 0, 0, 1, 1, 2], [0], [0]>} : vector<8x8x32xbf16>, vector<8x32x12xbf16>, vector<8x8x12xf32> -> vector<8x8x12xf32>
    "tpu.trace_stop"() : () -> ()
    %c1_67 = arith.constant 1 : index
    %c0_68 = arith.constant 0 : index
    %c0_69 = arith.constant 0 : index
    %c0_70 = arith.constant 0 : index
    %126 = vector.load %arg4[%c1_67, %c0_68, %c0_69, %c0_70] : memref<2x8x1x12xf32, #tpu.memory_space<vmem>>, vector<1x8x1x12xf32>
    %127 = vector.shape_cast %126 : vector<1x8x1x12xf32> to vector<8x1x12xf32>
    %128 = vector.broadcast %127 : vector<8x1x12xf32> to vector<8x8x12xf32>
    %129 = arith.addf %125, %128 : vector<8x8x12xf32>
    %130 = vector.extract_strided_slice %129 {offsets = [0, 0, 0], sizes = [8, 8, 4], strides = [1, 1, 1]} : vector<8x8x12xf32> to vector<8x8x4xf32>
    %131 = vector.extract_strided_slice %129 {offsets = [0, 0, 4], sizes = [8, 8, 4], strides = [1, 1, 1]} : vector<8x8x12xf32> to vector<8x8x4xf32>
    %132 = vector.extract_strided_slice %129 {offsets = [0, 0, 8], sizes = [8, 8, 4], strides = [1, 1, 1]} : vector<8x8x12xf32> to vector<8x8x4xf32>
    %133 = arith.truncf %130 : vector<8x8x4xf32> to vector<8x8x4xbf16>
    %134 = arith.truncf %131 : vector<8x8x4xf32> to vector<8x8x4xbf16>
    "tpu.trace_start"() <{level = 10 : i32, message = "hqd,hkd->hqk"}> : () -> ()
    %cst_71 = arith.constant dense<0.000000e+00> : vector<8x8x8xf32>
    %135 = tpu.matmul %133, %134, %cst_71 {dimension_numbers = #tpu.dot_dimension_numbers<[2], [2], [1], [1], [0, 0, 0, 1, 1, 1], [0], [0]>} : vector<8x8x4xbf16>, vector<8x8x4xbf16>, vector<8x8x8xf32> -> vector<8x8x8xf32>
    "tpu.trace_stop"() : () -> ()
    %136 = arith.addf %135, %6 : vector<8x8x8xf32>
    %cst_72 = arith.constant dense<0xFF800000> : vector<8x8xf32>
    %137 = vector.multi_reduction <maximumf>, %136, %cst_72 [2] : vector<8x8x8xf32> to vector<8x8xf32>
    %138 = vector.shape_cast %137 : vector<8x8xf32> to vector<8x8x1xf32>
    %139 = vector.broadcast %138 : vector<8x8x1xf32> to vector<8x8x8xf32>
    %140 = arith.subf %136, %139 : vector<8x8x8xf32>
    %141 = math.exp %140 : vector<8x8x8xf32>
    %cst_73 = arith.constant dense<0.000000e+00> : vector<8x8xf32>
    %142 = vector.multi_reduction <add>, %141, %cst_73 [2] : vector<8x8x8xf32> to vector<8x8xf32>
    %143 = vector.shape_cast %142 : vector<8x8xf32> to vector<8x8x1xf32>
    %144 = tpu.reciprocal %143 {approx = true} : vector<8x8x1xf32> -> vector<8x8x1xf32>
    %145 = vector.broadcast %144 : vector<8x8x1xf32> to vector<8x8x8xf32>
    %146 = arith.mulf %141, %145 : vector<8x8x8xf32>
    %147 = arith.truncf %146 : vector<8x8x8xf32> to vector<8x8x8xbf16>
    %148 = arith.truncf %132 : vector<8x8x4xf32> to vector<8x8x4xbf16>
    "tpu.trace_start"() <{level = 10 : i32, message = "hqk,hkd->hqd"}> : () -> ()
    %cst_74 = arith.constant dense<0.000000e+00> : vector<8x8x4xf32>
    %149 = tpu.matmul %147, %148, %cst_74 {dimension_numbers = #tpu.dot_dimension_numbers<[2], [1], [1], [2], [0, 0, 0, 1, 1, 2], [0], [0]>} : vector<8x8x8xbf16>, vector<8x8x4xbf16>, vector<8x8x4xf32> -> vector<8x8x4xf32>
    "tpu.trace_stop"() : () -> ()
    %150 = arith.truncf %149 : vector<8x8x4xf32> to vector<8x8x4xbf16>
    %c1_75 = arith.constant 1 : index
    %c0_76 = arith.constant 0 : index
    %c0_77 = arith.constant 0 : index
    %c0_78 = arith.constant 0 : index
    %151 = vector.load %arg5[%c1_75, %c0_76, %c0_77, %c0_78] : memref<2x8x4x32xbf16, #tpu.memory_space<vmem>>, vector<1x8x4x32xbf16>
    %152 = vector.shape_cast %151 : vector<1x8x4x32xbf16> to vector<8x4x32xbf16>
    "tpu.trace_start"() <{level = 10 : i32, message = "hsd,hdf->hsf"}> : () -> ()
    %cst_79 = arith.constant dense<0.000000e+00> : vector<8x8x32xf32>
    %153 = tpu.matmul %150, %152, %cst_79 {dimension_numbers = #tpu.dot_dimension_numbers<[2], [1], [1], [2], [0, 0, 0, 1, 1, 2], [0], [0]>} : vector<8x8x4xbf16>, vector<8x4x32xbf16>, vector<8x8x32xf32> -> vector<8x8x32xf32>
    "tpu.trace_stop"() : () -> ()
    %cst_80 = arith.constant dense<0.000000e+00> : vector<8x32xf32>
    %154 = vector.multi_reduction <add>, %153, %cst_80 [0] : vector<8x8x32xf32> to vector<8x32xf32>
    %c1_81 = arith.constant 1 : index
    %c0_82 = arith.constant 0 : index
    %c0_83 = arith.constant 0 : index
    %155 = vector.load %arg6[%c1_81, %c0_82, %c0_83] : memref<2x1x32xf32, #tpu.memory_space<vmem>>, vector<1x1x32xf32>
    %156 = vector.shape_cast %155 : vector<1x1x32xf32> to vector<1x32xf32>
    %157 = vector.broadcast %156 : vector<1x32xf32> to vector<8x32xf32>
    %158 = arith.addf %154, %157 : vector<8x32xf32>
    %159 = arith.addf %118, %158 : vector<8x32xf32>
    %c1_84 = arith.constant 1 : index
    %c0_85 = arith.constant 0 : index
    %c0_86 = arith.constant 0 : index
    %160 = vector.load %arg7[%c1_84, %c0_85, %c0_86] : memref<2x1x32xf32, #tpu.memory_space<vmem>>, vector<1x1x32xf32>
    %161 = vector.shape_cast %160 : vector<1x1x32xf32> to vector<1x32xf32>
    %c1_87 = arith.constant 1 : index
    %c0_88 = arith.constant 0 : index
    %c0_89 = arith.constant 0 : index
    %162 = vector.load %arg8[%c1_87, %c0_88, %c0_89] : memref<2x1x32xf32, #tpu.memory_space<vmem>>, vector<1x1x32xf32>
    %163 = vector.shape_cast %162 : vector<1x1x32xf32> to vector<1x32xf32>
    %cst_90 = arith.constant dense<0.000000e+00> : vector<8xf32>
    %164 = vector.multi_reduction <add>, %159, %cst_90 [1] : vector<8x32xf32> to vector<8xf32>
    %165 = vector.shape_cast %164 : vector<8xf32> to vector<8x1xf32>
    %cst_91 = arith.constant 3.200000e+01 : f32
    %166 = vector.broadcast %cst_91 : f32 to vector<8x1xf32>
    %167 = arith.divf %165, %166 : vector<8x1xf32>
    %168 = vector.broadcast %167 : vector<8x1xf32> to vector<8x32xf32>
    %169 = arith.subf %159, %168 : vector<8x32xf32>
    %170 = arith.mulf %169, %169 : vector<8x32xf32>
    %cst_92 = arith.constant dense<0.000000e+00> : vector<8xf32>
    %171 = vector.multi_reduction <add>, %170, %cst_92 [1] : vector<8x32xf32> to vector<8xf32>
    %172 = vector.shape_cast %171 : vector<8xf32> to vector<8x1xf32>
    %cst_93 = arith.constant 3.200000e+01 : f32
    %173 = vector.broadcast %cst_93 : f32 to vector<8x1xf32>
    %174 = arith.divf %172, %173 : vector<8x1xf32>
    %175 = vector.broadcast %167 : vector<8x1xf32> to vector<8x32xf32>
    %176 = arith.subf %159, %175 : vector<8x32xf32>
    %cst_94 = arith.constant 9.99999974E-6 : f32
    %177 = vector.broadcast %cst_94 : f32 to vector<8x1xf32>
    %178 = arith.addf %174, %177 : vector<8x1xf32>
    %179 = math.rsqrt %178 : vector<8x1xf32>
    %180 = vector.broadcast %179 : vector<8x1xf32> to vector<8x32xf32>
    %181 = arith.mulf %176, %180 : vector<8x32xf32>
    %182 = vector.broadcast %161 : vector<1x32xf32> to vector<8x32xf32>
    %183 = arith.mulf %181, %182 : vector<8x32xf32>
    %184 = vector.broadcast %163 : vector<1x32xf32> to vector<8x32xf32>
    %185 = arith.addf %183, %184 : vector<8x32xf32>
    %186 = arith.truncf %185 : vector<8x32xf32> to vector<8x32xbf16>
    %c1_95 = arith.constant 1 : index
    %c0_96 = arith.constant 0 : index
    %c0_97 = arith.constant 0 : index
    %187 = vector.load %arg11[%c1_95, %c0_96, %c0_97] : memref<2x32x64xbf16, #tpu.memory_space<vmem>>, vector<1x32x64xbf16>
    %188 = vector.shape_cast %187 : vector<1x32x64xbf16> to vector<32x64xbf16>
    %cst_98 = arith.constant dense<0.000000e+00> : vector<8x64xf32>
    %189 = tpu.matmul %186, %188, %cst_98 {dimension_numbers = #tpu.dot_dimension_numbers<[1], [0], [0], [1], [0, 0, 1, 1], [], []>} : vector<8x32xbf16>, vector<32x64xbf16>, vector<8x64xf32> -> vector<8x64xf32>
    %c1_99 = arith.constant 1 : index
    %c0_100 = arith.constant 0 : index
    %c0_101 = arith.constant 0 : index
    %190 = vector.load %arg12[%c1_99, %c0_100, %c0_101] : memref<2x1x64xf32, #tpu.memory_space<vmem>>, vector<1x1x64xf32>
    %191 = vector.shape_cast %190 : vector<1x1x64xf32> to vector<1x64xf32>
    %192 = vector.broadcast %191 : vector<1x64xf32> to vector<8x64xf32>
    %193 = arith.addf %189, %192 : vector<8x64xf32>
    %cst_102 = arith.constant 0.000000e+00 : f32
    %194 = vector.broadcast %cst_102 : f32 to vector<8x64xf32>
    %195 = arith.maximumf %193, %194 : vector<8x64xf32>
    %196 = arith.truncf %195 : vector<8x64xf32> to vector<8x64xbf16>
    %c1_103 = arith.constant 1 : index
    %c0_104 = arith.constant 0 : index
    %c0_105 = arith.constant 0 : index
    %197 = vector.load %arg13[%c1_103, %c0_104, %c0_105] : memref<2x64x32xbf16, #tpu.memory_space<vmem>>, vector<1x64x32xbf16>
    %198 = vector.shape_cast %197 : vector<1x64x32xbf16> to vector<64x32xbf16>
    %cst_106 = arith.constant dense<0.000000e+00> : vector<8x32xf32>
    %199 = tpu.matmul %196, %198, %cst_106 {dimension_numbers = #tpu.dot_dimension_numbers<[1], [0], [0], [1], [0, 0, 1, 1], [], []>} : vector<8x64xbf16>, vector<64x32xbf16>, vector<8x32xf32> -> vector<8x32xf32>
    %c1_107 = arith.constant 1 : index
    %c0_108 = arith.constant 0 : index
    %c0_109 = arith.constant 0 : index
    %200 = vector.load %arg14[%c1_107, %c0_108, %c0_109] : memref<2x1x32xf32, #tpu.memory_space<vmem>>, vector<1x1x32xf32>
    %201 = vector.shape_cast %200 : vector<1x1x32xf32> to vector<1x32xf32>
    %202 = vector.broadcast %201 : vector<1x32xf32> to vector<8x32xf32>
    %203 = arith.addf %199, %202 : vector<8x32xf32>
    %204 = arith.addf %185, %203 : vector<8x32xf32>
    %c1_110 = arith.constant 1 : index
    %c0_111 = arith.constant 0 : index
    %c0_112 = arith.constant 0 : index
    %205 = vector.load %arg9[%c1_110, %c0_111, %c0_112] : memref<2x1x32xf32, #tpu.memory_space<vmem>>, vector<1x1x32xf32>
    %206 = vector.shape_cast %205 : vector<1x1x32xf32> to vector<1x32xf32>
    %c1_113 = arith.constant 1 : index
    %c0_114 = arith.constant 0 : index
    %c0_115 = arith.constant 0 : index
    %207 = vector.load %arg10[%c1_113, %c0_114, %c0_115] : memref<2x1x32xf32, #tpu.memory_space<vmem>>, vector<1x1x32xf32>
    %208 = vector.shape_cast %207 : vector<1x1x32xf32> to vector<1x32xf32>
    %cst_116 = arith.constant dense<0.000000e+00> : vector<8xf32>
    %209 = vector.multi_reduction <add>, %204, %cst_116 [1] : vector<8x32xf32> to vector<8xf32>
    %210 = vector.shape_cast %209 : vector<8xf32> to vector<8x1xf32>
    %cst_117 = arith.constant 3.200000e+01 : f32
    %211 = vector.broadcast %cst_117 : f32 to vector<8x1xf32>
    %212 = arith.divf %210, %211 : vector<8x1xf32>
    %213 = vector.broadcast %212 : vector<8x1xf32> to vector<8x32xf32>
    %214 = arith.subf %204, %213 : vector<8x32xf32>
    %215 = arith.mulf %214, %214 : vector<8x32xf32>
    %cst_118 = arith.constant dense<0.000000e+00> : vector<8xf32>
    %216 = vector.multi_reduction <add>, %215, %cst_118 [1] : vector<8x32xf32> to vector<8xf32>
    %217 = vector.shape_cast %216 : vector<8xf32> to vector<8x1xf32>
    %cst_119 = arith.constant 3.200000e+01 : f32
    %218 = vector.broadcast %cst_119 : f32 to vector<8x1xf32>
    %219 = arith.divf %217, %218 : vector<8x1xf32>
    %220 = vector.broadcast %212 : vector<8x1xf32> to vector<8x32xf32>
    %221 = arith.subf %204, %220 : vector<8x32xf32>
    %cst_120 = arith.constant 9.99999974E-6 : f32
    %222 = vector.broadcast %cst_120 : f32 to vector<8x1xf32>
    %223 = arith.addf %219, %222 : vector<8x1xf32>
    %224 = math.rsqrt %223 : vector<8x1xf32>
    %225 = vector.broadcast %224 : vector<8x1xf32> to vector<8x32xf32>
    %226 = arith.mulf %221, %225 : vector<8x32xf32>
    %227 = vector.broadcast %206 : vector<1x32xf32> to vector<8x32xf32>
    %228 = arith.mulf %226, %227 : vector<8x32xf32>
    %229 = vector.broadcast %208 : vector<1x32xf32> to vector<8x32xf32>
    %230 = arith.addf %228, %229 : vector<8x32xf32>
    %231 = arith.truncf %230 : vector<8x32xf32> to vector<8x32xbf16>
    %c0_121 = arith.constant 0 : index
    %c0_122 = arith.constant 0 : index
    %232 = vector.load %arg15[%c0_121, %c0_122] : memref<32x128xbf16, #tpu.memory_space<vmem>>, vector<32x128xbf16>
    %cst_123 = arith.constant dense<0.000000e+00> : vector<8x128xf32>
    %233 = tpu.matmul %231, %232, %cst_123 {dimension_numbers = #tpu.dot_dimension_numbers<[1], [0], [0], [1], [0, 0, 1, 1], [], []>} : vector<8x32xbf16>, vector<32x128xbf16>, vector<8x128xf32> -> vector<8x128xf32>
    %c0_124 = arith.constant 0 : index
    %c0_125 = arith.constant 0 : index
    %234 = vector.load %arg16[%c0_124, %c0_125] : memref<1x128xf32, #tpu.memory_space<vmem>>, vector<1x128xf32>
    %235 = vector.broadcast %234 : vector<1x128xf32> to vector<8x128xf32>
    %236 = arith.addf %233, %235 : vector<8x128xf32>
    %c0_126 = arith.constant 0 : index
    %c0_127 = arith.constant 0 : index
    %c0_128 = arith.constant 0 : index
    %237 = vector.load %arg17[%c0_126, %c0_127, %c0_128] : memref<1x8x128xf32, #tpu.memory_space<vmem>>, vector<1x8x128xf32>
    %238 = vector.shape_cast %237 : vector<1x8x128xf32> to vector<8x128xf32>
    %239 = vector.shape_cast %236 : vector<8x128xf32> to vector<1x8x128xf32>
    tpu.vector_store %arg17[%c0_126, %c0_127, %c0_128], %239 {strides = array<i32>} : memref<1x8x128xf32, #tpu.memory_space<vmem>>, vector<1x8x128xf32>,
    return
  }
  func.func @transform_0(%arg0: i32) -> (i32, i32, i32) {
    %c0_i32 = arith.constant 0 : i32
    %c0_i32_0 = arith.constant 0 : i32
    %c0_i32_1 = arith.constant 0 : i32
    return %arg0, %c0_i32, %c0_i32_0 : i32, i32, i32
  }
  func.func @transform_1(%arg0: i32) -> (i32, i32, i32) {
    %c0_i32 = arith.constant 0 : i32
    %c0_i32_0 = arith.constant 0 : i32
    %c0_i32_1 = arith.constant 0 : i32
    return %arg0, %c0_i32, %c0_i32_0 : i32, i32, i32
  }
  func.func @transform_2(%arg0: i32) -> (i32, i32, i32, i32) {
    %c0_i32 = arith.constant 0 : i32
    %c0_i32_0 = arith.constant 0 : i32
    %c0_i32_1 = arith.constant 0 : i32
    %c0_i32_2 = arith.constant 0 : i32
    %c0_i32_3 = arith.constant 0 : i32
    return %c0_i32, %c0_i32_0, %c0_i32_1, %c0_i32_2 : i32, i32, i32, i32
  }
  func.func @transform_3(%arg0: i32) -> (i32, i32, i32, i32) {
    %c0_i32 = arith.constant 0 : i32
    %c0_i32_0 = arith.constant 0 : i32
    %c0_i32_1 = arith.constant 0 : i32
    %c0_i32_2 = arith.constant 0 : i32
    %c0_i32_3 = arith.constant 0 : i32
    return %c0_i32, %c0_i32_0, %c0_i32_1, %c0_i32_2 : i32, i32, i32, i32
  }
  func.func @transform_4(%arg0: i32) -> (i32, i32, i32, i32) {
    %c0_i32 = arith.constant 0 : i32
    %c0_i32_0 = arith.constant 0 : i32
    %c0_i32_1 = arith.constant 0 : i32
    %c0_i32_2 = arith.constant 0 : i32
    %c0_i32_3 = arith.constant 0 : i32
    return %c0_i32, %c0_i32_0, %c0_i32_1, %c0_i32_2 : i32, i32, i32, i32
  }
  func.func @transform_5(%arg0: i32) -> (i32, i32, i32) {
    %c0_i32 = arith.constant 0 : i32
    %c0_i32_0 = arith.constant 0 : i32
    %c0_i32_1 = arith.constant 0 : i32
    %c0_i32_2 = arith.constant 0 : i32
    return %c0_i32, %c0_i32_0, %c0_i32_1 : i32, i32, i32
  }
  func.func @transform_6(%arg0: i32) -> (i32, i32, i32) {
    %c0_i32 = arith.constant 0 : i32
    %c0_i32_0 = arith.constant 0 : i32
    %c0_i32_1 = arith.constant 0 : i32
    %c0_i32_2 = arith.constant 0 : i32
    return %c0_i32, %c0_i32_0, %c0_i32_1 : i32, i32, i32
  }
  func.func @transform_7(%arg0: i32) -> (i32, i32, i32) {
    %c0_i32 = arith.constant 0 : i32
    %c0_i32_0 = arith.constant 0 : i32
    %c0_i32_1 = arith.constant 0 : i32
    %c0_i32_2 = arith.constant 0 : i32
    return %c0_i32, %c0_i32_0, %c0_i32_1 : i32, i32, i32
  }
  func.func @transform_8(%arg0: i32) -> (i32, i32, i32) {
    %c0_i32 = arith.constant 0 : i32
    %c0_i32_0 = arith.constant 0 : i32
    %c0_i32_1 = arith.constant 0 : i32
    %c0_i32_2 = arith.constant 0 : i32
    return %c0_i32, %c0_i32_0, %c0_i32_1 : i32, i32, i32
  }
  func.func @transform_9(%arg0: i32) -> (i32, i32, i32) {
    %c0_i32 = arith.constant 0 : i32
    %c0_i32_0 = arith.constant 0 : i32
    %c0_i32_1 = arith.constant 0 : i32
    %c0_i32_2 = arith.constant 0 : i32
    return %c0_i32, %c0_i32_0, %c0_i32_1 : i32, i32, i32
  }
  func.func @transform_10(%arg0: i32) -> (i32, i32, i32) {
    %c0_i32 = arith.constant 0 : i32
    %c0_i32_0 = arith.constant 0 : i32
    %c0_i32_1 = arith.constant 0 : i32
    %c0_i32_2 = arith.constant 0 : i32
    return %c0_i32, %c0_i32_0, %c0_i32_1 : i32, i32, i32
  }
  func.func @transform_11(%arg0: i32) -> (i32, i32, i32) {
    %c0_i32 = arith.constant 0 : i32
    %c0_i32_0 = arith.constant 0 : i32
    %c0_i32_1 = arith.constant 0 : i32
    %c0_i32_2 = arith.constant 0 : i32
    return %c0_i32, %c0_i32_0, %c0_i32_1 : i32, i32, i32
  }
  func.func @transform_12(%arg0: i32) -> (i32, i32, i32) {
    %c0_i32 = arith.constant 0 : i32
    %c0_i32_0 = arith.constant 0 : i32
    %c0_i32_1 = arith.constant 0 : i32
    %c0_i32_2 = arith.constant 0 : i32
    return %c0_i32, %c0_i32_0, %c0_i32_1 : i32, i32, i32
  }
  func.func @transform_13(%arg0: i32) -> (i32, i32, i32) {
    %c0_i32 = arith.constant 0 : i32
    %c0_i32_0 = arith.constant 0 : i32
    %c0_i32_1 = arith.constant 0 : i32
    %c0_i32_2 = arith.constant 0 : i32
    return %c0_i32, %c0_i32_0, %c0_i32_1 : i32, i32, i32
  }
  func.func @transform_14(%arg0: i32) -> (i32, i32) {
    %c0_i32 = arith.constant 0 : i32
    %c0_i32_0 = arith.constant 0 : i32
    %c0_i32_1 = arith.constant 0 : i32
    return %c0_i32, %c0_i32_0 : i32, i32
  }
  func.func @transform_15(%arg0: i32) -> (i32, i32) {
    %c0_i32 = arith.constant 0 : i32
    %c0_i32_0 = arith.constant 0 : i32
    %c0_i32_1 = arith.constant 0 : i32
    return %c0_i32, %c0_i32_0 : i32, i32
  }
  func.func @transform_16(%arg0: i32) -> (i32, i32, i32) {
    %c0_i32 = arith.constant 0 : i32
    %c0_i32_0 = arith.constant 0 : i32
    %c0_i32_1 = arith.constant 0 : i32
    return %arg0, %c0_i32, %c0_i32_0 : i32, i32, i32
  }
}

</mosaic_0001>

<llo_original>
// kernel: tpu_custom_call.1
$region0: #{tpu_custom_call.1}
  #allocation0 [shape = 'u32[]', space=smem, size = 0x4, offset = 0x4, fixed_abs, tag = 'smem constant byte address 0x4 - core index']
  #allocation1 [shape = 'u32[144,128]{1,0:T(1,128)}', space=vmem, size = 0x12000, scoped, tag = 'internal scratch']
  %s0 = inlined_call_operand.vmem [shape: f32[2,8,32], index: 0, kind: input, shape index: {}]
  %s1 = inlined_call_operand.vmem [shape: f32[2,1,8], index: 1, kind: input, shape index: {}]
  %s2 = inlined_call_operand.vmem [shape: bf16[2,8,32,12], index: 2, kind: input, shape index: {}]
  %s3 = inlined_call_operand.vmem [shape: f32[2,8,1,12], index: 3, kind: input, shape index: {}]
  %s4 = inlined_call_operand.vmem [shape: bf16[2,8,4,32], index: 4, kind: input, shape index: {}]
  %s5 = inlined_call_operand.vmem [shape: f32[2,1,32], index: 5, kind: input, shape index: {}]
  %s6 = inlined_call_operand.vmem [shape: f32[2,1,32], index: 6, kind: input, shape index: {}]
  %s7 = inlined_call_operand.vmem [shape: f32[2,1,32], index: 7, kind: input, shape index: {}]
  %s8 = inlined_call_operand.vmem [shape: f32[2,1,32], index: 8, kind: input, shape index: {}]
  %s9 = inlined_call_operand.vmem [shape: f32[2,1,32], index: 9, kind: input, shape index: {}]
  %s10 = inlined_call_operand.vmem [shape: bf16[2,32,64], index: 10, kind: input, shape index: {}]
  %s11 = inlined_call_operand.vmem [shape: f32[2,1,64], index: 11, kind: input, shape index: {}]
  %s12 = inlined_call_operand.vmem [shape: bf16[2,64,32], index: 12, kind: input, shape index: {}]
  %s13 = inlined_call_operand.vmem [shape: f32[2,1,32], index: 13, kind: input, shape index: {}]
  %s14 = inlined_call_operand.vmem [shape: bf16[32,128], index: 14, kind: input, shape index: {}]
  %s15 = inlined_call_operand.vmem [shape: f32[1,128], index: 15, kind: input, shape index: {}]
  %s16 = inlined_call_operand.hbm [shape: f32[2,8,128], index: 16, kind: output, shape index: {}]
  %s17 = sld [smem:[#allocation0]]
  $region97: #{tpu_custom_call.1} parent=0
    _
  %s19 = ssub.s32 1, %s17
  %s20 = scalar_select 0, %s19, %s17
  $region1: #{tpu_custom_call.1} parent=0
    #allocation2 [shape = 'u8[8192]{0}', space=vmem, size = 0x2000, scoped, tag = 'output window, operand 0']
    #allocation3 [shape = 's32[2]{0}', space=sflag, size = 0x8, scoped, tag = 'scoped memory for tpu_custom_call.1']
    %21 = vsyncpa [#allocation3], 0
    %s22 = scalar_lea.sflag [#allocation3], 1
    %23 = vsyncpa %s22, 0
    loop: start=0, step=1, limit=4
    $region2: #{tpu_custom_call.1} parent=1 // loop_pre_header
      _
    $region3: #{tpu_custom_call.1} parent=1 // loop_header
      %s25 = sphi 0, %s29
      %p26 = scmp.ge.s32.totalorder %s25, 4
      %s35 = sphi 0, %s37
      %s38 = sphi 0, %s35
      %s39 = sphi 0, %s38
      %s55 = sphi 0, %s39
      %s61 = sphi 0, %s63
      %s64 = sphi 0, %s61
      %s65 = sphi 0, %s64
      %s81 = sphi 0, %s65
      %s85 = sphi 0, %s85
      %s87 = sphi 0, %s85
      %s88 = sphi 0, %s87
      %s102 = sphi 0, %s88
      %s106 = sphi 0, %s106
      %s108 = sphi 0, %s106
      %s109 = sphi 0, %s108
      %s123 = sphi 0, %s109
      %s127 = sphi 0, %s127
      %s129 = sphi 0, %s127
      %s130 = sphi 0, %s129
      %s144 = sphi 0, %s130
      %s148 = sphi 0, %s148
      %s150 = sphi 0, %s148
      %s151 = sphi 0, %s150
      %s165 = sphi 0, %s151
      %s169 = sphi 0, %s169
      %s171 = sphi 0, %s169
      %s172 = sphi 0, %s171
      %s186 = sphi 0, %s172
      %s190 = sphi 0, %s190
      %s192 = sphi 0, %s190
      %s193 = sphi 0, %s192
      %s207 = sphi 0, %s193
      %s211 = sphi 0, %s211
      %s213 = sphi 0, %s211
      %s214 = sphi 0, %s213
      %s228 = sphi 0, %s214
      %s232 = sphi 0, %s232
      %s234 = sphi 0, %s232
      %s235 = sphi 0, %s234
      %s249 = sphi 0, %s235
      %s253 = sphi 0, %s253
      %s255 = sphi 0, %s253
      %s256 = sphi 0, %s255
      %s270 = sphi 0, %s256
      %s274 = sphi 0, %s274
      %s276 = sphi 0, %s274
      %s277 = sphi 0, %s276
      %s291 = sphi 0, %s277
      %s295 = sphi 0, %s295
      %s297 = sphi 0, %s295
      %s298 = sphi 0, %s297
      %s312 = sphi 0, %s298
      %s316 = sphi 0, %s316
      %s318 = sphi 0, %s316
      %s319 = sphi 0, %s318
      %s333 = sphi 0, %s319
      %s337 = sphi 0, %s337
      %s339 = sphi 0, %s337
      %s340 = sphi 0, %s339
      %s354 = sphi 0, %s340
      %s358 = sphi 0, %s358
      %s360 = sphi 0, %s358
      %s361 = sphi 0, %s360
      %s375 = sphi 0, %s361
      %s381 = sphi 0, %s383
      %s384 = sphi 0, %s381
      %s385 = sphi 0, %s384
      %s401 = sphi 0, %s385
    $region4: #{tpu_custom_call.1} parent=1 // loop_header_branch
      %28 = sbr.rel (%p26) target = $region8
    $region5: #{tpu_custom_call.1} parent=1 // loop_body
      %s30 = ssub.s32 %s25, 1
      %s31 = ssub.s32 %s25, 2
      %s32 = sadd.s32 %s25, 1
      %s33 = ssub.s32 %s25, %s32
      %p34 = scmp.eq.s32.totalorder %s33, 0
      %s36 = sadd.s32 %s35, 1
      %s37 = scalar_select %p34, %s35, %s36
      %p40 = pneg %p34
      %p41 = scmp.eq.s32.totalorder %s25, 1
      %p42 = por %p40, %p41
      %p43 = scmp.ne.s32.totalorder %s35, %s38
      %p44 = scmp.eq.s32.totalorder %s25, 0
      %p45 = por %p43, %p44
      %p46 = scmp.ne.s32.totalorder %s35, %s38
      %p47 = scmp.eq.s32.totalorder %s30, 1
      %p48 = por %p46, %p47
      %p49 = scmp.ne.s32.totalorder %s38, %s39
      %p50 = scmp.eq.s32.totalorder %s30, 0
      %p51 = por %p49, %p50
      %p52 = scmp.ne.s32.totalorder %s38, %s39
      %p53 = scmp.eq.s32.totalorder %s31, 1
      %p54 = por %p52, %p53
      %p56 = scmp.ne.s32.totalorder %s39, %s55
      %p57 = scmp.eq.s32.totalorder %s31, 0
      %p58 = por %p56, %p57
      %s59 = ssub.s32 %s25, %s32
      %p60 = scmp.eq.s32.totalorder %s59, 0
      %s62 = sadd.s32 %s61, 1
      %s63 = scalar_select %p60, %s61, %s62
      %p66 = pneg %p60
      %p67 = scmp.eq.s32.totalorder %s25, 1
      %p68 = por %p66, %p67
      %p69 = scmp.ne.s32.totalorder %s61, %s64
      %p70 = scmp.eq.s32.totalorder %s25, 0
      %p71 = por %p69, %p70
      %p72 = scmp.ne.s32.totalorder %s61, %s64
      %p73 = scmp.eq.s32.totalorder %s30, 1
      %p74 = por %p72, %p73
      %p75 = scmp.ne.s32.totalorder %s64, %s65
      %p76 = scmp.eq.s32.totalorder %s30, 0
      %p77 = por %p75, %p76
      %p78 = scmp.ne.s32.totalorder %s64, %s65
      %p79 = scmp.eq.s32.totalorder %s31, 1
      %p80 = por %p78, %p79
      %p82 = scmp.ne.s32.totalorder %s65, %s81
      %p83 = scmp.eq.s32.totalorder %s31, 0
      %p84 = por %p82, %p83
      %s86 = sadd.s32 %s85, 1
      %p89 = scmp.eq.s32.totalorder %s25, 1
      %p90 = scmp.ne.s32.totalorder %s85, %s87
      %p91 = scmp.eq.s32.totalorder %s25, 0
      %p92 = por %p90, %p91
      %p93 = scmp.ne.s32.totalorder %s85, %s87
      %p94 = scmp.eq.s32.totalorder %s30, 1
      %p95 = por %p93, %p94
      %p96 = scmp.ne.s32.totalorder %s87, %s88
      %p97 = scmp.eq.s32.totalorder %s30, 0
      %p98 = por %p96, %p97
      %p99 = scmp.ne.s32.totalorder %s87, %s88
      %p100 = scmp.eq.s32.totalorder %s31, 1
      %p101 = por %p99, %p100
      %p103 = scmp.ne.s32.totalorder %s88, %s102
      %p104 = scmp.eq.s32.totalorder %s31, 0
      %p105 = por %p103, %p104
      %s107 = sadd.s32 %s106, 1
      %p110 = scmp.eq.s32.totalorder %s25, 1
      %p111 = scmp.ne.s32.totalorder %s106, %s108
      %p112 = scmp.eq.s32.totalorder %s25, 0
      %p113 = por %p111, %p112
      %p114 = scmp.ne.s32.totalorder %s106, %s108
      %p115 = scmp.eq.s32.totalorder %s30, 1
      %p116 = por %p114, %p115
      %p117 = scmp.ne.s32.totalorder %s108, %s109
      %p118 = scmp.eq.s32.totalorder %s30, 0
      %p119 = por %p117, %p118
      %p120 = scmp.ne.s32.totalorder %s108, %s109
      %p121 = scmp.eq.s32.totalorder %s31, 1
      %p122 = por %p120, %p121
      %p124 = scmp.ne.s32.totalorder %s109, %s123
      %p125 = scmp.eq.s32.totalorder %s31, 0
      %p126 = por %p124, %p125
      %s128 = sadd.s32 %s127, 1
      %p131 = scmp.eq.s32.totalorder %s25, 1
      %p132 = scmp.ne.s32.totalorder %s127, %s129
      %p133 = scmp.eq.s32.totalorder %s25, 0
      %p134 = por %p132, %p133
      %p135 = scmp.ne.s32.totalorder %s127, %s129
      %p136 = scmp.eq.s32.totalorder %s30, 1
      %p137 = por %p135, %p136
      %p138 = scmp.ne.s32.totalorder %s129, %s130
      %p139 = scmp.eq.s32.totalorder %s30, 0
      %p140 = por %p138, %p139
      %p141 = scmp.ne.s32.totalorder %s129, %s130
      %p142 = scmp.eq.s32.totalorder %s31, 1
      %p143 = por %p141, %p142
      %p145 = scmp.ne.s32.totalorder %s130, %s144
      %p146 = scmp.eq.s32.totalorder %s31, 0
      %p147 = por %p145, %p146
      %s149 = sadd.s32 %s148, 1
      %p152 = scmp.eq.s32.totalorder %s25, 1
      %p153 = scmp.ne.s32.totalorder %s148, %s150
      %p154 = scmp.eq.s32.totalorder %s25, 0
      %p155 = por %p153, %p154
      %p156 = scmp.ne.s32.totalorder %s148, %s150
      %p157 = scmp.eq.s32.totalorder %s30, 1
      %p158 = por %p156, %p157
      %p159 = scmp.ne.s32.totalorder %s150, %s151
      %p160 = scmp.eq.s32.totalorder %s30, 0
      %p161 = por %p159, %p160
      %p162 = scmp.ne.s32.totalorder %s150, %s151
      %p163 = scmp.eq.s32.totalorder %s31, 1
      %p164 = por %p162, %p163
      %p166 = scmp.ne.s32.totalorder %s151, %s165
      %p167 = scmp.eq.s32.totalorder %s31, 0
      %p168 = por %p166, %p167
      %s170 = sadd.s32 %s169, 1
      %p173 = scmp.eq.s32.totalorder %s25, 1
      %p174 = scmp.ne.s32.totalorder %s169, %s171
      %p175 = scmp.eq.s32.totalorder %s25, 0
      %p176 = por %p174, %p175
      %p177 = scmp.ne.s32.totalorder %s169, %s171
      %p178 = scmp.eq.s32.totalorder %s30, 1
      %p179 = por %p177, %p178
      %p180 = scmp.ne.s32.totalorder %s171, %s172
      %p181 = scmp.eq.s32.totalorder %s30, 0
      %p182 = por %p180, %p181
      %p183 = scmp.ne.s32.totalorder %s171, %s172
      %p184 = scmp.eq.s32.totalorder %s31, 1
      %p185 = por %p183, %p184
      %p187 = scmp.ne.s32.totalorder %s172, %s186
      %p188 = scmp.eq.s32.totalorder %s31, 0
      %p189 = por %p187, %p188
      %s191 = sadd.s32 %s190, 1
      %p194 = scmp.eq.s32.totalorder %s25, 1
      %p195 = scmp.ne.s32.totalorder %s190, %s192
      %p196 = scmp.eq.s32.totalorder %s25, 0
      %p197 = por %p195, %p196
      %p198 = scmp.ne.s32.totalorder %s190, %s192
      %p199 = scmp.eq.s32.totalorder %s30, 1
      %p200 = por %p198, %p199
      %p201 = scmp.ne.s32.totalorder %s192, %s193
      %p202 = scmp.eq.s32.totalorder %s30, 0
      %p203 = por %p201, %p202
      %p204 = scmp.ne.s32.totalorder %s192, %s193
      %p205 = scmp.eq.s32.totalorder %s31, 1
      %p206 = por %p204, %p205
      %p208 = scmp.ne.s32.totalorder %s193, %s207
      %p209 = scmp.eq.s32.totalorder %s31, 0
      %p210 = por %p208, %p209
      %s212 = sadd.s32 %s211, 1
      %p215 = scmp.eq.s32.totalorder %s25, 1
      %p216 = scmp.ne.s32.totalorder %s211, %s213
      %p217 = scmp.eq.s32.totalorder %s25, 0
      %p218 = por %p216, %p217
      %p219 = scmp.ne.s32.totalorder %s211, %s213
      %p220 = scmp.eq.s32.totalorder %s30, 1
      %p221 = por %p219, %p220
      %p222 = scmp.ne.s32.totalorder %s213, %s214
      %p223 = scmp.eq.s32.totalorder %s30, 0
      %p224 = por %p222, %p223
      %p225 = scmp.ne.s32.totalorder %s213, %s214
      %p226 = scmp.eq.s32.totalorder %s31, 1
      %p227 = por %p225, %p226
      %p229 = scmp.ne.s32.totalorder %s214, %s228
      %p230 = scmp.eq.s32.totalorder %s31, 0
      %p231 = por %p229, %p230
      %s233 = sadd.s32 %s232, 1
      %p236 = scmp.eq.s32.totalorder %s25, 1
      %p237 = scmp.ne.s32.totalorder %s232, %s234
      %p238 = scmp.eq.s32.totalorder %s25, 0
      %p239 = por %p237, %p238
      %p240 = scmp.ne.s32.totalorder %s232, %s234
      %p241 = scmp.eq.s32.totalorder %s30, 1
      %p242 = por %p240, %p241
      %p243 = scmp.ne.s32.totalorder %s234, %s235
      %p244 = scmp.eq.s32.totalorder %s30, 0
      %p245 = por %p243, %p244
      %p246 = scmp.ne.s32.totalorder %s234, %s235
      %p247 = scmp.eq.s32.totalorder %s31, 1
      %p248 = por %p246, %p247
      %p250 = scmp.ne.s32.totalorder %s235, %s249
      %p251 = scmp.eq.s32.totalorder %s31, 0
      %p252 = por %p250, %p251
      %s254 = sadd.s32 %s253, 1
      %p257 = scmp.eq.s32.totalorder %s25, 1
      %p258 = scmp.ne.s32.totalorder %s253, %s255
      %p259 = scmp.eq.s32.totalorder %s25, 0
      %p260 = por %p258, %p259
      %p261 = scmp.ne.s32.totalorder %s253, %s255
      %p262 = scmp.eq.s32.totalorder %s30, 1
      %p263 = por %p261, %p262
      %p264 = scmp.ne.s32.totalorder %s255, %s256
      %p265 = scmp.eq.s32.totalorder %s30, 0
      %p266 = por %p264, %p265
      %p267 = scmp.ne.s32.totalorder %s255, %s256
      %p268 = scmp.eq.s32.totalorder %s31, 1
      %p269 = por %p267, %p268
      %p271 = scmp.ne.s32.totalorder %s256, %s270
      %p272 = scmp.eq.s32.totalorder %s31, 0
      %p273 = por %p271, %p272
      %s275 = sadd.s32 %s274, 1
      %p278 = scmp.eq.s32.totalorder %s25, 1
      %p279 = scmp.ne.s32.totalorder %s274, %s276
      %p280 = scmp.eq.s32.totalorder %s25, 0
      %p281 = por %p279, %p280
      %p282 = scmp.ne.s32.totalorder %s274, %s276
      %p283 = scmp.eq.s32.totalorder %s30, 1
      %p284 = por %p282, %p283
      %p285 = scmp.ne.s32.totalorder %s276, %s277
      %p286 = scmp.eq.s32.totalorder %s30, 0
      %p287 = por %p285, %p286
      %p288 = scmp.ne.s32.totalorder %s276, %s277
      %p289 = scmp.eq.s32.totalorder %s31, 1
      %p290 = por %p288, %p289
      %p292 = scmp.ne.s32.totalorder %s277, %s291
      %p293 = scmp.eq.s32.totalorder %s31, 0
      %p294 = por %p292, %p293
      %s296 = sadd.s32 %s295, 1
      %p299 = scmp.eq.s32.totalorder %s25, 1
      %p300 = scmp.ne.s32.totalorder %s295, %s297
      %p301 = scmp.eq.s32.totalorder %s25, 0
      %p302 = por %p300, %p301
      %p303 = scmp.ne.s32.totalorder %s295, %s297
      %p304 = scmp.eq.s32.totalorder %s30, 1
      %p305 = por %p303, %p304
      %p306 = scmp.ne.s32.totalorder %s297, %s298
      %p307 = scmp.eq.s32.totalorder %s30, 0
      %p308 = por %p306, %p307
      %p309 = scmp.ne.s32.totalorder %s297, %s298
      %p310 = scmp.eq.s32.totalorder %s31, 1
      %p311 = por %p309, %p310
      %p313 = scmp.ne.s32.totalorder %s298, %s312
      %p314 = scmp.eq.s32.totalorder %s31, 0
      %p315 = por %p313, %p314
      %s317 = sadd.s32 %s316, 1
      %p320 = scmp.eq.s32.totalorder %s25, 1
      %p321 = scmp.ne.s32.totalorder %s316, %s318
      %p322 = scmp.eq.s32.totalorder %s25, 0
      %p323 = por %p321, %p322
      %p324 = scmp.ne.s32.totalorder %s316, %s318
      %p325 = scmp.eq.s32.totalorder %s30, 1
      %p326 = por %p324, %p325
      %p327 = scmp.ne.s32.totalorder %s318, %s319
      %p328 = scmp.eq.s32.totalorder %s30, 0
      %p329 = por %p327, %p328
      %p330 = scmp.ne.s32.totalorder %s318, %s319
      %p331 = scmp.eq.s32.totalorder %s31, 1
      %p332 = por %p330, %p331
      %p334 = scmp.ne.s32.totalorder %s319, %s333
      %p335 = scmp.eq.s32.totalorder %s31, 0
      %p336 = por %p334, %p335
      %s338 = sadd.s32 %s337, 1
      %p341 = scmp.eq.s32.totalorder %s25, 1
      %p342 = scmp.ne.s32.totalorder %s337, %s339
      %p343 = scmp.eq.s32.totalorder %s25, 0
      %p344 = por %p342, %p343
      %p345 = scmp.ne.s32.totalorder %s337, %s339
      %p346 = scmp.eq.s32.totalorder %s30, 1
      %p347 = por %p345, %p346
      %p348 = scmp.ne.s32.totalorder %s339, %s340
      %p349 = scmp.eq.s32.totalorder %s30, 0
      %p350 = por %p348, %p349
      %p351 = scmp.ne.s32.totalorder %s339, %s340
      %p352 = scmp.eq.s32.totalorder %s31, 1
      %p353 = por %p351, %p352
      %p355 = scmp.ne.s32.totalorder %s340, %s354
      %p356 = scmp.eq.s32.totalorder %s31, 0
      %p357 = por %p355, %p356
      %s359 = sadd.s32 %s358, 1
      %p362 = scmp.eq.s32.totalorder %s25, 1
      %p363 = scmp.ne.s32.totalorder %s358, %s360
      %p364 = scmp.eq.s32.totalorder %s25, 0
      %p365 = por %p363, %p364
      %p366 = scmp.ne.s32.totalorder %s358, %s360
      %p367 = scmp.eq.s32.totalorder %s30, 1
      %p368 = por %p366, %p367
      %p369 = scmp.ne.s32.totalorder %s360, %s361
      %p370 = scmp.eq.s32.totalorder %s30, 0
      %p371 = por %p369, %p370
      %p372 = scmp.ne.s32.totalorder %s360, %s361
      %p373 = scmp.eq.s32.totalorder %s31, 1
      %p374 = por %p372, %p373
      %p376 = scmp.ne.s32.totalorder %s361, %s375
      %p377 = scmp.eq.s32.totalorder %s31, 0
      %p378 = por %p376, %p377
      %s379 = ssub.s32 %s25, %s32
      %p380 = scmp.eq.s32.totalorder %s379, 0
      %s382 = sadd.s32 %s381, 1
      %s383 = scalar_select %p380, %s381, %s382
      %p386 = pneg %p380
      %p387 = scmp.eq.s32.totalorder %s25, 1
      %p388 = por %p386, %p387
      %p389 = scmp.ne.s32.totalorder %s381, %s384
      %p390 = scmp.eq.s32.totalorder %s25, 0
      %p391 = por %p389, %p390
      %p392 = scmp.ne.s32.totalorder %s381, %s384
      %p393 = scmp.eq.s32.totalorder %s30, 1
      %p394 = por %p392, %p393
      %p395 = scmp.ne.s32.totalorder %s384, %s385
      %p396 = scmp.eq.s32.totalorder %s30, 0
      %p397 = por %p395, %p396
      %p398 = scmp.ne.s32.totalorder %s384, %s385
      %p399 = scmp.eq.s32.totalorder %s31, 1
      %p400 = por %p398, %p399
      %p402 = scmp.ne.s32.totalorder %s385, %s401
      %p403 = scmp.eq.s32.totalorder %s31, 0
      %p404 = por %p402, %p403
      %p405 = scmp.le.s32.totalorder 1, %s25
      %p406 = scmp.lt.s32.totalorder %s25, 3
      %p407 = pnand %p405, %p406
      %p408 = pneg %p407
      // Predicated region
      $region9: #{tpu_custom_call.1} parent=5 // pred_check
        _
      $region10: #{tpu_custom_call.1} parent=5 // pred_check_branch
        %410 = sbr.rel (%p407) target = $region12
      $region11: #{tpu_custom_call.1} parent=5 // pred_region
        %s411 = ssub.s32 %s25, 1
        // Predicated region
        $region13: #{tpu_custom_call.1} parent=11 // pred_check
          %p412 = pneg %p98
        $region14: #{tpu_custom_call.1} parent=11 // pred_check_branch
          %414 = sbr.rel (%p412) target = $region16
        $region15: #{tpu_custom_call.1} parent=11 // pred_region
          _
        $region16: #{tpu_custom_call.1} parent=11 // pred_fallthru
          _
        // Predicated region
        $region17: #{tpu_custom_call.1} parent=11 // pred_check
          %p415 = pneg %p119
        $region18: #{tpu_custom_call.1} parent=11 // pred_check_branch
          %417 = sbr.rel (%p415) target = $region20
        $region19: #{tpu_custom_call.1} parent=11 // pred_region
          _
        $region20: #{tpu_custom_call.1} parent=11 // pred_fallthru
          _
        // Predicated region
        $region21: #{tpu_custom_call.1} parent=11 // pred_check
          %p418 = pneg %p140
        $region22: #{tpu_custom_call.1} parent=11 // pred_check_branch
          %420 = sbr.rel (%p418) target = $region24
        $region23: #{tpu_custom_call.1} parent=11 // pred_region
          _
        $region24: #{tpu_custom_call.1} parent=11 // pred_fallthru
          _
        // Predicated region
        $region25: #{tpu_custom_call.1} parent=11 // pred_check
          %p421 = pneg %p161
        $region26: #{tpu_custom_call.1} parent=11 // pred_check_branch
          %423 = sbr.rel (%p421) target = $region28
        $region27: #{tpu_custom_call.1} parent=11 // pred_region
          _
        $region28: #{tpu_custom_call.1} parent=11 // pred_fallthru
          _
        // Predicated region
        $region29: #{tpu_custom_call.1} parent=11 // pred_check
          %p424 = pneg %p182
        $region30: #{tpu_custom_call.1} parent=11 // pred_check_branch
          %426 = sbr.rel (%p424) target = $region32
        $region31: #{tpu_custom_call.1} parent=11 // pred_region
          _
        $region32: #{tpu_custom_call.1} parent=11 // pred_fallthru
          _
        // Predicated region
        $region33: #{tpu_custom_call.1} parent=11 // pred_check
          %p427 = pneg %p203
        $region34: #{tpu_custom_call.1} parent=11 // pred_check_branch
          %429 = sbr.rel (%p427) target = $region36
        $region35: #{tpu_custom_call.1} parent=11 // pred_region
          _
        $region36: #{tpu_custom_call.1} parent=11 // pred_fallthru
          _
        // Predicated region
        $region37: #{tpu_custom_call.1} parent=11 // pred_check
          %p430 = pneg %p224
        $region38: #{tpu_custom_call.1} parent=11 // pred_check_branch
          %432 = sbr.rel (%p430) target = $region40
        $region39: #{tpu_custom_call.1} parent=11 // pred_region
          _
        $region40: #{tpu_custom_call.1} parent=11 // pred_fallthru
          _
        // Predicated region
        $region41: #{tpu_custom_call.1} parent=11 // pred_check
          %p433 = pneg %p245
        $region42: #{tpu_custom_call.1} parent=11 // pred_check_branch
          %435 = sbr.rel (%p433) target = $region44
        $region43: #{tpu_custom_call.1} parent=11 // pred_region
          _
        $region44: #{tpu_custom_call.1} parent=11 // pred_fallthru
          _
        // Predicated region
        $region45: #{tpu_custom_call.1} parent=11 // pred_check
          %p436 = pneg %p266
        $region46: #{tpu_custom_call.1} parent=11 // pred_check_branch
          %438 = sbr.rel (%p436) target = $region48
        $region47: #{tpu_custom_call.1} parent=11 // pred_region
          _
        $region48: #{tpu_custom_call.1} parent=11 // pred_fallthru
          _
        // Predicated region
        $region49: #{tpu_custom_call.1} parent=11 // pred_check
          %p439 = pneg %p287
        $region50: #{tpu_custom_call.1} parent=11 // pred_check_branch
          %441 = sbr.rel (%p439) target = $region52
        $region51: #{tpu_custom_call.1} parent=11 // pred_region
          _
        $region52: #{tpu_custom_call.1} parent=11 // pred_fallthru
          _
        // Predicated region
        $region53: #{tpu_custom_call.1} parent=11 // pred_check
          %p442 = pneg %p308
        $region54: #{tpu_custom_call.1} parent=11 // pred_check_branch
          %444 = sbr.rel (%p442) target = $region56
        $region55: #{tpu_custom_call.1} parent=11 // pred_region
          _
        $region56: #{tpu_custom_call.1} parent=11 // pred_fallthru
          _
        // Predicated region
        $region57: #{tpu_custom_call.1} parent=11 // pred_check
          %p445 = pneg %p329
        $region58: #{tpu_custom_call.1} parent=11 // pred_check_branch
          %447 = sbr.rel (%p445) target = $region60
        $region59: #{tpu_custom_call.1} parent=11 // pred_region
          _
        $region60: #{tpu_custom_call.1} parent=11 // pred_fallthru
          _
        // Predicated region
        $region61: #{tpu_custom_call.1} parent=11 // pred_check
          %p448 = pneg %p350
        $region62: #{tpu_custom_call.1} parent=11 // pred_check_branch
          %450 = sbr.rel (%p448) target = $region64
        $region63: #{tpu_custom_call.1} parent=11 // pred_region
          _
        $region64: #{tpu_custom_call.1} parent=11 // pred_fallthru
          _
        // Predicated region
        $region65: #{tpu_custom_call.1} parent=11 // pred_check
          %p451 = pneg %p371
        $region66: #{tpu_custom_call.1} parent=11 // pred_check_branch
          %453 = sbr.rel (%p451) target = $region68
        $region67: #{tpu_custom_call.1} parent=11 // pred_region
          _
        $region68: #{tpu_custom_call.1} parent=11 // pred_fallthru
          _
      $region12: #{tpu_custom_call.1} parent=5 // pred_fallthru
        _
      %p454 = scmp.lt.s32.totalorder %s25, 2
      // Predicated region
      $region69: #{tpu_custom_call.1} parent=5 // pred_check
        %p455 = pneg %p454
      $region70: #{tpu_custom_call.1} parent=5 // pred_check_branch
        %457 = sbr.rel (%p455) target = $region72
      $region71: #{tpu_custom_call.1} parent=5 // pred_region
        // Predicated region
        $region73: #{tpu_custom_call.1} parent=71 // pred_check
          %p458 = pneg %p45
        $region74: #{tpu_custom_call.1} parent=71 // pred_check_branch
          %460 = sbr.rel (%p458) target = $region76
        $region75: #{tpu_custom_call.1} parent=71 // pred_region
          %p461 = scmp.lt.s32.totalorder %s25, 1
          %s462 = scalar_select %p461, %s25, 1
          %s463 = smul.addr %s462, 8
          %s464 = scalar_lea.vmem %s0, %s463
        $region76: #{tpu_custom_call.1} parent=71 // pred_fallthru
          _
        // Predicated region
        $region77: #{tpu_custom_call.1} parent=71 // pred_check
          %p465 = pneg %p71
        $region78: #{tpu_custom_call.1} parent=71 // pred_check_branch
          %467 = sbr.rel (%p465) target = $region80
        $region79: #{tpu_custom_call.1} parent=71 // pred_region
          %p468 = scmp.lt.s32.totalorder %s25, 1
          %s469 = scalar_select %p468, %s25, 1
          %s470 = scalar_lea.vmem %s1, %s469
        $region80: #{tpu_custom_call.1} parent=71 // pred_fallthru
          _
      $region72: #{tpu_custom_call.1} parent=5 // pred_fallthru
        _
      %p471 = scmp.le.s32.totalorder 1, %s25
      %p472 = scmp.lt.s32.totalorder %s25, 3
      %p473 = pnand %p471, %p472
      %p474 = pneg %p473
      // Predicated region
      $region81: #{tpu_custom_call.1} parent=5 // pred_check
        _
      $region82: #{tpu_custom_call.1} parent=5 // pred_check_branch
        %476 = sbr.rel (%p473) target = $region84
      $region83: #{tpu_custom_call.1} parent=5 // pred_region
        %s477 = ssub.s32 %s25, 1
        %p478 = scmp.lt.s32.totalorder %s30, 1
        %s479 = scalar_select %p478, %s30, 1
        %s480 = smul.addr %s479, 8
        %s481 = scalar_lea.vmem %s0, %s480
        %p482 = pneg %p51
        %p483 = pneg %p48
        %p484 = scmp.lt.s32.totalorder %s30, 1
        %s485 = scalar_select %p484, %s30, 1
        %s486 = scalar_lea.vmem %s1, %s485
        %p487 = pneg %p77
        %p488 = pneg %p74
        %p489 = pneg %p98
        %p490 = pneg %p95
        %p491 = pneg %p119
        %p492 = pneg %p116
        %p493 = pneg %p140
        %p494 = pneg %p137
        %p495 = pneg %p161
        %p496 = pneg %p158
        %p497 = pneg %p182
        %p498 = pneg %p179
        %p499 = pneg %p203
        %p500 = pneg %p200
        %p501 = pneg %p224
        %p502 = pneg %p221
        %p503 = pneg %p245
        %p504 = pneg %p242
        %p505 = pneg %p266
        %p506 = pneg %p263
        %p507 = pneg %p287
        %p508 = pneg %p284
        %p509 = pneg %p308
        %p510 = pneg %p305
        %p511 = pneg %p329
        %p512 = pneg %p326
        %p513 = pneg %p350
        %p514 = pneg %p347
        %p515 = pneg %p371
        %p516 = pneg %p368
        %p517 = pneg %p397
        %p518 = pneg %p394
        %s519 = sand.u32 %s384, 1
        %s520 = scalar_lea.sflag [#allocation3], %s519
        %s521 = sand.u32 %s384, 1
        %s522 = smul.addr %s521, 8
        %s523 = scalar_lea.vmem [#allocation2], %s522
        %p524 = scmp.lt.s32.totalorder %s30, 1
        %s525 = scalar_select %p524, %s30, 1
        %s526 = smul.addr %s525, 8
        %s527 = scalar_lea.vmem %s0, %s526
        %p528 = scmp.lt.s32.totalorder %s30, 1
        %s529 = scalar_select %p528, %s30, 1
        %s530 = scalar_lea.vmem %s1, %s529
        %v532 = vld [vmem:[%s527] sm:$0xff]
        %v533 = vld [vmem:[%s530] sm:$0x1]
        %v535 = vlaneseq
        %v536 = vshrl.u32 %v535, 7
        %v537 = vsub.s32 0, %v536
        %v538 = vrot.slane %v533, %v537
        %v540 = vpack.c.bf16 %v532, %v532
        %v541 = vld [vmem:[%s2] sm:$0xf]
        %v542 = vld [vmem:[%s2 + $0x4] sm:$0xf]
        %v543 = vld [vmem:[%s2 + $0x8] sm:$0xf]
        %v544 = vld [vmem:[%s2 + $0xc] sm:$0xf]
        %v545 = vld [vmem:[%s2 + $0x10] sm:$0xf]
        %v546 = vld [vmem:[%s2 + $0x14] sm:$0xf]
        %v547 = vld [vmem:[%s2 + $0x18] sm:$0xf]
        %v548 = vld [vmem:[%s2 + $0x1c] sm:$0xf]
        %v549 = vld [vmem:[%s2 + $0x20] sm:$0xf]
        %v550 = vld [vmem:[%s2 + $0x24] sm:$0xf]
        %v551 = vld [vmem:[%s2 + $0x28] sm:$0xf]
        %v552 = vld [vmem:[%s2 + $0x2c] sm:$0xf]
        %v553 = vld [vmem:[%s2 + $0x30] sm:$0xf]
        %v554 = vld [vmem:[%s2 + $0x34] sm:$0xf]
        %v555 = vld [vmem:[%s2 + $0x38] sm:$0xf]
        %v556 = vld [vmem:[%s2 + $0x3c] sm:$0xf]
        %v557 = vld [vmem:[%s2 + $0x40] sm:$0xf]
        %v558 = vld [vmem:[%s2 + $0x44] sm:$0xf]
        %v559 = vld [vmem:[%s2 + $0x48] sm:$0xf]
        %v560 = vld [vmem:[%s2 + $0x4c] sm:$0xf]
        %v561 = vld [vmem:[%s2 + $0x50] sm:$0xf]
        %v562 = vld [vmem:[%s2 + $0x54] sm:$0xf]
        %v563 = vld [vmem:[%s2 + $0x58] sm:$0xf]
        %v564 = vld [vmem:[%s2 + $0x5c] sm:$0xf]
        %v565 = vld [vmem:[%s2 + $0x60] sm:$0xf]
        %v566 = vld [vmem:[%s2 + $0x64] sm:$0xf]
        %v567 = vld [vmem:[%s2 + $0x68] sm:$0xf]
        %v568 = vld [vmem:[%s2 + $0x6c] sm:$0xf]
        %v569 = vld [vmem:[%s2 + $0x70] sm:$0xf]
        %v570 = vld [vmem:[%s2 + $0x74] sm:$0xf]
        %v571 = vld [vmem:[%s2 + $0x78] sm:$0xf]
        %v572 = vld [vmem:[%s2 + $0x7c] sm:$0xf]
        %v573 = vld [vmem:[%s3] sm:$0x1]
        %v574 = vld [vmem:[%s3 + $0x1] sm:$0x1]
        %v575 = vld [vmem:[%s3 + $0x2] sm:$0x1]
        %v576 = vld [vmem:[%s3 + $0x3] sm:$0x1]
        %v577 = vld [vmem:[%s3 + $0x4] sm:$0x1]
        %v578 = vld [vmem:[%s3 + $0x5] sm:$0x1]
        %v579 = vld [vmem:[%s3 + $0x6] sm:$0x1]
        %v580 = vld [vmem:[%s3 + $0x7] sm:$0x1]
        %v589 = vlaneseq
        %v590 = vshrl.u32 %v589, 7
        %v591 = vsub.s32 0, %v590
        %v592 = vrot.slane %v573, %v591
        %v593 = vlaneseq
        %v594 = vshrl.u32 %v593, 7
        %v595 = vsub.s32 0, %v594
        %v596 = vrot.slane %v574, %v595
        %v597 = vlaneseq
        %v598 = vshrl.u32 %v597, 7
        %v599 = vsub.s32 0, %v598
        %v600 = vrot.slane %v575, %v599
        %v601 = vlaneseq
        %v602 = vshrl.u32 %v601, 7
        %v603 = vsub.s32 0, %v602
        %v604 = vrot.slane %v576, %v603
        %v605 = vlaneseq
        %v606 = vshrl.u32 %v605, 7
        %v607 = vsub.s32 0, %v606
        %v608 = vrot.slane %v577, %v607
        %v609 = vlaneseq
        %v610 = vshrl.u32 %v609, 7
        %v611 = vsub.s32 0, %v610
        %v612 = vrot.slane %v578, %v611
        %v613 = vlaneseq
        %v614 = vshrl.u32 %v613, 7
        %v615 = vsub.s32 0, %v614
        %v616 = vrot.slane %v579, %v615
        %v617 = vlaneseq
        %v618 = vshrl.u32 %v617, 7
        %v619 = vsub.s32 0, %v618
        %v620 = vrot.slane %v580, %v619
        %v633 = vunpack.c.l.b16 %v541
        %v634 = vunpack.c.l.b16 %v542
        %v635 = vunpack.c.l.b16 %v543
        %v636 = vunpack.c.l.b16 %v544
        %v637 = vpack.c.b16 %v634, %v633
        %v638 = vpack.c.b16 %v636, %v635
        %vm641 = vcmask 261120
        %v643 = vsel %vm641, %v540, 0
        %645 = vmatprep.subr.bf16.mxu0 0
        %646 = vmatpush1.bf16.msra.mxu0 %v637
        %647 = vmatprep.subr.bf16.mxu0 0
        %648 = vmatpush1.bf16.msra.mxu0 %v638
        %649 = vmatprep.subr.bf16.mxu0 0
        %650 = vmatpush1.bf16.msra.mxu0 0
        %651 = vmatprep.subr.bf16.mxu0 0
        %652 = vmatpush1.bf16.msra.mxu0 0
        %653 = vmatprep.subr.bf16.mxu0 0
        %654 = vmatpush1.bf16.msra.mxu0 0
        %655 = vmatprep.subr.bf16.mxu0 0
        %656 = vmatpush1.bf16.msra.mxu0 0
        %657 = vmatprep.subr.bf16.mxu0 0
        %658 = vmatpush1.bf16.msra.mxu0 0
        %659 = vmatprep.subr.bf16.mxu0 0
        %660 = vmatpush1.bf16.msra.mxu0 0
        %661 = vmatprep.subr.bf16.mxu0 0
        %662 = vmatpush1.bf16.msra.mxu0 0
        %663 = vmatprep.subr.bf16.mxu0 0
        %664 = vmatpush1.bf16.msra.mxu0 0
        %665 = vmatprep.subr.bf16.mxu0 0
        %666 = vmatpush1.bf16.msra.mxu0 0
        %667 = vmatprep.subr.bf16.mxu0 0
        %668 = vmatpush1.bf16.msra.mxu0 0
        %669 = vmatprep.subr.bf16.mxu0 0
        %670 = vmatpush1.bf16.msra.mxu0 0
        %671 = vmatprep.subr.bf16.mxu0 0
        %672 = vmatpush1.bf16.msra.mxu0 0
        %673 = vmatprep.subr.bf16.mxu0 0
        %674 = vmatpush1.bf16.msra.mxu0 0
        %675 = vmatprep.subr.bf16.mxu0 0
        %676 = vmatpush1.bf16.msra.mxu0 0
        %677 = vmatprep.mubr.bf16.mxu0 0
        %678 = vmatmul.mubr.bf16.gmra.mrb[0].mxu0 %v643
        %v679 = vpop.f32.mrb[0].mxu0
        %v680 = vadd.f32 %v592, %v679
        %v681 = vpop.f32.mrb[0].mxu0
        %v682 = vpop.f32.mrb[0].mxu0
        %v683 = vpop.f32.mrb[0].mxu0
        %684 = vdwg.mxu0
        %v689 = vunpack.c.l.b16 %v545
        %v690 = vunpack.c.l.b16 %v546
        %v691 = vunpack.c.l.b16 %v547
        %v692 = vunpack.c.l.b16 %v548
        %v693 = vpack.c.b16 %v690, %v689
        %v694 = vpack.c.b16 %v692, %v691
        %697 = vmatprep.subr.bf16.mxu0 0
        %698 = vmatpush1.bf16.msra.mxu0 %v693
        %699 = vmatprep.subr.bf16.mxu0 0
        %700 = vmatpush1.bf16.msra.mxu0 %v694
        %701 = vmatprep.subr.bf16.mxu0 0
        %702 = vmatpush1.bf16.msra.mxu0 0
        %703 = vmatprep.subr.bf16.mxu0 0
        %704 = vmatpush1.bf16.msra.mxu0 0
        %705 = vmatprep.subr.bf16.mxu0 0
        %706 = vmatpush1.bf16.msra.mxu0 0
        %707 = vmatprep.subr.bf16.mxu0 0
        %708 = vmatpush1.bf16.msra.mxu0 0
        %709 = vmatprep.subr.bf16.mxu0 0
        %710 = vmatpush1.bf16.msra.mxu0 0
        %711 = vmatprep.subr.bf16.mxu0 0
        %712 = vmatpush1.bf16.msra.mxu0 0
        %713 = vmatprep.subr.bf16.mxu0 0
        %714 = vmatpush1.bf16.msra.mxu0 0
        %715 = vmatprep.subr.bf16.mxu0 0
        %716 = vmatpush1.bf16.msra.mxu0 0
        %717 = vmatprep.subr.bf16.mxu0 0
        %718 = vmatpush1.bf16.msra.mxu0 0
        %719 = vmatprep.subr.bf16.mxu0 0
        %720 = vmatpush1.bf16.msra.mxu0 0
        %721 = vmatprep.subr.bf16.mxu0 0
        %722 = vmatpush1.bf16.msra.mxu0 0
        %723 = vmatprep.subr.bf16.mxu0 0
        %724 = vmatpush1.bf16.msra.mxu0 0
        %725 = vmatprep.subr.bf16.mxu0 0
        %726 = vmatpush1.bf16.msra.mxu0 0
        %727 = vmatprep.subr.bf16.mxu0 0
        %728 = vmatpush1.bf16.msra.mxu0 0
        %729 = vmatprep.mubr.bf16.mxu0 0
        %730 = vmatmul.mubr.bf16.gmra.mrb[0].mxu0 %v643
        %v731 = vpop.f32.mrb[0].mxu0
        %v732 = vadd.f32 %v596, %v731
        %v733 = vpop.f32.mrb[0].mxu0
        %v734 = vpop.f32.mrb[0].mxu0
        %v735 = vpop.f32.mrb[0].mxu0
        %736 = vdwg.mxu0
        %v741 = vunpack.c.l.b16 %v549
        %v742 = vunpack.c.l.b16 %v550
        %v743 = vunpack.c.l.b16 %v551
        %v744 = vunpack.c.l.b16 %v552
        %v745 = vpack.c.b16 %v742, %v741
        %v746 = vpack.c.b16 %v744, %v743
        %749 = vmatprep.subr.bf16.mxu0 0
        %750 = vmatpush1.bf16.msra.mxu0 %v745
        %751 = vmatprep.subr.bf16.mxu0 0
        %752 = vmatpush1.bf16.msra.mxu0 %v746
        %753 = vmatprep.subr.bf16.mxu0 0
        %754 = vmatpush1.bf16.msra.mxu0 0
        %755 = vmatprep.subr.bf16.mxu0 0
        %756 = vmatpush1.bf16.msra.mxu0 0
        %757 = vmatprep.subr.bf16.mxu0 0
        %758 = vmatpush1.bf16.msra.mxu0 0
        %759 = vmatprep.subr.bf16.mxu0 0
        %760 = vmatpush1.bf16.msra.mxu0 0
        %761 = vmatprep.subr.bf16.mxu0 0
        %762 = vmatpush1.bf16.msra.mxu0 0
        %763 = vmatprep.subr.bf16.mxu0 0
        %764 = vmatpush1.bf16.msra.mxu0 0
        %765 = vmatprep.subr.bf16.mxu0 0
        %766 = vmatpush1.bf16.msra.mxu0 0
        %767 = vmatprep.subr.bf16.mxu0 0
        %768 = vmatpush1.bf16.msra.mxu0 0
        %769 = vmatprep.subr.bf16.mxu0 0
        %770 = vmatpush1.bf16.msra.mxu0 0
        %771 = vmatprep.subr.bf16.mxu0 0
        %772 = vmatpush1.bf16.msra.mxu0 0
        %773 = vmatprep.subr.bf16.mxu0 0
        %774 = vmatpush1.bf16.msra.mxu0 0
        %775 = vmatprep.subr.bf16.mxu0 0
        %776 = vmatpush1.bf16.msra.mxu0 0
        %777 = vmatprep.subr.bf16.mxu0 0
        %778 = vmatpush1.bf16.msra.mxu0 0
        %779 = vmatprep.subr.bf16.mxu0 0
        %780 = vmatpush1.bf16.msra.mxu0 0
        %781 = vmatprep.mubr.bf16.mxu0 0
        %782 = vmatmul.mubr.bf16.gmra.mrb[0].mxu0 %v643
        %v783 = vpop.f32.mrb[0].mxu0
        %v784 = vadd.f32 %v600, %v783
        %v785 = vpop.f32.mrb[0].mxu0
        %v786 = vpop.f32.mrb[0].mxu0
        %v787 = vpop.f32.mrb[0].mxu0
        %788 = vdwg.mxu0
        %v793 = vunpack.c.l.b16 %v553
        %v794 = vunpack.c.l.b16 %v554
        %v795 = vunpack.c.l.b16 %v555
        %v796 = vunpack.c.l.b16 %v556
        %v797 = vpack.c.b16 %v794, %v793
        %v798 = vpack.c.b16 %v796, %v795
        %801 = vmatprep.subr.bf16.mxu0 0
        %802 = vmatpush1.bf16.msra.mxu0 %v797
        %803 = vmatprep.subr.bf16.mxu0 0
        %804 = vmatpush1.bf16.msra.mxu0 %v798
        %805 = vmatprep.subr.bf16.mxu0 0
        %806 = vmatpush1.bf16.msra.mxu0 0
        %807 = vmatprep.subr.bf16.mxu0 0
        %808 = vmatpush1.bf16.msra.mxu0 0
        %809 = vmatprep.subr.bf16.mxu0 0
        %810 = vmatpush1.bf16.msra.mxu0 0
        %811 = vmatprep.subr.bf16.mxu0 0
        %812 = vmatpush1.bf16.msra.mxu0 0
        %813 = vmatprep.subr.bf16.mxu0 0
        %814 = vmatpush1.bf16.msra.mxu0 0
        %815 = vmatprep.subr.bf16.mxu0 0
        %816 = vmatpush1.bf16.msra.mxu0 0
        %817 = vmatprep.subr.bf16.mxu0 0
        %818 = vmatpush1.bf16.msra.mxu0 0
        %819 = vmatprep.subr.bf16.mxu0 0
        %820 = vmatpush1.bf16.msra.mxu0 0
        %821 = vmatprep.subr.bf16.mxu0 0
        %822 = vmatpush1.bf16.msra.mxu0 0
        %823 = vmatprep.subr.bf16.mxu0 0
        %824 = vmatpush1.bf16.msra.mxu0 0
        %825 = vmatprep.subr.bf16.mxu0 0
        %826 = vmatpush1.bf16.msra.mxu0 0
        %827 = vmatprep.subr.bf16.mxu0 0
        %828 = vmatpush1.bf16.msra.mxu0 0
        %829 = vmatprep.subr.bf16.mxu0 0
        %830 = vmatpush1.bf16.msra.mxu0 0
        %831 = vmatprep.subr.bf16.mxu0 0
        %832 = vmatpush1.bf16.msra.mxu0 0
        %833 = vmatprep.mubr.bf16.mxu0 0
        %834 = vmatmul.mubr.bf16.gmra.mrb[0].mxu0 %v643
        %v835 = vpop.f32.mrb[0].mxu0
        %v836 = vadd.f32 %v604, %v835
        %v837 = vpop.f32.mrb[0].mxu0
        %v838 = vpop.f32.mrb[0].mxu0
        %v839 = vpop.f32.mrb[0].mxu0
        %840 = vdwg.mxu0
        %v845 = vunpack.c.l.b16 %v557
        %v846 = vunpack.c.l.b16 %v558
        %v847 = vunpack.c.l.b16 %v559
        %v848 = vunpack.c.l.b16 %v560
        %v849 = vpack.c.b16 %v846, %v845
        %v850 = vpack.c.b16 %v848, %v847
        %853 = vmatprep.subr.bf16.mxu0 0
        %854 = vmatpush1.bf16.msra.mxu0 %v849
        %855 = vmatprep.subr.bf16.mxu0 0
        %856 = vmatpush1.bf16.msra.mxu0 %v850
        %857 = vmatprep.subr.bf16.mxu0 0
        %858 = vmatpush1.bf16.msra.mxu0 0
        %859 = vmatprep.subr.bf16.mxu0 0
        %860 = vmatpush1.bf16.msra.mxu0 0
        %861 = vmatprep.subr.bf16.mxu0 0
        %862 = vmatpush1.bf16.msra.mxu0 0
        %863 = vmatprep.subr.bf16.mxu0 0
        %864 = vmatpush1.bf16.msra.mxu0 0
        %865 = vmatprep.subr.bf16.mxu0 0
        %866 = vmatpush1.bf16.msra.mxu0 0
        %867 = vmatprep.subr.bf16.mxu0 0
        %868 = vmatpush1.bf16.msra.mxu0 0
        %869 = vmatprep.subr.bf16.mxu0 0
        %870 = vmatpush1.bf16.msra.mxu0 0
        %871 = vmatprep.subr.bf16.mxu0 0
        %872 = vmatpush1.bf16.msra.mxu0 0
        %873 = vmatprep.subr.bf16.mxu0 0
        %874 = vmatpush1.bf16.msra.mxu0 0
        %875 = vmatprep.subr.bf16.mxu0 0
        %876 = vmatpush1.bf16.msra.mxu0 0
        %877 = vmatprep.subr.bf16.mxu0 0
        %878 = vmatpush1.bf16.msra.mxu0 0
        %879 = vmatprep.subr.bf16.mxu0 0
        %880 = vmatpush1.bf16.msra.mxu0 0
        %881 = vmatprep.subr.bf16.mxu0 0
        %882 = vmatpush1.bf16.msra.mxu0 0
        %883 = vmatprep.subr.bf16.mxu0 0
        %884 = vmatpush1.bf16.msra.mxu0 0
        %885 = vmatprep.mubr.bf16.mxu0 0
        %886 = vmatmul.mubr.bf16.gmra.mrb[0].mxu0 %v643
        %v887 = vpop.f32.mrb[0].mxu0
        %v888 = vadd.f32 %v608, %v887
        %v889 = vpop.f32.mrb[0].mxu0
        %v890 = vpop.f32.mrb[0].mxu0
        %v891 = vpop.f32.mrb[0].mxu0
        %892 = vdwg.mxu0
        %v897 = vunpack.c.l.b16 %v561
        %v898 = vunpack.c.l.b16 %v562
        %v899 = vunpack.c.l.b16 %v563
        %v900 = vunpack.c.l.b16 %v564
        %v901 = vpack.c.b16 %v898, %v897
        %v902 = vpack.c.b16 %v900, %v899
        %905 = vmatprep.subr.bf16.mxu0 0
        %906 = vmatpush1.bf16.msra.mxu0 %v901
        %907 = vmatprep.subr.bf16.mxu0 0
        %908 = vmatpush1.bf16.msra.mxu0 %v902
        %909 = vmatprep.subr.bf16.mxu0 0
        %910 = vmatpush1.bf16.msra.mxu0 0
        %911 = vmatprep.subr.bf16.mxu0 0
        %912 = vmatpush1.bf16.msra.mxu0 0
        %913 = vmatprep.subr.bf16.mxu0 0
        %914 = vmatpush1.bf16.msra.mxu0 0
        %915 = vmatprep.subr.bf16.mxu0 0
        %916 = vmatpush1.bf16.msra.mxu0 0
        %917 = vmatprep.subr.bf16.mxu0 0
        %918 = vmatpush1.bf16.msra.mxu0 0
        %919 = vmatprep.subr.bf16.mxu0 0
        %920 = vmatpush1.bf16.msra.mxu0 0
        %921 = vmatprep.subr.bf16.mxu0 0
        %922 = vmatpush1.bf16.msra.mxu0 0
        %923 = vmatprep.subr.bf16.mxu0 0
        %924 = vmatpush1.bf16.msra.mxu0 0
        %925 = vmatprep.subr.bf16.mxu0 0
        %926 = vmatpush1.bf16.msra.mxu0 0
        %927 = vmatprep.subr.bf16.mxu0 0
        %928 = vmatpush1.bf16.msra.mxu0 0
        %929 = vmatprep.subr.bf16.mxu0 0
        %930 = vmatpush1.bf16.msra.mxu0 0
        %931 = vmatprep.subr.bf16.mxu0 0
        %932 = vmatpush1.bf16.msra.mxu0 0
        %933 = vmatprep.subr.bf16.mxu0 0
        %934 = vmatpush1.bf16.msra.mxu0 0
        %935 = vmatprep.subr.bf16.mxu0 0
        %936 = vmatpush1.bf16.msra.mxu0 0
        %937 = vmatprep.mubr.bf16.mxu0 0
        %938 = vmatmul.mubr.bf16.gmra.mrb[0].mxu0 %v643
        %v939 = vpop.f32.mrb[0].mxu0
        %v940 = vadd.f32 %v612, %v939
        %v941 = vpop.f32.mrb[0].mxu0
        %v942 = vpop.f32.mrb[0].mxu0
        %v943 = vpop.f32.mrb[0].mxu0
        %944 = vdwg.mxu0
        %v949 = vunpack.c.l.b16 %v565
        %v950 = vunpack.c.l.b16 %v566
        %v951 = vunpack.c.l.b16 %v567
        %v952 = vunpack.c.l.b16 %v568
        %v953 = vpack.c.b16 %v950, %v949
        %v954 = vpack.c.b16 %v952, %v951
        %957 = vmatprep.subr.bf16.mxu0 0
        %958 = vmatpush1.bf16.msra.mxu0 %v953
        %959 = vmatprep.subr.bf16.mxu0 0
        %960 = vmatpush1.bf16.msra.mxu0 %v954
        %961 = vmatprep.subr.bf16.mxu0 0
        %962 = vmatpush1.bf16.msra.mxu0 0
        %963 = vmatprep.subr.bf16.mxu0 0
        %964 = vmatpush1.bf16.msra.mxu0 0
        %965 = vmatprep.subr.bf16.mxu0 0
        %966 = vmatpush1.bf16.msra.mxu0 0
        %967 = vmatprep.subr.bf16.mxu0 0
        %968 = vmatpush1.bf16.msra.mxu0 0
        %969 = vmatprep.subr.bf16.mxu0 0
        %970 = vmatpush1.bf16.msra.mxu0 0
        %971 = vmatprep.subr.bf16.mxu0 0
        %972 = vmatpush1.bf16.msra.mxu0 0
        %973 = vmatprep.subr.bf16.mxu0 0
        %974 = vmatpush1.bf16.msra.mxu0 0
        %975 = vmatprep.subr.bf16.mxu0 0
        %976 = vmatpush1.bf16.msra.mxu0 0
        %977 = vmatprep.subr.bf16.mxu0 0
        %978 = vmatpush1.bf16.msra.mxu0 0
        %979 = vmatprep.subr.bf16.mxu0 0
        %980 = vmatpush1.bf16.msra.mxu0 0
        %981 = vmatprep.subr.bf16.mxu0 0
        %982 = vmatpush1.bf16.msra.mxu0 0
        %983 = vmatprep.subr.bf16.mxu0 0
        %984 = vmatpush1.bf16.msra.mxu0 0
        %985 = vmatprep.subr.bf16.mxu0 0
        %986 = vmatpush1.bf16.msra.mxu0 0
        %987 = vmatprep.subr.bf16.mxu0 0
        %988 = vmatpush1.bf16.msra.mxu0 0
        %989 = vmatprep.mubr.bf16.mxu0 0
        %990 = vmatmul.mubr.bf16.gmra.mrb[0].mxu0 %v643
        %v991 = vpop.f32.mrb[0].mxu0
        %v992 = vadd.f32 %v616, %v991
        %v993 = vpop.f32.mrb[0].mxu0
        %v994 = vpop.f32.mrb[0].mxu0
        %v995 = vpop.f32.mrb[0].mxu0
        %996 = vdwg.mxu0
        %v1001 = vunpack.c.l.b16 %v569
        %v1002 = vunpack.c.l.b16 %v570
        %v1003 = vunpack.c.l.b16 %v571
        %v1004 = vunpack.c.l.b16 %v572
        %v1005 = vpack.c.b16 %v1002, %v1001
        %v1006 = vpack.c.b16 %v1004, %v1003
        %1009 = vmatprep.subr.bf16.mxu0 0
        %1010 = vmatpush1.bf16.msra.mxu0 %v1005
        %1011 = vmatprep.subr.bf16.mxu0 0
        %1012 = vmatpush1.bf16.msra.mxu0 %v1006
        %1013 = vmatprep.subr.bf16.mxu0 0
        %1014 = vmatpush1.bf16.msra.mxu0 0
        %1015 = vmatprep.subr.bf16.mxu0 0
        %1016 = vmatpush1.bf16.msra.mxu0 0
        %1017 = vmatprep.subr.bf16.mxu0 0
        %1018 = vmatpush1.bf16.msra.mxu0 0
        %1019 = vmatprep.subr.bf16.mxu0 0
        %1020 = vmatpush1.bf16.msra.mxu0 0
        %1021 = vmatprep.subr.bf16.mxu0 0
        %1022 = vmatpush1.bf16.msra.mxu0 0
        %1023 = vmatprep.subr.bf16.mxu0 0
        %1024 = vmatpush1.bf16.msra.mxu0 0
        %1025 = vmatprep.subr.bf16.mxu0 0
        %1026 = vmatpush1.bf16.msra.mxu0 0
        %1027 = vmatprep.subr.bf16.mxu0 0
        %1028 = vmatpush1.bf16.msra.mxu0 0
        %1029 = vmatprep.subr.bf16.mxu0 0
        %1030 = vmatpush1.bf16.msra.mxu0 0
        %1031 = vmatprep.subr.bf16.mxu0 0
        %1032 = vmatpush1.bf16.msra.mxu0 0
        %1033 = vmatprep.subr.bf16.mxu0 0
        %1034 = vmatpush1.bf16.msra.mxu0 0
        %1035 = vmatprep.subr.bf16.mxu0 0
        %1036 = vmatpush1.bf16.msra.mxu0 0
        %1037 = vmatprep.subr.bf16.mxu0 0
        %1038 = vmatpush1.bf16.msra.mxu0 0
        %1039 = vmatprep.subr.bf16.mxu0 0
        %1040 = vmatpush1.bf16.msra.mxu0 0
        %1041 = vmatprep.mubr.bf16.mxu0 0
        %1042 = vmatmul.mubr.bf16.gmra.mrb[0].mxu0 %v643
        %v1043 = vpop.f32.mrb[0].mxu0
        %v1044 = vadd.f32 %v620, %v1043
        %v1045 = vpop.f32.mrb[0].mxu0
        %v1046 = vpop.f32.mrb[0].mxu0
        %v1047 = vpop.f32.mrb[0].mxu0
        %1048 = vdwg.mxu0
        %v1049 = vpack.c.bf16 %v680, %v680
        %v1050 = vpack.c.bf16 %v732, %v732
        %v1051 = vpack.c.bf16 %v784, %v784
        %v1052 = vpack.c.bf16 %v836, %v836
        %v1053 = vpack.c.bf16 %v888, %v888
        %v1054 = vpack.c.bf16 %v940, %v940
        %v1055 = vpack.c.bf16 %v992, %v992
        %v1056 = vpack.c.bf16 %v1044, %v1044
        %1058 = vrot.lane.b32.xlu0 %v1049, 124
        %v1059 = vpop.permute.xlu0 %1058
        %vm1060 = vcmask 31744
        %v1062 = vsel %vm1060, %v1049, 0
        %v1065 = vsel %vm1060, %v1059, 0
        %1067 = vmatprep.subr.bf16.mxu0 0
        %1068 = vmatpush1.bf16.xpose.msra.mxu0 %v1065
        %1069 = vmatprep.subr.bf16.mxu0 0
        %1070 = vmatpush1.bf16.xpose.msra.mxu0 0
        %1071 = vmatprep.subr.bf16.mxu0 0
        %1072 = vmatpush1.bf16.xpose.msra.mxu0 0
        %1073 = vmatprep.subr.bf16.mxu0 0
        %1074 = vmatpush1.bf16.xpose.msra.mxu0 0
        %1075 = vmatprep.subr.bf16.mxu0 0
        %1076 = vmatpush1.bf16.xpose.msra.mxu0 0
        %1077 = vmatprep.subr.bf16.mxu0 0
        %1078 = vmatpush1.bf16.xpose.msra.mxu0 0
        %1079 = vmatprep.subr.bf16.mxu0 0
        %1080 = vmatpush1.bf16.xpose.msra.mxu0 0
        %1081 = vmatprep.subr.bf16.mxu0 0
        %1082 = vmatpush1.bf16.xpose.msra.mxu0 0
        %1083 = vmatprep.subr.bf16.mxu0 0
        %1084 = vmatpush1.bf16.xpose.msra.mxu0 0
        %1085 = vmatprep.subr.bf16.mxu0 0
        %1086 = vmatpush1.bf16.xpose.msra.mxu0 0
        %1087 = vmatprep.subr.bf16.mxu0 0
        %1088 = vmatpush1.bf16.xpose.msra.mxu0 0
        %1089 = vmatprep.subr.bf16.mxu0 0
        %1090 = vmatpush1.bf16.xpose.msra.mxu0 0
        %1091 = vmatprep.subr.bf16.mxu0 0
        %1092 = vmatpush1.bf16.xpose.msra.mxu0 0
        %1093 = vmatprep.subr.bf16.mxu0 0
        %1094 = vmatpush1.bf16.xpose.msra.mxu0 0
        %1095 = vmatprep.subr.bf16.mxu0 0
        %1096 = vmatpush1.bf16.xpose.msra.mxu0 0
        %1097 = vmatprep.subr.bf16.mxu0 0
        %1098 = vmatpush1.bf16.xpose.msra.mxu0 0
        %1099 = vmatprep.mubr.bf16.mxu0 0
        %1100 = vmatmul.mubr.bf16.gmra.mrb[0].mxu0 %v1062
        %v1101 = vpop.f32.mrb[0].mxu0
        %v1102 = vadd.f32 %v538, %v1101
        %v1103 = vpop.f32.mrb[0].mxu0
        %v1104 = vpop.f32.mrb[0].mxu0
        %v1105 = vpop.f32.mrb[0].mxu0
        %1106 = vdwg.mxu0
        %1108 = vrot.lane.b32.xlu0 %v1050, 124
        %v1109 = vpop.permute.xlu0 %1108
        %v1111 = vsel %vm1060, %v1050, 0
        %v1114 = vsel %vm1060, %v1109, 0
        %1116 = vmatprep.subr.bf16.mxu0 0
        %1117 = vmatpush1.bf16.xpose.msra.mxu0 %v1114
        %1118 = vmatprep.subr.bf16.mxu0 0
        %1119 = vmatpush1.bf16.xpose.msra.mxu0 0
        %1120 = vmatprep.subr.bf16.mxu0 0
        %1121 = vmatpush1.bf16.xpose.msra.mxu0 0
        %1122 = vmatprep.subr.bf16.mxu0 0
        %1123 = vmatpush1.bf16.xpose.msra.mxu0 0
        %1124 = vmatprep.subr.bf16.mxu0 0
        %1125 = vmatpush1.bf16.xpose.msra.mxu0 0
        %1126 = vmatprep.subr.bf16.mxu0 0
        %1127 = vmatpush1.bf16.xpose.msra.mxu0 0
        %1128 = vmatprep.subr.bf16.mxu0 0
        %1129 = vmatpush1.bf16.xpose.msra.mxu0 0
        %1130 = vmatprep.subr.bf16.mxu0 0
        %1131 = vmatpush1.bf16.xpose.msra.mxu0 0
        %1132 = vmatprep.subr.bf16.mxu0 0
        %1133 = vmatpush1.bf16.xpose.msra.mxu0 0
        %1134 = vmatprep.subr.bf16.mxu0 0
        %1135 = vmatpush1.bf16.xpose.msra.mxu0 0
        %1136 = vmatprep.subr.bf16.mxu0 0
        %1137 = vmatpush1.bf16.xpose.msra.mxu0 0
        %1138 = vmatprep.subr.bf16.mxu0 0
        %1139 = vmatpush1.bf16.xpose.msra.mxu0 0
        %1140 = vmatprep.subr.bf16.mxu0 0
        %1141 = vmatpush1.bf16.xpose.msra.mxu0 0
        %1142 = vmatprep.subr.bf16.mxu0 0
        %1143 = vmatpush1.bf16.xpose.msra.mxu0 0
        %1144 = vmatprep.subr.bf16.mxu0 0
        %1145 = vmatpush1.bf16.xpose.msra.mxu0 0
        %1146 = vmatprep.subr.bf16.mxu0 0
        %1147 = vmatpush1.bf16.xpose.msra.mxu0 0
        %1148 = vmatprep.mubr.bf16.mxu0 0
        %1149 = vmatmul.mubr.bf16.gmra.mrb[0].mxu0 %v1111
        %v1150 = vpop.f32.mrb[0].mxu0
        %v1151 = vadd.f32 %v538, %v1150
        %v1152 = vpop.f32.mrb[0].mxu0
        %v1153 = vpop.f32.mrb[0].mxu0
        %v1154 = vpop.f32.mrb[0].mxu0
        %1155 = vdwg.mxu0
        %1157 = vrot.lane.b32.xlu0 %v1051, 124
        %v1158 = vpop.permute.xlu0 %1157
        %v1160 = vsel %vm1060, %v1051, 0
        %v1163 = vsel %vm1060, %v1158, 0
        %1165 = vmatprep.subr.bf16.mxu0 0
        %1166 = vmatpush1.bf16.xpose.msra.mxu0 %v1163
        %1167 = vmatprep.subr.bf16.mxu0 0
        %1168 = vmatpush1.bf16.xpose.msra.mxu0 0
        %1169 = vmatprep.subr.bf16.mxu0 0
        %1170 = vmatpush1.bf16.xpose.msra.mxu0 0
        %1171 = vmatprep.subr.bf16.mxu0 0
        %1172 = vmatpush1.bf16.xpose.msra.mxu0 0
        %1173 = vmatprep.subr.bf16.mxu0 0
        %1174 = vmatpush1.bf16.xpose.msra.mxu0 0
        %1175 = vmatprep.subr.bf16.mxu0 0
        %1176 = vmatpush1.bf16.xpose.msra.mxu0 0
        %1177 = vmatprep.subr.bf16.mxu0 0
        %1178 = vmatpush1.bf16.xpose.msra.mxu0 0
        %1179 = vmatprep.subr.bf16.mxu0 0
        %1180 = vmatpush1.bf16.xpose.msra.mxu0 0
        %1181 = vmatprep.subr.bf16.mxu0 0
        %1182 = vmatpush1.bf16.xpose.msra.mxu0 0
        %1183 = vmatprep.subr.bf16.mxu0 0
        %1184 = vmatpush1.bf16.xpose.msra.mxu0 0
        %1185 = vmatprep.subr.bf16.mxu0 0
        %1186 = vmatpush1.bf16.xpose.msra.mxu0 0
        %1187 = vmatprep.subr.bf16.mxu0 0
        %1188 = vmatpush1.bf16.xpose.msra.mxu0 0
        %1189 = vmatprep.subr.bf16.mxu0 0
        %1190 = vmatpush1.bf16.xpose.msra.mxu0 0
        %1191 = vmatprep.subr.bf16.mxu0 0
        %1192 = vmatpush1.bf16.xpose.msra.mxu0 0
        %1193 = vmatprep.subr.bf16.mxu0 0
        %1194 = vmatpush1.bf16.xpose.msra.mxu0 0
        %1195 = vmatprep.subr.bf16.mxu0 0
        %1196 = vmatpush1.bf16.xpose.msra.mxu0 0
        %1197 = vmatprep.mubr.bf16.mxu0 0
        %1198 = vmatmul.mubr.bf16.gmra.mrb[0].mxu0 %v1160
        %v1199 = vpop.f32.mrb[0].mxu0
        %v1200 = vadd.f32 %v538, %v1199
        %v1201 = vpop.f32.mrb[0].mxu0
        %v1202 = vpop.f32.mrb[0].mxu0
        %v1203 = vpop.f32.mrb[0].mxu0
        %1204 = vdwg.mxu0
        %1206 = vrot.lane.b32.xlu0 %v1052, 124
        %v1207 = vpop.permute.xlu0 %1206
        %v1209 = vsel %vm1060, %v1052, 0
        %v1212 = vsel %vm1060, %v1207, 0
        %1214 = vmatprep.subr.bf16.mxu0 0
        %1215 = vmatpush1.bf16.xpose.msra.mxu0 %v1212
        %1216 = vmatprep.subr.bf16.mxu0 0
        %1217 = vmatpush1.bf16.xpose.msra.mxu0 0
        %1218 = vmatprep.subr.bf16.mxu0 0
        %1219 = vmatpush1.bf16.xpose.msra.mxu0 0
        %1220 = vmatprep.subr.bf16.mxu0 0
        %1221 = vmatpush1.bf16.xpose.msra.mxu0 0
        %1222 = vmatprep.subr.bf16.mxu0 0
        %1223 = vmatpush1.bf16.xpose.msra.mxu0 0
        %1224 = vmatprep.subr.bf16.mxu0 0
        %1225 = vmatpush1.bf16.xpose.msra.mxu0 0
        %1226 = vmatprep.subr.bf16.mxu0 0
        %1227 = vmatpush1.bf16.xpose.msra.mxu0 0
        %1228 = vmatprep.subr.bf16.mxu0 0
        %1229 = vmatpush1.bf16.xpose.msra.mxu0 0
        %1230 = vmatprep.subr.bf16.mxu0 0
        %1231 = vmatpush1.bf16.xpose.msra.mxu0 0
        %1232 = vmatprep.subr.bf16.mxu0 0
        %1233 = vmatpush1.bf16.xpose.msra.mxu0 0
        %1234 = vmatprep.subr.bf16.mxu0 0
        %1235 = vmatpush1.bf16.xpose.msra.mxu0 0
        %1236 = vmatprep.subr.bf16.mxu0 0
        %1237 = vmatpush1.bf16.xpose.msra.mxu0 0
        %1238 = vmatprep.subr.bf16.mxu0 0
        %1239 = vmatpush1.bf16.xpose.msra.mxu0 0
        %1240 = vmatprep.subr.bf16.mxu0 0
        %1241 = vmatpush1.bf16.xpose.msra.mxu0 0
        %1242 = vmatprep.subr.bf16.mxu0 0
        %1243 = vmatpush1.bf16.xpose.msra.mxu0 0
        %1244 = vmatprep.subr.bf16.mxu0 0
        %1245 = vmatpush1.bf16.xpose.msra.mxu0 0
        %1246 = vmatprep.mubr.bf16.mxu0 0
        %1247 = vmatmul.mubr.bf16.gmra.mrb[0].mxu0 %v1209
        %v1248 = vpop.f32.mrb[0].mxu0
        %v1249 = vadd.f32 %v538, %v1248
        %v1250 = vpop.f32.mrb[0].mxu0
        %v1251 = vpop.f32.mrb[0].mxu0
        %v1252 = vpop.f32.mrb[0].mxu0
        %1253 = vdwg.mxu0
        %1255 = vrot.lane.b32.xlu0 %v1053, 124
        %v1256 = vpop.permute.xlu0 %1255
        %v1258 = vsel %vm1060, %v1053, 0
        %v1261 = vsel %vm1060, %v1256, 0
        %1263 = vmatprep.subr.bf16.mxu0 0
        %1264 = vmatpush1.bf16.xpose.msra.mxu0 %v1261
        %1265 = vmatprep.subr.bf16.mxu0 0
        %1266 = vmatpush1.bf16.xpose.msra.mxu0 0
        %1267 = vmatprep.subr.bf16.mxu0 0
        %1268 = vmatpush1.bf16.xpose.msra.mxu0 0
        %1269 = vmatprep.subr.bf16.mxu0 0
        %1270 = vmatpush1.bf16.xpose.msra.mxu0 0
        %1271 = vmatprep.subr.bf16.mxu0 0
        %1272 = vmatpush1.bf16.xpose.msra.mxu0 0
        %1273 = vmatprep.subr.bf16.mxu0 0
        %1274 = vmatpush1.bf16.xpose.msra.mxu0 0
        %1275 = vmatprep.subr.bf16.mxu0 0
        %1276 = vmatpush1.bf16.xpose.msra.mxu0 0
        %1277 = vmatprep.subr.bf16.mxu0 0
        %1278 = vmatpush1.bf16.xpose.msra.mxu0 0
        %1279 = vmatprep.subr.bf16.mxu0 0
        %1280 = vmatpush1.bf16.xpose.msra.mxu0 0
        %1281 = vmatprep.subr.bf16.mxu0 0
        %1282 = vmatpush1.bf16.xpose.msra.mxu0 0
        %1283 = vmatprep.subr.bf16.mxu0 0
        %1284 = vmatpush1.bf16.xpose.msra.mxu0 0
        %1285 = vmatprep.subr.bf16.mxu0 0
        %1286 = vmatpush1.bf16.xpose.msra.mxu0 0
        %1287 = vmatprep.subr.bf16.mxu0 0
        %1288 = vmatpush1.bf16.xpose.msra.mxu0 0
        %1289 = vmatprep.subr.bf16.mxu0 0
        %1290 = vmatpush1.bf16.xpose.msra.mxu0 0
        %1291 = vmatprep.subr.bf16.mxu0 0
        %1292 = vmatpush1.bf16.xpose.msra.mxu0 0
        %1293 = vmatprep.subr.bf16.mxu0 0
        %1294 = vmatpush1.bf16.xpose.msra.mxu0 0
        %1295 = vmatprep.mubr.bf16.mxu0 0
        %1296 = vmatmul.mubr.bf16.gmra.mrb[0].mxu0 %v1258
        %v1297 = vpop.f32.mrb[0].mxu0
        %v1298 = vadd.f32 %v538, %v1297
        %v1299 = vpop.f32.mrb[0].mxu0
        %v1300 = vpop.f32.mrb[0].mxu0
        %v1301 = vpop.f32.mrb[0].mxu0
        %1302 = vdwg.mxu0
        %1304 = vrot.lane.b32.xlu0 %v1054, 124
        %v1305 = vpop.permute.xlu0 %1304
        %v1307 = vsel %vm1060, %v1054, 0
        %v1310 = vsel %vm1060, %v1305, 0
        %1312 = vmatprep.subr.bf16.mxu0 0
        %1313 = vmatpush1.bf16.xpose.msra.mxu0 %v1310
        %1314 = vmatprep.subr.bf16.mxu0 0
        %1315 = vmatpush1.bf16.xpose.msra.mxu0 0
        %1316 = vmatprep.subr.bf16.mxu0 0
        %1317 = vmatpush1.bf16.xpose.msra.mxu0 0
        %1318 = vmatprep.subr.bf16.mxu0 0
        %1319 = vmatpush1.bf16.xpose.msra.mxu0 0
        %1320 = vmatprep.subr.bf16.mxu0 0
        %1321 = vmatpush1.bf16.xpose.msra.mxu0 0
        %1322 = vmatprep.subr.bf16.mxu0 0
        %1323 = vmatpush1.bf16.xpose.msra.mxu0 0
        %1324 = vmatprep.subr.bf16.mxu0 0
        %1325 = vmatpush1.bf16.xpose.msra.mxu0 0
        %1326 = vmatprep.subr.bf16.mxu0 0
        %1327 = vmatpush1.bf16.xpose.msra.mxu0 0
        %1328 = vmatprep.subr.bf16.mxu0 0
        %1329 = vmatpush1.bf16.xpose.msra.mxu0 0
        %1330 = vmatprep.subr.bf16.mxu0 0
        %1331 = vmatpush1.bf16.xpose.msra.mxu0 0
        %1332 = vmatprep.subr.bf16.mxu0 0
        %1333 = vmatpush1.bf16.xpose.msra.mxu0 0
        %1334 = vmatprep.subr.bf16.mxu0 0
        %1335 = vmatpush1.bf16.xpose.msra.mxu0 0
        %1336 = vmatprep.subr.bf16.mxu0 0
        %1337 = vmatpush1.bf16.xpose.msra.mxu0 0
        %1338 = vmatprep.subr.bf16.mxu0 0
        %1339 = vmatpush1.bf16.xpose.msra.mxu0 0
        %1340 = vmatprep.subr.bf16.mxu0 0
        %1341 = vmatpush1.bf16.xpose.msra.mxu0 0
        %1342 = vmatprep.subr.bf16.mxu0 0
        %1343 = vmatpush1.bf16.xpose.msra.mxu0 0
        %1344 = vmatprep.mubr.bf16.mxu0 0
        %1345 = vmatmul.mubr.bf16.gmra.mrb[0].mxu0 %v1307
        %v1346 = vpop.f32.mrb[0].mxu0
        %v1347 = vadd.f32 %v538, %v1346
        %v1348 = vpop.f32.mrb[0].mxu0
        %v1349 = vpop.f32.mrb[0].mxu0
        %v1350 = vpop.f32.mrb[0].mxu0
        %1351 = vdwg.mxu0
        %1353 = vrot.lane.b32.xlu0 %v1055, 124
        %v1354 = vpop.permute.xlu0 %1353
        %v1356 = vsel %vm1060, %v1055, 0
        %v1359 = vsel %vm1060, %v1354, 0
        %1361 = vmatprep.subr.bf16.mxu0 0
        %1362 = vmatpush1.bf16.xpose.msra.mxu0 %v1359
        %1363 = vmatprep.subr.bf16.mxu0 0
        %1364 = vmatpush1.bf16.xpose.msra.mxu0 0
        %1365 = vmatprep.subr.bf16.mxu0 0
        %1366 = vmatpush1.bf16.xpose.msra.mxu0 0
        %1367 = vmatprep.subr.bf16.mxu0 0
        %1368 = vmatpush1.bf16.xpose.msra.mxu0 0
        %1369 = vmatprep.subr.bf16.mxu0 0
        %1370 = vmatpush1.bf16.xpose.msra.mxu0 0
        %1371 = vmatprep.subr.bf16.mxu0 0
        %1372 = vmatpush1.bf16.xpose.msra.mxu0 0
        %1373 = vmatprep.subr.bf16.mxu0 0
        %1374 = vmatpush1.bf16.xpose.msra.mxu0 0
        %1375 = vmatprep.subr.bf16.mxu0 0
        %1376 = vmatpush1.bf16.xpose.msra.mxu0 0
        %1377 = vmatprep.subr.bf16.mxu0 0
        %1378 = vmatpush1.bf16.xpose.msra.mxu0 0
        %1379 = vmatprep.subr.bf16.mxu0 0
        %1380 = vmatpush1.bf16.xpose.msra.mxu0 0
        %1381 = vmatprep.subr.bf16.mxu0 0
        %1382 = vmatpush1.bf16.xpose.msra.mxu0 0
        %1383 = vmatprep.subr.bf16.mxu0 0
        %1384 = vmatpush1.bf16.xpose.msra.mxu0 0
        %1385 = vmatprep.subr.bf16.mxu0 0
        %1386 = vmatpush1.bf16.xpose.msra.mxu0 0
        %1387 = vmatprep.subr.bf16.mxu0 0
        %1388 = vmatpush1.bf16.xpose.msra.mxu0 0
        %1389 = vmatprep.subr.bf16.mxu0 0
        %1390 = vmatpush1.bf16.xpose.msra.mxu0 0
        %1391 = vmatprep.subr.bf16.mxu0 0
        %1392 = vmatpush1.bf16.xpose.msra.mxu0 0
        %1393 = vmatprep.mubr.bf16.mxu0 0
        %1394 = vmatmul.mubr.bf16.gmra.mrb[0].mxu0 %v1356
        %v1395 = vpop.f32.mrb[0].mxu0
        %v1396 = vadd.f32 %v538, %v1395
        %v1397 = vpop.f32.mrb[0].mxu0
        %v1398 = vpop.f32.mrb[0].mxu0
        %v1399 = vpop.f32.mrb[0].mxu0
        %1400 = vdwg.mxu0
        %1402 = vrot.lane.b32.xlu0 %v1056, 124
        %v1403 = vpop.permute.xlu0 %1402
        %v1405 = vsel %vm1060, %v1056, 0
        %v1408 = vsel %vm1060, %v1403, 0
        %1410 = vmatprep.subr.bf16.mxu0 0
        %1411 = vmatpush1.bf16.xpose.msra.mxu0 %v1408
        %1412 = vmatprep.subr.bf16.mxu0 0
        %1413 = vmatpush1.bf16.xpose.msra.mxu0 0
        %1414 = vmatprep.subr.bf16.mxu0 0
        %1415 = vmatpush1.bf16.xpose.msra.mxu0 0
        %1416 = vmatprep.subr.bf16.mxu0 0
        %1417 = vmatpush1.bf16.xpose.msra.mxu0 0
        %1418 = vmatprep.subr.bf16.mxu0 0
        %1419 = vmatpush1.bf16.xpose.msra.mxu0 0
        %1420 = vmatprep.subr.bf16.mxu0 0
        %1421 = vmatpush1.bf16.xpose.msra.mxu0 0
        %1422 = vmatprep.subr.bf16.mxu0 0
        %1423 = vmatpush1.bf16.xpose.msra.mxu0 0
        %1424 = vmatprep.subr.bf16.mxu0 0
        %1425 = vmatpush1.bf16.xpose.msra.mxu0 0
        %1426 = vmatprep.subr.bf16.mxu0 0
        %1427 = vmatpush1.bf16.xpose.msra.mxu0 0
        %1428 = vmatprep.subr.bf16.mxu0 0
        %1429 = vmatpush1.bf16.xpose.msra.mxu0 0
        %1430 = vmatprep.subr.bf16.mxu0 0
        %1431 = vmatpush1.bf16.xpose.msra.mxu0 0
        %1432 = vmatprep.subr.bf16.mxu0 0
        %1433 = vmatpush1.bf16.xpose.msra.mxu0 0
        %1434 = vmatprep.subr.bf16.mxu0 0
        %1435 = vmatpush1.bf16.xpose.msra.mxu0 0
        %1436 = vmatprep.subr.bf16.mxu0 0
        %1437 = vmatpush1.bf16.xpose.msra.mxu0 0
        %1438 = vmatprep.subr.bf16.mxu0 0
        %1439 = vmatpush1.bf16.xpose.msra.mxu0 0
        %1440 = vmatprep.subr.bf16.mxu0 0
        %1441 = vmatpush1.bf16.xpose.msra.mxu0 0
        %1442 = vmatprep.mubr.bf16.mxu0 0
        %1443 = vmatmul.mubr.bf16.gmra.mrb[0].mxu0 %v1405
        %v1444 = vpop.f32.mrb[0].mxu0
        %v1445 = vadd.f32 %v538, %v1444
        %v1446 = vpop.f32.mrb[0].mxu0
        %v1447 = vpop.f32.mrb[0].mxu0
        %v1448 = vpop.f32.mrb[0].mxu0
        %1449 = vdwg.mxu0
        %vm1450 = vcmask 64512
        %v1451 = vsel %vm1450, %v1102, -inf
        %1452 = vmax.xlane.f32.xlu0 %v1451
        %v1453 = vpop.xlane.xlu0 %1452
        %v1454 = vsel %vm1450, %v1151, -inf
        %1455 = vmax.xlane.f32.xlu0 %v1454
        %v1456 = vpop.xlane.xlu0 %1455
        %v1457 = vsel %vm1450, %v1200, -inf
        %1458 = vmax.xlane.f32.xlu0 %v1457
        %v1459 = vpop.xlane.xlu0 %1458
        %v1460 = vsel %vm1450, %v1249, -inf
        %1461 = vmax.xlane.f32.xlu0 %v1460
        %v1462 = vpop.xlane.xlu0 %1461
        %v1463 = vsel %vm1450, %v1298, -inf
        %1464 = vmax.xlane.f32.xlu0 %v1463
        %v1465 = vpop.xlane.xlu0 %1464
        %v1466 = vsel %vm1450, %v1347, -inf
        %1467 = vmax.xlane.f32.xlu0 %v1466
        %v1468 = vpop.xlane.xlu0 %1467
        %v1469 = vsel %vm1450, %v1396, -inf
        %1470 = vmax.xlane.f32.xlu0 %v1469
        %v1471 = vpop.xlane.xlu0 %1470
        %v1472 = vsel %vm1450, %v1445, -inf
        %1473 = vmax.xlane.f32.xlu0 %v1472
        %v1474 = vpop.xlane.xlu0 %1473
        %v1475 = vsub.f32 %v1102, %v1453
        %v1476 = vsub.f32 %v1151, %v1456
        %v1477 = vsub.f32 %v1200, %v1459
        %v1478 = vsub.f32 %v1249, %v1462
        %v1479 = vsub.f32 %v1298, %v1465
        %v1480 = vsub.f32 %v1347, %v1468
        %v1481 = vsub.f32 %v1396, %v1471
        %v1482 = vsub.f32 %v1445, %v1474
        %v1483 = vmul.f32 %v1475, 1.442695
        %v1484 = vpow.pop %v1483
        %v1485 = vmul.f32 %v1476, 1.442695
        %v1486 = vpow.pop %v1485
        %v1487 = vmul.f32 %v1477, 1.442695
        %v1488 = vpow.pop %v1487
        %v1489 = vmul.f32 %v1478, 1.442695
        %v1490 = vpow.pop %v1489
        %v1491 = vmul.f32 %v1479, 1.442695
        %v1492 = vpow.pop %v1491
        %v1493 = vmul.f32 %v1480, 1.442695
        %v1494 = vpow.pop %v1493
        %v1495 = vmul.f32 %v1481, 1.442695
        %v1496 = vpow.pop %v1495
        %v1497 = vmul.f32 %v1482, 1.442695
        %v1498 = vpow.pop %v1497
        %v1499 = vsel %vm1450, %v1484, 0.0
        %1500 = vadd.xlane.f32.xlu0 %v1499
        %v1501 = vpop.xlane.xlu0 %1500
        %v1502 = vsel %vm1450, %v1486, 0.0
        %1503 = vadd.xlane.f32.xlu0 %v1502
        %v1504 = vpop.xlane.xlu0 %1503
        %v1505 = vsel %vm1450, %v1488, 0.0
        %1506 = vadd.xlane.f32.xlu0 %v1505
        %v1507 = vpop.xlane.xlu0 %1506
        %v1508 = vsel %vm1450, %v1490, 0.0
        %1509 = vadd.xlane.f32.xlu0 %v1508
        %v1510 = vpop.xlane.xlu0 %1509
        %v1511 = vsel %vm1450, %v1492, 0.0
        %1512 = vadd.xlane.f32.xlu0 %v1511
        %v1513 = vpop.xlane.xlu0 %1512
        %v1514 = vsel %vm1450, %v1494, 0.0
        %1515 = vadd.xlane.f32.xlu0 %v1514
        %v1516 = vpop.xlane.xlu0 %1515
        %v1517 = vsel %vm1450, %v1496, 0.0
        %1518 = vadd.xlane.f32.xlu0 %v1517
        %v1519 = vpop.xlane.xlu0 %1518
        %v1520 = vsel %vm1450, %v1498, 0.0
        %1521 = vadd.xlane.f32.xlu0 %v1520
        %v1522 = vpop.xlane.xlu0 %1521
        %v1523 = vrcp.pop %v1501
        %v1524 = vrcp.pop %v1504
        %v1525 = vrcp.pop %v1507
        %v1526 = vrcp.pop %v1510
        %v1527 = vrcp.pop %v1513
        %v1528 = vrcp.pop %v1516
        %v1529 = vrcp.pop %v1519
        %v1530 = vrcp.pop %v1522
        %v1531 = vmul.f32 %v1484, %v1523
        %v1532 = vmul.f32 %v1486, %v1524
        %v1533 = vmul.f32 %v1488, %v1525
        %v1534 = vmul.f32 %v1490, %v1526
        %v1535 = vmul.f32 %v1492, %v1527
        %v1536 = vmul.f32 %v1494, %v1528
        %v1537 = vmul.f32 %v1496, %v1529
        %v1538 = vmul.f32 %v1498, %v1530
        %v1539 = vpack.c.bf16 %v1531, %v1531
        %v1540 = vpack.c.bf16 %v1532, %v1532
        %v1541 = vpack.c.bf16 %v1533, %v1533
        %v1542 = vpack.c.bf16 %v1534, %v1534
        %v1543 = vpack.c.bf16 %v1535, %v1535
        %v1544 = vpack.c.bf16 %v1536, %v1536
        %v1545 = vpack.c.bf16 %v1537, %v1537
        %v1546 = vpack.c.bf16 %v1538, %v1538
        %1547 = vrot.lane.b32.xlu0 %v1049, 120
        %v1548 = vpop.permute.xlu0 %1547
        %v1550 = vsel %vm1450, %v1539, 0
        %vm1552 = vcmask 1043456
        %v1554 = vsel %vm1552, %v1548, 0
        %1556 = vmatprep.subr.bf16.mxu0 0
        %1557 = vmatpush1.bf16.msra.mxu0 %v1554
        %1558 = vmatprep.subr.bf16.mxu0 0
        %1559 = vmatpush1.bf16.msra.mxu0 0
        %1560 = vmatprep.subr.bf16.mxu0 0
        %1561 = vmatpush1.bf16.msra.mxu0 0
        %1562 = vmatprep.subr.bf16.mxu0 0
        %1563 = vmatpush1.bf16.msra.mxu0 0
        %1564 = vmatprep.subr.bf16.mxu0 0
        %1565 = vmatpush1.bf16.msra.mxu0 0
        %1566 = vmatprep.subr.bf16.mxu0 0
        %1567 = vmatpush1.bf16.msra.mxu0 0
        %1568 = vmatprep.subr.bf16.mxu0 0
        %1569 = vmatpush1.bf16.msra.mxu0 0
        %1570 = vmatprep.subr.bf16.mxu0 0
        %1571 = vmatpush1.bf16.msra.mxu0 0
        %1572 = vmatprep.subr.bf16.mxu0 0
        %1573 = vmatpush1.bf16.msra.mxu0 0
        %1574 = vmatprep.subr.bf16.mxu0 0
        %1575 = vmatpush1.bf16.msra.mxu0 0
        %1576 = vmatprep.subr.bf16.mxu0 0
        %1577 = vmatpush1.bf16.msra.mxu0 0
        %1578 = vmatprep.subr.bf16.mxu0 0
        %1579 = vmatpush1.bf16.msra.mxu0 0
        %1580 = vmatprep.subr.bf16.mxu0 0
        %1581 = vmatpush1.bf16.msra.mxu0 0
        %1582 = vmatprep.subr.bf16.mxu0 0
        %1583 = vmatpush1.bf16.msra.mxu0 0
        %1584 = vmatprep.subr.bf16.mxu0 0
        %1585 = vmatpush1.bf16.msra.mxu0 0
        %1586 = vmatprep.subr.bf16.mxu0 0
        %1587 = vmatpush1.bf16.msra.mxu0 0
        %1588 = vmatprep.mubr.bf16.mxu0 0
        %1589 = vmatmul.mubr.bf16.gmra.mrb[0].mxu0 %v1550
        %v1590 = vpop.f32.mrb[0].mxu0
        %v1591 = vadd.f32 0.0, %v1590
        %v1592 = vpop.f32.mrb[0].mxu0
        %v1593 = vpop.f32.mrb[0].mxu0
        %v1594 = vpop.f32.mrb[0].mxu0
        %1595 = vdwg.mxu0
        %1596 = vrot.lane.b32.xlu0 %v1050, 120
        %v1597 = vpop.permute.xlu0 %1596
        %v1599 = vsel %vm1450, %v1540, 0
        %v1602 = vsel %vm1552, %v1597, 0
        %1604 = vmatprep.subr.bf16.mxu0 0
        %1605 = vmatpush1.bf16.msra.mxu0 %v1602
        %1606 = vmatprep.subr.bf16.mxu0 0
        %1607 = vmatpush1.bf16.msra.mxu0 0
        %1608 = vmatprep.subr.bf16.mxu0 0
        %1609 = vmatpush1.bf16.msra.mxu0 0
        %1610 = vmatprep.subr.bf16.mxu0 0
        %1611 = vmatpush1.bf16.msra.mxu0 0
        %1612 = vmatprep.subr.bf16.mxu0 0
        %1613 = vmatpush1.bf16.msra.mxu0 0
        %1614 = vmatprep.subr.bf16.mxu0 0
        %1615 = vmatpush1.bf16.msra.mxu0 0
        %1616 = vmatprep.subr.bf16.mxu0 0
        %1617 = vmatpush1.bf16.msra.mxu0 0
        %1618 = vmatprep.subr.bf16.mxu0 0
        %1619 = vmatpush1.bf16.msra.mxu0 0
        %1620 = vmatprep.subr.bf16.mxu0 0
        %1621 = vmatpush1.bf16.msra.mxu0 0
        %1622 = vmatprep.subr.bf16.mxu0 0
        %1623 = vmatpush1.bf16.msra.mxu0 0
        %1624 = vmatprep.subr.bf16.mxu0 0
        %1625 = vmatpush1.bf16.msra.mxu0 0
        %1626 = vmatprep.subr.bf16.mxu0 0
        %1627 = vmatpush1.bf16.msra.mxu0 0
        %1628 = vmatprep.subr.bf16.mxu0 0
        %1629 = vmatpush1.bf16.msra.mxu0 0
        %1630 = vmatprep.subr.bf16.mxu0 0
        %1631 = vmatpush1.bf16.msra.mxu0 0
        %1632 = vmatprep.subr.bf16.mxu0 0
        %1633 = vmatpush1.bf16.msra.mxu0 0
        %1634 = vmatprep.subr.bf16.mxu0 0
        %1635 = vmatpush1.bf16.msra.mxu0 0
        %1636 = vmatprep.mubr.bf16.mxu0 0
        %1637 = vmatmul.mubr.bf16.gmra.mrb[0].mxu0 %v1599
        %v1638 = vpop.f32.mrb[0].mxu0
        %v1639 = vadd.f32 0.0, %v1638
        %v1640 = vpop.f32.mrb[0].mxu0
        %v1641 = vpop.f32.mrb[0].mxu0
        %v1642 = vpop.f32.mrb[0].mxu0
        %1643 = vdwg.mxu0
        %1644 = vrot.lane.b32.xlu0 %v1051, 120
        %v1645 = vpop.permute.xlu0 %1644
        %v1647 = vsel %vm1450, %v1541, 0
        %v1650 = vsel %vm1552, %v1645, 0
        %1652 = vmatprep.subr.bf16.mxu0 0
        %1653 = vmatpush1.bf16.msra.mxu0 %v1650
        %1654 = vmatprep.subr.bf16.mxu0 0
        %1655 = vmatpush1.bf16.msra.mxu0 0
        %1656 = vmatprep.subr.bf16.mxu0 0
        %1657 = vmatpush1.bf16.msra.mxu0 0
        %1658 = vmatprep.subr.bf16.mxu0 0
        %1659 = vmatpush1.bf16.msra.mxu0 0
        %1660 = vmatprep.subr.bf16.mxu0 0
        %1661 = vmatpush1.bf16.msra.mxu0 0
        %1662 = vmatprep.subr.bf16.mxu0 0
        %1663 = vmatpush1.bf16.msra.mxu0 0
        %1664 = vmatprep.subr.bf16.mxu0 0
        %1665 = vmatpush1.bf16.msra.mxu0 0
        %1666 = vmatprep.subr.bf16.mxu0 0
        %1667 = vmatpush1.bf16.msra.mxu0 0
        %1668 = vmatprep.subr.bf16.mxu0 0
        %1669 = vmatpush1.bf16.msra.mxu0 0
        %1670 = vmatprep.subr.bf16.mxu0 0
        %1671 = vmatpush1.bf16.msra.mxu0 0
        %1672 = vmatprep.subr.bf16.mxu0 0
        %1673 = vmatpush1.bf16.msra.mxu0 0
        %1674 = vmatprep.subr.bf16.mxu0 0
        %1675 = vmatpush1.bf16.msra.mxu0 0
        %1676 = vmatprep.subr.bf16.mxu0 0
        %1677 = vmatpush1.bf16.msra.mxu0 0
        %1678 = vmatprep.subr.bf16.mxu0 0
        %1679 = vmatpush1.bf16.msra.mxu0 0
        %1680 = vmatprep.subr.bf16.mxu0 0
        %1681 = vmatpush1.bf16.msra.mxu0 0
        %1682 = vmatprep.subr.bf16.mxu0 0
        %1683 = vmatpush1.bf16.msra.mxu0 0
        %1684 = vmatprep.mubr.bf16.mxu0 0
        %1685 = vmatmul.mubr.bf16.gmra.mrb[0].mxu0 %v1647
        %v1686 = vpop.f32.mrb[0].mxu0
        %v1687 = vadd.f32 0.0, %v1686
        %v1688 = vpop.f32.mrb[0].mxu0
        %v1689 = vpop.f32.mrb[0].mxu0
        %v1690 = vpop.f32.mrb[0].mxu0
        %1691 = vdwg.mxu0
        %1692 = vrot.lane.b32.xlu0 %v1052, 120
        %v1693 = vpop.permute.xlu0 %1692
        %v1695 = vsel %vm1450, %v1542, 0
        %v1698 = vsel %vm1552, %v1693, 0
        %1700 = vmatprep.subr.bf16.mxu0 0
        %1701 = vmatpush1.bf16.msra.mxu0 %v1698
        %1702 = vmatprep.subr.bf16.mxu0 0
        %1703 = vmatpush1.bf16.msra.mxu0 0
        %1704 = vmatprep.subr.bf16.mxu0 0
        %1705 = vmatpush1.bf16.msra.mxu0 0
        %1706 = vmatprep.subr.bf16.mxu0 0
        %1707 = vmatpush1.bf16.msra.mxu0 0
        %1708 = vmatprep.subr.bf16.mxu0 0
        %1709 = vmatpush1.bf16.msra.mxu0 0
        %1710 = vmatprep.subr.bf16.mxu0 0
        %1711 = vmatpush1.bf16.msra.mxu0 0
        %1712 = vmatprep.subr.bf16.mxu0 0
        %1713 = vmatpush1.bf16.msra.mxu0 0
        %1714 = vmatprep.subr.bf16.mxu0 0
        %1715 = vmatpush1.bf16.msra.mxu0 0
        %1716 = vmatprep.subr.bf16.mxu0 0
        %1717 = vmatpush1.bf16.msra.mxu0 0
        %1718 = vmatprep.subr.bf16.mxu0 0
        %1719 = vmatpush1.bf16.msra.mxu0 0
        %1720 = vmatprep.subr.bf16.mxu0 0
        %1721 = vmatpush1.bf16.msra.mxu0 0
        %1722 = vmatprep.subr.bf16.mxu0 0
        %1723 = vmatpush1.bf16.msra.mxu0 0
        %1724 = vmatprep.subr.bf16.mxu0 0
        %1725 = vmatpush1.bf16.msra.mxu0 0
        %1726 = vmatprep.subr.bf16.mxu0 0
        %1727 = vmatpush1.bf16.msra.mxu0 0
        %1728 = vmatprep.subr.bf16.mxu0 0
        %1729 = vmatpush1.bf16.msra.mxu0 0
        %1730 = vmatprep.subr.bf16.mxu0 0
        %1731 = vmatpush1.bf16.msra.mxu0 0
        %1732 = vmatprep.mubr.bf16.mxu0 0
        %1733 = vmatmul.mubr.bf16.gmra.mrb[0].mxu0 %v1695
        %v1734 = vpop.f32.mrb[0].mxu0
        %v1735 = vadd.f32 0.0, %v1734
        %v1736 = vpop.f32.mrb[0].mxu0
        %v1737 = vpop.f32.mrb[0].mxu0
        %v1738 = vpop.f32.mrb[0].mxu0
        %1739 = vdwg.mxu0
        %1740 = vrot.lane.b32.xlu0 %v1053, 120
        %v1741 = vpop.permute.xlu0 %1740
        %v1743 = vsel %vm1450, %v1543, 0
        %v1746 = vsel %vm1552, %v1741, 0
        %1748 = vmatprep.subr.bf16.mxu0 0
        %1749 = vmatpush1.bf16.msra.mxu0 %v1746
        %1750 = vmatprep.subr.bf16.mxu0 0
        %1751 = vmatpush1.bf16.msra.mxu0 0
        %1752 = vmatprep.subr.bf16.mxu0 0
        %1753 = vmatpush1.bf16.msra.mxu0 0
        %1754 = vmatprep.subr.bf16.mxu0 0
        %1755 = vmatpush1.bf16.msra.mxu0 0
        %1756 = vmatprep.subr.bf16.mxu0 0
        %1757 = vmatpush1.bf16.msra.mxu0 0
        %1758 = vmatprep.subr.bf16.mxu0 0
        %1759 = vmatpush1.bf16.msra.mxu0 0
        %1760 = vmatprep.subr.bf16.mxu0 0
        %1761 = vmatpush1.bf16.msra.mxu0 0
        %1762 = vmatprep.subr.bf16.mxu0 0
        %1763 = vmatpush1.bf16.msra.mxu0 0
        %1764 = vmatprep.subr.bf16.mxu0 0
        %1765 = vmatpush1.bf16.msra.mxu0 0
        %1766 = vmatprep.subr.bf16.mxu0 0
        %1767 = vmatpush1.bf16.msra.mxu0 0
        %1768 = vmatprep.subr.bf16.mxu0 0
        %1769 = vmatpush1.bf16.msra.mxu0 0
        %1770 = vmatprep.subr.bf16.mxu0 0
        %1771 = vmatpush1.bf16.msra.mxu0 0
        %1772 = vmatprep.subr.bf16.mxu0 0
        %1773 = vmatpush1.bf16.msra.mxu0 0
        %1774 = vmatprep.subr.bf16.mxu0 0
        %1775 = vmatpush1.bf16.msra.mxu0 0
        %1776 = vmatprep.subr.bf16.mxu0 0
        %1777 = vmatpush1.bf16.msra.mxu0 0
        %1778 = vmatprep.subr.bf16.mxu0 0
        %1779 = vmatpush1.bf16.msra.mxu0 0
        %1780 = vmatprep.mubr.bf16.mxu0 0
        %1781 = vmatmul.mubr.bf16.gmra.mrb[0].mxu0 %v1743
        %v1782 = vpop.f32.mrb[0].mxu0
        %v1783 = vadd.f32 0.0, %v1782
        %v1784 = vpop.f32.mrb[0].mxu0
        %v1785 = vpop.f32.mrb[0].mxu0
        %v1786 = vpop.f32.mrb[0].mxu0
        %1787 = vdwg.mxu0
        %1788 = vrot.lane.b32.xlu0 %v1054, 120
        %v1789 = vpop.permute.xlu0 %1788
        %v1791 = vsel %vm1450, %v1544, 0
        %v1794 = vsel %vm1552, %v1789, 0
        %1796 = vmatprep.subr.bf16.mxu0 0
        %1797 = vmatpush1.bf16.msra.mxu0 %v1794
        %1798 = vmatprep.subr.bf16.mxu0 0
        %1799 = vmatpush1.bf16.msra.mxu0 0
        %1800 = vmatprep.subr.bf16.mxu0 0
        %1801 = vmatpush1.bf16.msra.mxu0 0
        %1802 = vmatprep.subr.bf16.mxu0 0
        %1803 = vmatpush1.bf16.msra.mxu0 0
        %1804 = vmatprep.subr.bf16.mxu0 0
        %1805 = vmatpush1.bf16.msra.mxu0 0
        %1806 = vmatprep.subr.bf16.mxu0 0
        %1807 = vmatpush1.bf16.msra.mxu0 0
        %1808 = vmatprep.subr.bf16.mxu0 0
        %1809 = vmatpush1.bf16.msra.mxu0 0
        %1810 = vmatprep.subr.bf16.mxu0 0
        %1811 = vmatpush1.bf16.msra.mxu0 0
        %1812 = vmatprep.subr.bf16.mxu0 0
        %1813 = vmatpush1.bf16.msra.mxu0 0
        %1814 = vmatprep.subr.bf16.mxu0 0
        %1815 = vmatpush1.bf16.msra.mxu0 0
        %1816 = vmatprep.subr.bf16.mxu0 0
        %1817 = vmatpush1.bf16.msra.mxu0 0
        %1818 = vmatprep.subr.bf16.mxu0 0
        %1819 = vmatpush1.bf16.msra.mxu0 0
        %1820 = vmatprep.subr.bf16.mxu0 0
        %1821 = vmatpush1.bf16.msra.mxu0 0
        %1822 = vmatprep.subr.bf16.mxu0 0
        %1823 = vmatpush1.bf16.msra.mxu0 0
        %1824 = vmatprep.subr.bf16.mxu0 0
        %1825 = vmatpush1.bf16.msra.mxu0 0
        %1826 = vmatprep.subr.bf16.mxu0 0
        %1827 = vmatpush1.bf16.msra.mxu0 0
        %1828 = vmatprep.mubr.bf16.mxu0 0
        %1829 = vmatmul.mubr.bf16.gmra.mrb[0].mxu0 %v1791
        %v1830 = vpop.f32.mrb[0].mxu0
        %v1831 = vadd.f32 0.0, %v1830
        %v1832 = vpop.f32.mrb[0].mxu0
        %v1833 = vpop.f32.mrb[0].mxu0
        %v1834 = vpop.f32.mrb[0].mxu0
        %1835 = vdwg.mxu0
        %1836 = vrot.lane.b32.xlu0 %v1055, 120
        %v1837 = vpop.permute.xlu0 %1836
        %v1839 = vsel %vm1450, %v1545, 0
        %v1842 = vsel %vm1552, %v1837, 0
        %1844 = vmatprep.subr.bf16.mxu0 0
        %1845 = vmatpush1.bf16.msra.mxu0 %v1842
        %1846 = vmatprep.subr.bf16.mxu0 0
        %1847 = vmatpush1.bf16.msra.mxu0 0
        %1848 = vmatprep.subr.bf16.mxu0 0
        %1849 = vmatpush1.bf16.msra.mxu0 0
        %1850 = vmatprep.subr.bf16.mxu0 0
        %1851 = vmatpush1.bf16.msra.mxu0 0
        %1852 = vmatprep.subr.bf16.mxu0 0
        %1853 = vmatpush1.bf16.msra.mxu0 0
        %1854 = vmatprep.subr.bf16.mxu0 0
        %1855 = vmatpush1.bf16.msra.mxu0 0
        %1856 = vmatprep.subr.bf16.mxu0 0
        %1857 = vmatpush1.bf16.msra.mxu0 0
        %1858 = vmatprep.subr.bf16.mxu0 0
        %1859 = vmatpush1.bf16.msra.mxu0 0
        %1860 = vmatprep.subr.bf16.mxu0 0
        %1861 = vmatpush1.bf16.msra.mxu0 0
        %1862 = vmatprep.subr.bf16.mxu0 0
        %1863 = vmatpush1.bf16.msra.mxu0 0
        %1864 = vmatprep.subr.bf16.mxu0 0
        %1865 = vmatpush1.bf16.msra.mxu0 0
        %1866 = vmatprep.subr.bf16.mxu0 0
        %1867 = vmatpush1.bf16.msra.mxu0 0
        %1868 = vmatprep.subr.bf16.mxu0 0
        %1869 = vmatpush1.bf16.msra.mxu0 0
        %1870 = vmatprep.subr.bf16.mxu0 0
        %1871 = vmatpush1.bf16.msra.mxu0 0
        %1872 = vmatprep.subr.bf16.mxu0 0
        %1873 = vmatpush1.bf16.msra.mxu0 0
        %1874 = vmatprep.subr.bf16.mxu0 0
        %1875 = vmatpush1.bf16.msra.mxu0 0
        %1876 = vmatprep.mubr.bf16.mxu0 0
        %1877 = vmatmul.mubr.bf16.gmra.mrb[0].mxu0 %v1839
        %v1878 = vpop.f32.mrb[0].mxu0
        %v1879 = vadd.f32 0.0, %v1878
        %v1880 = vpop.f32.mrb[0].mxu0
        %v1881 = vpop.f32.mrb[0].mxu0
        %v1882 = vpop.f32.mrb[0].mxu0
        %1883 = vdwg.mxu0
        %1884 = vrot.lane.b32.xlu0 %v1056, 120
        %v1885 = vpop.permute.xlu0 %1884
        %v1887 = vsel %vm1450, %v1546, 0
        %v1890 = vsel %vm1552, %v1885, 0
        %1892 = vmatprep.subr.bf16.mxu0 0
        %1893 = vmatpush1.bf16.msra.mxu0 %v1890
        %1894 = vmatprep.subr.bf16.mxu0 0
        %1895 = vmatpush1.bf16.msra.mxu0 0
        %1896 = vmatprep.subr.bf16.mxu0 0
        %1897 = vmatpush1.bf16.msra.mxu0 0
        %1898 = vmatprep.subr.bf16.mxu0 0
        %1899 = vmatpush1.bf16.msra.mxu0 0
        %1900 = vmatprep.subr.bf16.mxu0 0
        %1901 = vmatpush1.bf16.msra.mxu0 0
        %1902 = vmatprep.subr.bf16.mxu0 0
        %1903 = vmatpush1.bf16.msra.mxu0 0
        %1904 = vmatprep.subr.bf16.mxu0 0
        %1905 = vmatpush1.bf16.msra.mxu0 0
        %1906 = vmatprep.subr.bf16.mxu0 0
        %1907 = vmatpush1.bf16.msra.mxu0 0
        %1908 = vmatprep.subr.bf16.mxu0 0
        %1909 = vmatpush1.bf16.msra.mxu0 0
        %1910 = vmatprep.subr.bf16.mxu0 0
        %1911 = vmatpush1.bf16.msra.mxu0 0
        %1912 = vmatprep.subr.bf16.mxu0 0
        %1913 = vmatpush1.bf16.msra.mxu0 0
        %1914 = vmatprep.subr.bf16.mxu0 0
        %1915 = vmatpush1.bf16.msra.mxu0 0
        %1916 = vmatprep.subr.bf16.mxu0 0
        %1917 = vmatpush1.bf16.msra.mxu0 0
        %1918 = vmatprep.subr.bf16.mxu0 0
        %1919 = vmatpush1.bf16.msra.mxu0 0
        %1920 = vmatprep.subr.bf16.mxu0 0
        %1921 = vmatpush1.bf16.msra.mxu0 0
        %1922 = vmatprep.subr.bf16.mxu0 0
        %1923 = vmatpush1.bf16.msra.mxu0 0
        %1924 = vmatprep.mubr.bf16.mxu0 0
        %1925 = vmatmul.mubr.bf16.gmra.mrb[0].mxu0 %v1887
        %v1926 = vpop.f32.mrb[0].mxu0
        %v1927 = vadd.f32 0.0, %v1926
        %v1928 = vpop.f32.mrb[0].mxu0
        %v1929 = vpop.f32.mrb[0].mxu0
        %v1930 = vpop.f32.mrb[0].mxu0
        %1931 = vdwg.mxu0
        %v1932 = vpack.c.bf16 %v1591, %v1591
        %v1933 = vpack.c.bf16 %v1639, %v1639
        %v1934 = vpack.c.bf16 %v1687, %v1687
        %v1935 = vpack.c.bf16 %v1735, %v1735
        %v1936 = vpack.c.bf16 %v1783, %v1783
        %v1937 = vpack.c.bf16 %v1831, %v1831
        %v1938 = vpack.c.bf16 %v1879, %v1879
        %v1939 = vpack.c.bf16 %v1927, %v1927
        %v1940 = vld [vmem:[%s4] sm:$0x3]
        %v1941 = vld [vmem:[%s4 + $0x2] sm:$0x3]
        %v1942 = vld [vmem:[%s4 + $0x4] sm:$0x3]
        %v1943 = vld [vmem:[%s4 + $0x6] sm:$0x3]
        %v1944 = vld [vmem:[%s4 + $0x8] sm:$0x3]
        %v1945 = vld [vmem:[%s4 + $0xa] sm:$0x3]
        %v1946 = vld [vmem:[%s4 + $0xc] sm:$0x3]
        %v1947 = vld [vmem:[%s4 + $0xe] sm:$0x3]
        %v1949 = vsel %vm1060, %v1932, 0
        %vm1951 = vcmask 1041408
        %v1953 = vsel %vm1951, %v1940, 0
        %1955 = vmatprep.subr.bf16.mxu0 0
        %1956 = vmatpush1.bf16.msra.mxu0 %v1953
        %1957 = vmatprep.subr.bf16.mxu0 0
        %1958 = vmatpush1.bf16.msra.mxu0 0
        %1959 = vmatprep.subr.bf16.mxu0 0
        %1960 = vmatpush1.bf16.msra.mxu0 0
        %1961 = vmatprep.subr.bf16.mxu0 0
        %1962 = vmatpush1.bf16.msra.mxu0 0
        %1963 = vmatprep.subr.bf16.mxu0 0
        %1964 = vmatpush1.bf16.msra.mxu0 0
        %1965 = vmatprep.subr.bf16.mxu0 0
        %1966 = vmatpush1.bf16.msra.mxu0 0
        %1967 = vmatprep.subr.bf16.mxu0 0
        %1968 = vmatpush1.bf16.msra.mxu0 0
        %1969 = vmatprep.subr.bf16.mxu0 0
        %1970 = vmatpush1.bf16.msra.mxu0 0
        %1971 = vmatprep.subr.bf16.mxu0 0
        %1972 = vmatpush1.bf16.msra.mxu0 0
        %1973 = vmatprep.subr.bf16.mxu0 0
        %1974 = vmatpush1.bf16.msra.mxu0 0
        %1975 = vmatprep.subr.bf16.mxu0 0
        %1976 = vmatpush1.bf16.msra.mxu0 0
        %1977 = vmatprep.subr.bf16.mxu0 0
        %1978 = vmatpush1.bf16.msra.mxu0 0
        %1979 = vmatprep.subr.bf16.mxu0 0
        %1980 = vmatpush1.bf16.msra.mxu0 0
        %1981 = vmatprep.subr.bf16.mxu0 0
        %1982 = vmatpush1.bf16.msra.mxu0 0
        %1983 = vmatprep.subr.bf16.mxu0 0
        %1984 = vmatpush1.bf16.msra.mxu0 0
        %1985 = vmatprep.subr.bf16.mxu0 0
        %1986 = vmatpush1.bf16.msra.mxu0 0
        %1987 = vmatprep.mubr.bf16.mxu0 0
        %1988 = vmatmul.mubr.bf16.gmra.mrb[0].mxu0 %v1949
        %v1989 = vpop.f32.mrb[0].mxu0
        %v1990 = vadd.f32 0.0, %v1989
        %v1991 = vpop.f32.mrb[0].mxu0
        %v1992 = vpop.f32.mrb[0].mxu0
        %v1993 = vpop.f32.mrb[0].mxu0
        %1994 = vdwg.mxu0
        %v1996 = vsel %vm1060, %v1933, 0
        %v1999 = vsel %vm1951, %v1941, 0
        %2001 = vmatprep.subr.bf16.mxu0 0
        %2002 = vmatpush1.bf16.msra.mxu0 %v1999
        %2003 = vmatprep.subr.bf16.mxu0 0
        %2004 = vmatpush1.bf16.msra.mxu0 0
        %2005 = vmatprep.subr.bf16.mxu0 0
        %2006 = vmatpush1.bf16.msra.mxu0 0
        %2007 = vmatprep.subr.bf16.mxu0 0
        %2008 = vmatpush1.bf16.msra.mxu0 0
        %2009 = vmatprep.subr.bf16.mxu0 0
        %2010 = vmatpush1.bf16.msra.mxu0 0
        %2011 = vmatprep.subr.bf16.mxu0 0
        %2012 = vmatpush1.bf16.msra.mxu0 0
        %2013 = vmatprep.subr.bf16.mxu0 0
        %2014 = vmatpush1.bf16.msra.mxu0 0
        %2015 = vmatprep.subr.bf16.mxu0 0
        %2016 = vmatpush1.bf16.msra.mxu0 0
        %2017 = vmatprep.subr.bf16.mxu0 0
        %2018 = vmatpush1.bf16.msra.mxu0 0
        %2019 = vmatprep.subr.bf16.mxu0 0
        %2020 = vmatpush1.bf16.msra.mxu0 0
        %2021 = vmatprep.subr.bf16.mxu0 0
        %2022 = vmatpush1.bf16.msra.mxu0 0
        %2023 = vmatprep.subr.bf16.mxu0 0
        %2024 = vmatpush1.bf16.msra.mxu0 0
        %2025 = vmatprep.subr.bf16.mxu0 0
        %2026 = vmatpush1.bf16.msra.mxu0 0
        %2027 = vmatprep.subr.bf16.mxu0 0
        %2028 = vmatpush1.bf16.msra.mxu0 0
        %2029 = vmatprep.subr.bf16.mxu0 0
        %2030 = vmatpush1.bf16.msra.mxu0 0
        %2031 = vmatprep.subr.bf16.mxu0 0
        %2032 = vmatpush1.bf16.msra.mxu0 0
        %2033 = vmatprep.mubr.bf16.mxu0 0
        %2034 = vmatmul.mubr.bf16.gmra.mrb[0].mxu0 %v1996
        %v2035 = vpop.f32.mrb[0].mxu0
        %v2036 = vadd.f32 0.0, %v2035
        %v2037 = vpop.f32.mrb[0].mxu0
        %v2038 = vpop.f32.mrb[0].mxu0
        %v2039 = vpop.f32.mrb[0].mxu0
        %2040 = vdwg.mxu0
        %v2042 = vsel %vm1060, %v1934, 0
        %v2045 = vsel %vm1951, %v1942, 0
        %2047 = vmatprep.subr.bf16.mxu0 0
        %2048 = vmatpush1.bf16.msra.mxu0 %v2045
        %2049 = vmatprep.subr.bf16.mxu0 0
        %2050 = vmatpush1.bf16.msra.mxu0 0
        %2051 = vmatprep.subr.bf16.mxu0 0
        %2052 = vmatpush1.bf16.msra.mxu0 0
        %2053 = vmatprep.subr.bf16.mxu0 0
        %2054 = vmatpush1.bf16.msra.mxu0 0
        %2055 = vmatprep.subr.bf16.mxu0 0
        %2056 = vmatpush1.bf16.msra.mxu0 0
        %2057 = vmatprep.subr.bf16.mxu0 0
        %2058 = vmatpush1.bf16.msra.mxu0 0
        %2059 = vmatprep.subr.bf16.mxu0 0
        %2060 = vmatpush1.bf16.msra.mxu0 0
        %2061 = vmatprep.subr.bf16.mxu0 0
        %2062 = vmatpush1.bf16.msra.mxu0 0
        %2063 = vmatprep.subr.bf16.mxu0 0
        %2064 = vmatpush1.bf16.msra.mxu0 0
        %2065 = vmatprep.subr.bf16.mxu0 0
        %2066 = vmatpush1.bf16.msra.mxu0 0
        %2067 = vmatprep.subr.bf16.mxu0 0
        %2068 = vmatpush1.bf16.msra.mxu0 0
        %2069 = vmatprep.subr.bf16.mxu0 0
        %2070 = vmatpush1.bf16.msra.mxu0 0
        %2071 = vmatprep.subr.bf16.mxu0 0
        %2072 = vmatpush1.bf16.msra.mxu0 0
        %2073 = vmatprep.subr.bf16.mxu0 0
        %2074 = vmatpush1.bf16.msra.mxu0 0
        %2075 = vmatprep.subr.bf16.mxu0 0
        %2076 = vmatpush1.bf16.msra.mxu0 0
        %2077 = vmatprep.subr.bf16.mxu0 0
        %2078 = vmatpush1.bf16.msra.mxu0 0
        %2079 = vmatprep.mubr.bf16.mxu0 0
        %2080 = vmatmul.mubr.bf16.gmra.mrb[0].mxu0 %v2042
        %v2081 = vpop.f32.mrb[0].mxu0
        %v2082 = vadd.f32 0.0, %v2081
        %v2083 = vpop.f32.mrb[0].mxu0
        %v2084 = vpop.f32.mrb[0].mxu0
        %v2085 = vpop.f32.mrb[0].mxu0
        %2086 = vdwg.mxu0
        %v2088 = vsel %vm1060, %v1935, 0
        %v2091 = vsel %vm1951, %v1943, 0
        %2093 = vmatprep.subr.bf16.mxu0 0
        %2094 = vmatpush1.bf16.msra.mxu0 %v2091
        %2095 = vmatprep.subr.bf16.mxu0 0
        %2096 = vmatpush1.bf16.msra.mxu0 0
        %2097 = vmatprep.subr.bf16.mxu0 0
        %2098 = vmatpush1.bf16.msra.mxu0 0
        %2099 = vmatprep.subr.bf16.mxu0 0
        %2100 = vmatpush1.bf16.msra.mxu0 0
        %2101 = vmatprep.subr.bf16.mxu0 0
        %2102 = vmatpush1.bf16.msra.mxu0 0
        %2103 = vmatprep.subr.bf16.mxu0 0
        %2104 = vmatpush1.bf16.msra.mxu0 0
        %2105 = vmatprep.subr.bf16.mxu0 0
        %2106 = vmatpush1.bf16.msra.mxu0 0
        %2107 = vmatprep.subr.bf16.mxu0 0
        %2108 = vmatpush1.bf16.msra.mxu0 0
        %2109 = vmatprep.subr.bf16.mxu0 0
        %2110 = vmatpush1.bf16.msra.mxu0 0
        %2111 = vmatprep.subr.bf16.mxu0 0
        %2112 = vmatpush1.bf16.msra.mxu0 0
        %2113 = vmatprep.subr.bf16.mxu0 0
        %2114 = vmatpush1.bf16.msra.mxu0 0
        %2115 = vmatprep.subr.bf16.mxu0 0
        %2116 = vmatpush1.bf16.msra.mxu0 0
        %2117 = vmatprep.subr.bf16.mxu0 0
        %2118 = vmatpush1.bf16.msra.mxu0 0
        %2119 = vmatprep.subr.bf16.mxu0 0
        %2120 = vmatpush1.bf16.msra.mxu0 0
        %2121 = vmatprep.subr.bf16.mxu0 0
        %2122 = vmatpush1.bf16.msra.mxu0 0
        %2123 = vmatprep.subr.bf16.mxu0 0
        %2124 = vmatpush1.bf16.msra.mxu0 0
        %2125 = vmatprep.mubr.bf16.mxu0 0
        %2126 = vmatmul.mubr.bf16.gmra.mrb[0].mxu0 %v2088
        %v2127 = vpop.f32.mrb[0].mxu0
        %v2128 = vadd.f32 0.0, %v2127
        %v2129 = vpop.f32.mrb[0].mxu0
        %v2130 = vpop.f32.mrb[0].mxu0
        %v2131 = vpop.f32.mrb[0].mxu0
        %2132 = vdwg.mxu0
        %v2134 = vsel %vm1060, %v1936, 0
        %v2137 = vsel %vm1951, %v1944, 0
        %2139 = vmatprep.subr.bf16.mxu0 0
        %2140 = vmatpush1.bf16.msra.mxu0 %v2137
        %2141 = vmatprep.subr.bf16.mxu0 0
        %2142 = vmatpush1.bf16.msra.mxu0 0
        %2143 = vmatprep.subr.bf16.mxu0 0
        %2144 = vmatpush1.bf16.msra.mxu0 0
        %2145 = vmatprep.subr.bf16.mxu0 0
        %2146 = vmatpush1.bf16.msra.mxu0 0
        %2147 = vmatprep.subr.bf16.mxu0 0
        %2148 = vmatpush1.bf16.msra.mxu0 0
        %2149 = vmatprep.subr.bf16.mxu0 0
        %2150 = vmatpush1.bf16.msra.mxu0 0
        %2151 = vmatprep.subr.bf16.mxu0 0
        %2152 = vmatpush1.bf16.msra.mxu0 0
        %2153 = vmatprep.subr.bf16.mxu0 0
        %2154 = vmatpush1.bf16.msra.mxu0 0
        %2155 = vmatprep.subr.bf16.mxu0 0
        %2156 = vmatpush1.bf16.msra.mxu0 0
        %2157 = vmatprep.subr.bf16.mxu0 0
        %2158 = vmatpush1.bf16.msra.mxu0 0
        %2159 = vmatprep.subr.bf16.mxu0 0
        %2160 = vmatpush1.bf16.msra.mxu0 0
        %2161 = vmatprep.subr.bf16.mxu0 0
        %2162 = vmatpush1.bf16.msra.mxu0 0
        %2163 = vmatprep.subr.bf16.mxu0 0
        %2164 = vmatpush1.bf16.msra.mxu0 0
        %2165 = vmatprep.subr.bf16.mxu0 0
        %2166 = vmatpush1.bf16.msra.mxu0 0
        %2167 = vmatprep.subr.bf16.mxu0 0
        %2168 = vmatpush1.bf16.msra.mxu0 0
        %2169 = vmatprep.subr.bf16.mxu0 0
        %2170 = vmatpush1.bf16.msra.mxu0 0
        %2171 = vmatprep.mubr.bf16.mxu0 0
        %2172 = vmatmul.mubr.bf16.gmra.mrb[0].mxu0 %v2134
        %v2173 = vpop.f32.mrb[0].mxu0
        %v2174 = vadd.f32 0.0, %v2173
        %v2175 = vpop.f32.mrb[0].mxu0
        %v2176 = vpop.f32.mrb[0].mxu0
        %v2177 = vpop.f32.mrb[0].mxu0
        %2178 = vdwg.mxu0
        %v2180 = vsel %vm1060, %v1937, 0
        %v2183 = vsel %vm1951, %v1945, 0
        %2185 = vmatprep.subr.bf16.mxu0 0
        %2186 = vmatpush1.bf16.msra.mxu0 %v2183
        %2187 = vmatprep.subr.bf16.mxu0 0
        %2188 = vmatpush1.bf16.msra.mxu0 0
        %2189 = vmatprep.subr.bf16.mxu0 0
        %2190 = vmatpush1.bf16.msra.mxu0 0
        %2191 = vmatprep.subr.bf16.mxu0 0
        %2192 = vmatpush1.bf16.msra.mxu0 0
        %2193 = vmatprep.subr.bf16.mxu0 0
        %2194 = vmatpush1.bf16.msra.mxu0 0
        %2195 = vmatprep.subr.bf16.mxu0 0
        %2196 = vmatpush1.bf16.msra.mxu0 0
        %2197 = vmatprep.subr.bf16.mxu0 0
        %2198 = vmatpush1.bf16.msra.mxu0 0
        %2199 = vmatprep.subr.bf16.mxu0 0
        %2200 = vmatpush1.bf16.msra.mxu0 0
        %2201 = vmatprep.subr.bf16.mxu0 0
        %2202 = vmatpush1.bf16.msra.mxu0 0
        %2203 = vmatprep.subr.bf16.mxu0 0
        %2204 = vmatpush1.bf16.msra.mxu0 0
        %2205 = vmatprep.subr.bf16.mxu0 0
        %2206 = vmatpush1.bf16.msra.mxu0 0
        %2207 = vmatprep.subr.bf16.mxu0 0
        %2208 = vmatpush1.bf16.msra.mxu0 0
        %2209 = vmatprep.subr.bf16.mxu0 0
        %2210 = vmatpush1.bf16.msra.mxu0 0
        %2211 = vmatprep.subr.bf16.mxu0 0
        %2212 = vmatpush1.bf16.msra.mxu0 0
        %2213 = vmatprep.subr.bf16.mxu0 0
        %2214 = vmatpush1.bf16.msra.mxu0 0
        %2215 = vmatprep.subr.bf16.mxu0 0
        %2216 = vmatpush1.bf16.msra.mxu0 0
        %2217 = vmatprep.mubr.bf16.mxu0 0
        %2218 = vmatmul.mubr.bf16.gmra.mrb[0].mxu0 %v2180
        %v2219 = vpop.f32.mrb[0].mxu0
        %v2220 = vadd.f32 0.0, %v2219
        %v2221 = vpop.f32.mrb[0].mxu0
        %v2222 = vpop.f32.mrb[0].mxu0
        %v2223 = vpop.f32.mrb[0].mxu0
        %2224 = vdwg.mxu0
        %v2226 = vsel %vm1060, %v1938, 0
        %v2229 = vsel %vm1951, %v1946, 0
        %2231 = vmatprep.subr.bf16.mxu0 0
        %2232 = vmatpush1.bf16.msra.mxu0 %v2229
        %2233 = vmatprep.subr.bf16.mxu0 0
        %2234 = vmatpush1.bf16.msra.mxu0 0
        %2235 = vmatprep.subr.bf16.mxu0 0
        %2236 = vmatpush1.bf16.msra.mxu0 0
        %2237 = vmatprep.subr.bf16.mxu0 0
        %2238 = vmatpush1.bf16.msra.mxu0 0
        %2239 = vmatprep.subr.bf16.mxu0 0
        %2240 = vmatpush1.bf16.msra.mxu0 0
        %2241 = vmatprep.subr.bf16.mxu0 0
        %2242 = vmatpush1.bf16.msra.mxu0 0
        %2243 = vmatprep.subr.bf16.mxu0 0
        %2244 = vmatpush1.bf16.msra.mxu0 0
        %2245 = vmatprep.subr.bf16.mxu0 0
        %2246 = vmatpush1.bf16.msra.mxu0 0
        %2247 = vmatprep.subr.bf16.mxu0 0
        %2248 = vmatpush1.bf16.msra.mxu0 0
        %2249 = vmatprep.subr.bf16.mxu0 0
        %2250 = vmatpush1.bf16.msra.mxu0 0
        %2251 = vmatprep.subr.bf16.mxu0 0
        %2252 = vmatpush1.bf16.msra.mxu0 0
        %2253 = vmatprep.subr.bf16.mxu0 0
        %2254 = vmatpush1.bf16.msra.mxu0 0
        %2255 = vmatprep.subr.bf16.mxu0 0
        %2256 = vmatpush1.bf16.msra.mxu0 0
        %2257 = vmatprep.subr.bf16.mxu0 0
        %2258 = vmatpush1.bf16.msra.mxu0 0
        %2259 = vmatprep.subr.bf16.mxu0 0
        %2260 = vmatpush1.bf16.msra.mxu0 0
        %2261 = vmatprep.subr.bf16.mxu0 0
        %2262 = vmatpush1.bf16.msra.mxu0 0
        %2263 = vmatprep.mubr.bf16.mxu0 0
        %2264 = vmatmul.mubr.bf16.gmra.mrb[0].mxu0 %v2226
        %v2265 = vpop.f32.mrb[0].mxu0
        %v2266 = vadd.f32 0.0, %v2265
        %v2267 = vpop.f32.mrb[0].mxu0
        %v2268 = vpop.f32.mrb[0].mxu0
        %v2269 = vpop.f32.mrb[0].mxu0
        %2270 = vdwg.mxu0
        %v2272 = vsel %vm1060, %v1939, 0
        %v2275 = vsel %vm1951, %v1947, 0
        %2277 = vmatprep.subr.bf16.mxu0 0
        %2278 = vmatpush1.bf16.msra.mxu0 %v2275
        %2279 = vmatprep.subr.bf16.mxu0 0
        %2280 = vmatpush1.bf16.msra.mxu0 0
        %2281 = vmatprep.subr.bf16.mxu0 0
        %2282 = vmatpush1.bf16.msra.mxu0 0
        %2283 = vmatprep.subr.bf16.mxu0 0
        %2284 = vmatpush1.bf16.msra.mxu0 0
        %2285 = vmatprep.subr.bf16.mxu0 0
        %2286 = vmatpush1.bf16.msra.mxu0 0
        %2287 = vmatprep.subr.bf16.mxu0 0
        %2288 = vmatpush1.bf16.msra.mxu0 0
        %2289 = vmatprep.subr.bf16.mxu0 0
        %2290 = vmatpush1.bf16.msra.mxu0 0
        %2291 = vmatprep.subr.bf16.mxu0 0
        %2292 = vmatpush1.bf16.msra.mxu0 0
        %2293 = vmatprep.subr.bf16.mxu0 0
        %2294 = vmatpush1.bf16.msra.mxu0 0
        %2295 = vmatprep.subr.bf16.mxu0 0
        %2296 = vmatpush1.bf16.msra.mxu0 0
        %2297 = vmatprep.subr.bf16.mxu0 0
        %2298 = vmatpush1.bf16.msra.mxu0 0
        %2299 = vmatprep.subr.bf16.mxu0 0
        %2300 = vmatpush1.bf16.msra.mxu0 0
        %2301 = vmatprep.subr.bf16.mxu0 0
        %2302 = vmatpush1.bf16.msra.mxu0 0
        %2303 = vmatprep.subr.bf16.mxu0 0
        %2304 = vmatpush1.bf16.msra.mxu0 0
        %2305 = vmatprep.subr.bf16.mxu0 0
        %2306 = vmatpush1.bf16.msra.mxu0 0
        %2307 = vmatprep.subr.bf16.mxu0 0
        %2308 = vmatpush1.bf16.msra.mxu0 0
        %2309 = vmatprep.mubr.bf16.mxu0 0
        %2310 = vmatmul.mubr.bf16.gmra.mrb[0].mxu0 %v2272
        %v2311 = vpop.f32.mrb[0].mxu0
        %v2312 = vadd.f32 0.0, %v2311
        %v2313 = vpop.f32.mrb[0].mxu0
        %v2314 = vpop.f32.mrb[0].mxu0
        %v2315 = vpop.f32.mrb[0].mxu0
        %2316 = vdwg.mxu0
        %v2317 = vsel %vm641, %v1990, 0.0
        %v2318 = vsel %vm641, %v2036, 0.0
        %v2319 = vadd.f32 %v2317, %v2318
        %v2320 = vsel %vm641, %v2082, 0.0
        %v2321 = vadd.f32 %v2319, %v2320
        %v2322 = vsel %vm641, %v2128, 0.0
        %v2323 = vadd.f32 %v2321, %v2322
        %v2324 = vsel %vm641, %v2174, 0.0
        %v2325 = vadd.f32 %v2323, %v2324
        %v2326 = vsel %vm641, %v2220, 0.0
        %v2327 = vadd.f32 %v2325, %v2326
        %v2328 = vsel %vm641, %v2266, 0.0
        %v2329 = vadd.f32 %v2327, %v2328
        %v2330 = vsel %vm641, %v2312, 0.0
        %v2331 = vadd.f32 %v2329, %v2330
        %v2332 = vld [vmem:[%s5] sm:$0x1]
        %v2334 = vlaneseq
        %v2335 = vshrl.u32 %v2334, 7
        %v2336 = vsub.s32 0, %v2335
        %v2337 = vrot.slane %v2332, %v2336
        %v2339 = vadd.f32 %v2331, %v2337
        %v2340 = vadd.f32 %v532, %v2339
        %v2341 = vld [vmem:[%s6] sm:$0x1]
        %v2342 = vld [vmem:[%s7] sm:$0x1]
        %v2343 = vsel %vm641, %v2340, 0.0
        %2344 = vadd.xlane.f32.xlu0 %v2343
        %v2345 = vpop.xlane.xlu0 %2344
        %v2346 = vrcp.pop 32.0
        %v2347 = vmul.f32 %v2345, %v2346
        %v2348 = vsub.f32 %v2340, %v2347
        %v2349 = vmul.f32 %v2348, %v2348
        %v2350 = vsel %vm641, %v2349, 0.0
        %2351 = vadd.xlane.f32.xlu0 %v2350
        %v2352 = vpop.xlane.xlu0 %2351
        %v2353 = vmul.f32 %v2352, %v2346
        %v2354 = vadd.f32 %v2353, 1e-05
        %v2355 = vrsqrt.pop %v2354
        %v2356 = vmul.f32 %v2348, %v2355
        %v2358 = vlaneseq
        %v2359 = vshrl.u32 %v2358, 7
        %v2360 = vsub.s32 0, %v2359
        %v2361 = vrot.slane %v2341, %v2360
        %v2363 = vmul.f32 %v2356, %v2361
        %v2365 = vlaneseq
        %v2366 = vshrl.u32 %v2365, 7
        %v2367 = vsub.s32 0, %v2366
        %v2368 = vrot.slane %v2342, %v2367
        %v2370 = vadd.f32 %v2363, %v2368
        %v2371 = vpack.c.bf16 %v2370, %v2370
        %v2372 = vld [vmem:[%s10] sm:$0xf]
        %v2373 = vld [vmem:[%s10 + $0x4] sm:$0xf]
        %v2374 = vld [vmem:[%s10 + $0x8] sm:$0xf]
        %v2375 = vld [vmem:[%s10 + $0xc] sm:$0xf]
        %v2376 = vld [vmem:[%s11] sm:$0x1]
        %v2378 = vlaneseq
        %v2379 = vshrl.u32 %v2378, 7
        %v2380 = vsub.s32 0, %v2379
        %v2381 = vrot.slane %v2376, %v2380
        %v2387 = vunpack.c.l.b16 %v2372
        %v2388 = vunpack.c.l.b16 %v2373
        %v2389 = vunpack.c.l.b16 %v2374
        %v2390 = vunpack.c.l.b16 %v2375
        %v2391 = vpack.c.b16 %v2388, %v2387
        %v2392 = vpack.c.b16 %v2390, %v2389
        %v2396 = vsel %vm641, %v2371, 0
        %2398 = vmatprep.subr.bf16.mxu0 0
        %2399 = vmatpush1.bf16.msra.mxu0 %v2391
        %2400 = vmatprep.subr.bf16.mxu0 0
        %2401 = vmatpush1.bf16.msra.mxu0 %v2392
        %2402 = vmatprep.subr.bf16.mxu0 0
        %2403 = vmatpush1.bf16.msra.mxu0 0
        %2404 = vmatprep.subr.bf16.mxu0 0
        %2405 = vmatpush1.bf16.msra.mxu0 0
        %2406 = vmatprep.subr.bf16.mxu0 0
        %2407 = vmatpush1.bf16.msra.mxu0 0
        %2408 = vmatprep.subr.bf16.mxu0 0
        %2409 = vmatpush1.bf16.msra.mxu0 0
        %2410 = vmatprep.subr.bf16.mxu0 0
        %2411 = vmatpush1.bf16.msra.mxu0 0
        %2412 = vmatprep.subr.bf16.mxu0 0
        %2413 = vmatpush1.bf16.msra.mxu0 0
        %2414 = vmatprep.subr.bf16.mxu0 0
        %2415 = vmatpush1.bf16.msra.mxu0 0
        %2416 = vmatprep.subr.bf16.mxu0 0
        %2417 = vmatpush1.bf16.msra.mxu0 0
        %2418 = vmatprep.subr.bf16.mxu0 0
        %2419 = vmatpush1.bf16.msra.mxu0 0
        %2420 = vmatprep.subr.bf16.mxu0 0
        %2421 = vmatpush1.bf16.msra.mxu0 0
        %2422 = vmatprep.subr.bf16.mxu0 0
        %2423 = vmatpush1.bf16.msra.mxu0 0
        %2424 = vmatprep.subr.bf16.mxu0 0
        %2425 = vmatpush1.bf16.msra.mxu0 0
        %2426 = vmatprep.subr.bf16.mxu0 0
        %2427 = vmatpush1.bf16.msra.mxu0 0
        %2428 = vmatprep.subr.bf16.mxu0 0
        %2429 = vmatpush1.bf16.msra.mxu0 0
        %2430 = vmatprep.mubr.bf16.mxu0 0
        %2431 = vmatmul.mubr.bf16.gmra.mrb[0].mxu0 %v2396
        %v2432 = vpop.f32.mrb[0].mxu0
        %v2433 = vadd.f32 %v2381, %v2432
        %v2434 = vpop.f32.mrb[0].mxu0
        %v2435 = vpop.f32.mrb[0].mxu0
        %v2436 = vpop.f32.mrb[0].mxu0
        %2437 = vdwg.mxu0
        %v2438 = vmax.f32 %v2433, 0.0
        %v2439 = vpack.c.bf16 %v2438, %v2438
        %v2440 = vld [vmem:[%s12] sm:$0xf]
        %v2441 = vld [vmem:[%s12 + $0x4] sm:$0xf]
        %v2442 = vld [vmem:[%s12 + $0x8] sm:$0xf]
        %v2443 = vld [vmem:[%s12 + $0xc] sm:$0xf]
        %v2444 = vld [vmem:[%s12 + $0x10] sm:$0xf]
        %v2445 = vld [vmem:[%s12 + $0x14] sm:$0xf]
        %v2446 = vld [vmem:[%s12 + $0x18] sm:$0xf]
        %v2447 = vld [vmem:[%s12 + $0x1c] sm:$0xf]
        %v2448 = vld [vmem:[%s13] sm:$0x1]
        %v2450 = vlaneseq
        %v2451 = vshrl.u32 %v2450, 7
        %v2452 = vsub.s32 0, %v2451
        %v2453 = vrot.slane %v2448, %v2452
        %v2463 = vunpack.c.l.b16 %v2440
        %v2464 = vunpack.c.l.b16 %v2441
        %v2465 = vunpack.c.l.b16 %v2442
        %v2466 = vunpack.c.l.b16 %v2443
        %v2467 = vunpack.c.l.b16 %v2444
        %v2468 = vunpack.c.l.b16 %v2445
        %v2469 = vunpack.c.l.b16 %v2446
        %v2470 = vunpack.c.l.b16 %v2447
        %v2471 = vpack.c.b16 %v2464, %v2463
        %v2472 = vpack.c.b16 %v2466, %v2465
        %v2473 = vpack.c.b16 %v2468, %v2467
        %v2474 = vpack.c.b16 %v2470, %v2469
        %vm2479 = vcmask 523264
        %v2481 = vsel %vm2479, %v2439, 0
        %2483 = vmatprep.subr.bf16.mxu0 0
        %2484 = vmatpush1.bf16.msra.mxu0 %v2471
        %2485 = vmatprep.subr.bf16.mxu0 0
        %2486 = vmatpush1.bf16.msra.mxu0 %v2472
        %2487 = vmatprep.subr.bf16.mxu0 0
        %2488 = vmatpush1.bf16.msra.mxu0 %v2473
        %2489 = vmatprep.subr.bf16.mxu0 0
        %2490 = vmatpush1.bf16.msra.mxu0 %v2474
        %2491 = vmatprep.subr.bf16.mxu0 0
        %2492 = vmatpush1.bf16.msra.mxu0 0
        %2493 = vmatprep.subr.bf16.mxu0 0
        %2494 = vmatpush1.bf16.msra.mxu0 0
        %2495 = vmatprep.subr.bf16.mxu0 0
        %2496 = vmatpush1.bf16.msra.mxu0 0
        %2497 = vmatprep.subr.bf16.mxu0 0
        %2498 = vmatpush1.bf16.msra.mxu0 0
        %2499 = vmatprep.subr.bf16.mxu0 0
        %2500 = vmatpush1.bf16.msra.mxu0 0
        %2501 = vmatprep.subr.bf16.mxu0 0
        %2502 = vmatpush1.bf16.msra.mxu0 0
        %2503 = vmatprep.subr.bf16.mxu0 0
        %2504 = vmatpush1.bf16.msra.mxu0 0
        %2505 = vmatprep.subr.bf16.mxu0 0
        %2506 = vmatpush1.bf16.msra.mxu0 0
        %2507 = vmatprep.subr.bf16.mxu0 0
        %2508 = vmatpush1.bf16.msra.mxu0 0
        %2509 = vmatprep.subr.bf16.mxu0 0
        %2510 = vmatpush1.bf16.msra.mxu0 0
        %2511 = vmatprep.subr.bf16.mxu0 0
        %2512 = vmatpush1.bf16.msra.mxu0 0
        %2513 = vmatprep.subr.bf16.mxu0 0
        %2514 = vmatpush1.bf16.msra.mxu0 0
        %2515 = vmatprep.mubr.bf16.mxu0 0
        %2516 = vmatmul.mubr.bf16.gmra.mrb[0].mxu0 %v2481
        %v2517 = vpop.f32.mrb[0].mxu0
        %v2518 = vadd.f32 %v2453, %v2517
        %v2519 = vpop.f32.mrb[0].mxu0
        %v2520 = vpop.f32.mrb[0].mxu0
        %v2521 = vpop.f32.mrb[0].mxu0
        %2522 = vdwg.mxu0
        %v2523 = vadd.f32 %v2370, %v2518
        %v2524 = vld [vmem:[%s8] sm:$0x1]
        %v2525 = vld [vmem:[%s9] sm:$0x1]
        %v2526 = vsel %vm641, %v2523, 0.0
        %2527 = vadd.xlane.f32.xlu0 %v2526
        %v2528 = vpop.xlane.xlu0 %2527
        %v2529 = vmul.f32 %v2528, %v2346
        %v2530 = vsub.f32 %v2523, %v2529
        %v2531 = vmul.f32 %v2530, %v2530
        %v2532 = vsel %vm641, %v2531, 0.0
        %2533 = vadd.xlane.f32.xlu0 %v2532
        %v2534 = vpop.xlane.xlu0 %2533
        %v2535 = vmul.f32 %v2534, %v2346
        %v2536 = vadd.f32 %v2535, 1e-05
        %v2537 = vrsqrt.pop %v2536
        %v2538 = vmul.f32 %v2530, %v2537
        %v2540 = vlaneseq
        %v2541 = vshrl.u32 %v2540, 7
        %v2542 = vsub.s32 0, %v2541
        %v2543 = vrot.slane %v2524, %v2542
        %v2545 = vmul.f32 %v2538, %v2543
        %v2547 = vlaneseq
        %v2548 = vshrl.u32 %v2547, 7
        %v2549 = vsub.s32 0, %v2548
        %v2550 = vrot.slane %v2525, %v2549
        %v2552 = vadd.f32 %v2545, %v2550
        %v2553 = vpack.c.bf16 %v2552, %v2552
        %s2554 = scalar_lea.vmem %s2, 128
        %v2555 = vld [vmem:[%s2554] sm:$0xf]
        %v2556 = vld [vmem:[%s2554 + $0x4] sm:$0xf]
        %v2557 = vld [vmem:[%s2554 + $0x8] sm:$0xf]
        %v2558 = vld [vmem:[%s2554 + $0xc] sm:$0xf]
        %v2559 = vld [vmem:[%s2554 + $0x10] sm:$0xf]
        %v2560 = vld [vmem:[%s2554 + $0x14] sm:$0xf]
        %v2561 = vld [vmem:[%s2554 + $0x18] sm:$0xf]
        %v2562 = vld [vmem:[%s2554 + $0x1c] sm:$0xf]
        %v2563 = vld [vmem:[%s2554 + $0x20] sm:$0xf]
        %v2564 = vld [vmem:[%s2554 + $0x24] sm:$0xf]
        %v2565 = vld [vmem:[%s2554 + $0x28] sm:$0xf]
        %v2566 = vld [vmem:[%s2554 + $0x2c] sm:$0xf]
        %v2567 = vld [vmem:[%s2554 + $0x30] sm:$0xf]
        %v2568 = vld [vmem:[%s2554 + $0x34] sm:$0xf]
        %v2569 = vld [vmem:[%s2554 + $0x38] sm:$0xf]
        %v2570 = vld [vmem:[%s2554 + $0x3c] sm:$0xf]
        %v2571 = vld [vmem:[%s2554 + $0x40] sm:$0xf]
        %v2572 = vld [vmem:[%s2554 + $0x44] sm:$0xf]
        %v2573 = vld [vmem:[%s2554 + $0x48] sm:$0xf]
        %v2574 = vld [vmem:[%s2554 + $0x4c] sm:$0xf]
        %v2575 = vld [vmem:[%s2554 + $0x50] sm:$0xf]
        %v2576 = vld [vmem:[%s2554 + $0x54] sm:$0xf]
        %v2577 = vld [vmem:[%s2554 + $0x58] sm:$0xf]
        %v2578 = vld [vmem:[%s2554 + $0x5c] sm:$0xf]
        %v2579 = vld [vmem:[%s2554 + $0x60] sm:$0xf]
        %v2580 = vld [vmem:[%s2554 + $0x64] sm:$0xf]
        %v2581 = vld [vmem:[%s2554 + $0x68] sm:$0xf]
        %v2582 = vld [vmem:[%s2554 + $0x6c] sm:$0xf]
        %v2583 = vld [vmem:[%s2554 + $0x70] sm:$0xf]
        %v2584 = vld [vmem:[%s2554 + $0x74] sm:$0xf]
        %v2585 = vld [vmem:[%s2554 + $0x78] sm:$0xf]
        %v2586 = vld [vmem:[%s2554 + $0x7c] sm:$0xf]
        %s2587 = scalar_lea.vmem %s3, 8
        %v2588 = vld [vmem:[%s2587] sm:$0x1]
        %v2589 = vld [vmem:[%s2587 + $0x1] sm:$0x1]
        %v2590 = vld [vmem:[%s2587 + $0x2] sm:$0x1]
        %v2591 = vld [vmem:[%s2587 + $0x3] sm:$0x1]
        %v2592 = vld [vmem:[%s2587 + $0x4] sm:$0x1]
        %v2593 = vld [vmem:[%s2587 + $0x5] sm:$0x1]
        %v2594 = vld [vmem:[%s2587 + $0x6] sm:$0x1]
        %v2595 = vld [vmem:[%s2587 + $0x7] sm:$0x1]
        %v2604 = vlaneseq
        %v2605 = vshrl.u32 %v2604, 7
        %v2606 = vsub.s32 0, %v2605
        %v2607 = vrot.slane %v2588, %v2606
        %v2608 = vlaneseq
        %v2609 = vshrl.u32 %v2608, 7
        %v2610 = vsub.s32 0, %v2609
        %v2611 = vrot.slane %v2589, %v2610
        %v2612 = vlaneseq
        %v2613 = vshrl.u32 %v2612, 7
        %v2614 = vsub.s32 0, %v2613
        %v2615 = vrot.slane %v2590, %v2614
        %v2616 = vlaneseq
        %v2617 = vshrl.u32 %v2616, 7
        %v2618 = vsub.s32 0, %v2617
        %v2619 = vrot.slane %v2591, %v2618
        %v2620 = vlaneseq
        %v2621 = vshrl.u32 %v2620, 7
        %v2622 = vsub.s32 0, %v2621
        %v2623 = vrot.slane %v2592, %v2622
        %v2624 = vlaneseq
        %v2625 = vshrl.u32 %v2624, 7
        %v2626 = vsub.s32 0, %v2625
        %v2627 = vrot.slane %v2593, %v2626
        %v2628 = vlaneseq
        %v2629 = vshrl.u32 %v2628, 7
        %v2630 = vsub.s32 0, %v2629
        %v2631 = vrot.slane %v2594, %v2630
        %v2632 = vlaneseq
        %v2633 = vshrl.u32 %v2632, 7
        %v2634 = vsub.s32 0, %v2633
        %v2635 = vrot.slane %v2595, %v2634
        %v2648 = vunpack.c.l.b16 %v2555
        %v2649 = vunpack.c.l.b16 %v2556
        %v2650 = vunpack.c.l.b16 %v2557
        %v2651 = vunpack.c.l.b16 %v2558
        %v2652 = vpack.c.b16 %v2649, %v2648
        %v2653 = vpack.c.b16 %v2651, %v2650
        %v2657 = vsel %vm641, %v2553, 0
        %2659 = vmatprep.subr.bf16.mxu0 0
        %2660 = vmatpush1.bf16.msra.mxu0 %v2652
        %2661 = vmatprep.subr.bf16.mxu0 0
        %2662 = vmatpush1.bf16.msra.mxu0 %v2653
        %2663 = vmatprep.subr.bf16.mxu0 0
        %2664 = vmatpush1.bf16.msra.mxu0 0
        %2665 = vmatprep.subr.bf16.mxu0 0
        %2666 = vmatpush1.bf16.msra.mxu0 0
        %2667 = vmatprep.subr.bf16.mxu0 0
        %2668 = vmatpush1.bf16.msra.mxu0 0
        %2669 = vmatprep.subr.bf16.mxu0 0
        %2670 = vmatpush1.bf16.msra.mxu0 0
        %2671 = vmatprep.subr.bf16.mxu0 0
        %2672 = vmatpush1.bf16.msra.mxu0 0
        %2673 = vmatprep.subr.bf16.mxu0 0
        %2674 = vmatpush1.bf16.msra.mxu0 0
        %2675 = vmatprep.subr.bf16.mxu0 0
        %2676 = vmatpush1.bf16.msra.mxu0 0
        %2677 = vmatprep.subr.bf16.mxu0 0
        %2678 = vmatpush1.bf16.msra.mxu0 0
        %2679 = vmatprep.subr.bf16.mxu0 0
        %2680 = vmatpush1.bf16.msra.mxu0 0
        %2681 = vmatprep.subr.bf16.mxu0 0
        %2682 = vmatpush1.bf16.msra.mxu0 0
        %2683 = vmatprep.subr.bf16.mxu0 0
        %2684 = vmatpush1.bf16.msra.mxu0 0
        %2685 = vmatprep.subr.bf16.mxu0 0
        %2686 = vmatpush1.bf16.msra.mxu0 0
        %2687 = vmatprep.subr.bf16.mxu0 0
        %2688 = vmatpush1.bf16.msra.mxu0 0
        %2689 = vmatprep.subr.bf16.mxu0 0
        %2690 = vmatpush1.bf16.msra.mxu0 0
        %2691 = vmatprep.mubr.bf16.mxu0 0
        %2692 = vmatmul.mubr.bf16.gmra.mrb[0].mxu0 %v2657
        %v2693 = vpop.f32.mrb[0].mxu0
        %v2694 = vadd.f32 %v2607, %v2693
        %v2695 = vpop.f32.mrb[0].mxu0
        %v2696 = vpop.f32.mrb[0].mxu0
        %v2697 = vpop.f32.mrb[0].mxu0
        %2698 = vdwg.mxu0
        %v2703 = vunpack.c.l.b16 %v2559
        %v2704 = vunpack.c.l.b16 %v2560
        %v2705 = vunpack.c.l.b16 %v2561
        %v2706 = vunpack.c.l.b16 %v2562
        %v2707 = vpack.c.b16 %v2704, %v2703
        %v2708 = vpack.c.b16 %v2706, %v2705
        %2711 = vmatprep.subr.bf16.mxu0 0
        %2712 = vmatpush1.bf16.msra.mxu0 %v2707
        %2713 = vmatprep.subr.bf16.mxu0 0
        %2714 = vmatpush1.bf16.msra.mxu0 %v2708
        %2715 = vmatprep.subr.bf16.mxu0 0
        %2716 = vmatpush1.bf16.msra.mxu0 0
        %2717 = vmatprep.subr.bf16.mxu0 0
        %2718 = vmatpush1.bf16.msra.mxu0 0
        %2719 = vmatprep.subr.bf16.mxu0 0
        %2720 = vmatpush1.bf16.msra.mxu0 0
        %2721 = vmatprep.subr.bf16.mxu0 0
        %2722 = vmatpush1.bf16.msra.mxu0 0
        %2723 = vmatprep.subr.bf16.mxu0 0
        %2724 = vmatpush1.bf16.msra.mxu0 0
        %2725 = vmatprep.subr.bf16.mxu0 0
        %2726 = vmatpush1.bf16.msra.mxu0 0
        %2727 = vmatprep.subr.bf16.mxu0 0
        %2728 = vmatpush1.bf16.msra.mxu0 0
        %2729 = vmatprep.subr.bf16.mxu0 0
        %2730 = vmatpush1.bf16.msra.mxu0 0
        %2731 = vmatprep.subr.bf16.mxu0 0
        %2732 = vmatpush1.bf16.msra.mxu0 0
        %2733 = vmatprep.subr.bf16.mxu0 0
        %2734 = vmatpush1.bf16.msra.mxu0 0
        %2735 = vmatprep.subr.bf16.mxu0 0
        %2736 = vmatpush1.bf16.msra.mxu0 0
        %2737 = vmatprep.subr.bf16.mxu0 0
        %2738 = vmatpush1.bf16.msra.mxu0 0
        %2739 = vmatprep.subr.bf16.mxu0 0
        %2740 = vmatpush1.bf16.msra.mxu0 0
        %2741 = vmatprep.subr.bf16.mxu0 0
        %2742 = vmatpush1.bf16.msra.mxu0 0
        %2743 = vmatprep.mubr.bf16.mxu0 0
        %2744 = vmatmul.mubr.bf16.gmra.mrb[0].mxu0 %v2657
        %v2745 = vpop.f32.mrb[0].mxu0
        %v2746 = vadd.f32 %v2611, %v2745
        %v2747 = vpop.f32.mrb[0].mxu0
        %v2748 = vpop.f32.mrb[0].mxu0
        %v2749 = vpop.f32.mrb[0].mxu0
        %2750 = vdwg.mxu0
        %v2755 = vunpack.c.l.b16 %v2563
        %v2756 = vunpack.c.l.b16 %v2564
        %v2757 = vunpack.c.l.b16 %v2565
        %v2758 = vunpack.c.l.b16 %v2566
        %v2759 = vpack.c.b16 %v2756, %v2755
        %v2760 = vpack.c.b16 %v2758, %v2757
        %2763 = vmatprep.subr.bf16.mxu0 0
        %2764 = vmatpush1.bf16.msra.mxu0 %v2759
        %2765 = vmatprep.subr.bf16.mxu0 0
        %2766 = vmatpush1.bf16.msra.mxu0 %v2760
        %2767 = vmatprep.subr.bf16.mxu0 0
        %2768 = vmatpush1.bf16.msra.mxu0 0
        %2769 = vmatprep.subr.bf16.mxu0 0
        %2770 = vmatpush1.bf16.msra.mxu0 0
        %2771 = vmatprep.subr.bf16.mxu0 0
        %2772 = vmatpush1.bf16.msra.mxu0 0
        %2773 = vmatprep.subr.bf16.mxu0 0
        %2774 = vmatpush1.bf16.msra.mxu0 0
        %2775 = vmatprep.subr.bf16.mxu0 0
        %2776 = vmatpush1.bf16.msra.mxu0 0
        %2777 = vmatprep.subr.bf16.mxu0 0
        %2778 = vmatpush1.bf16.msra.mxu0 0
        %2779 = vmatprep.subr.bf16.mxu0 0
        %2780 = vmatpush1.bf16.msra.mxu0 0
        %2781 = vmatprep.subr.bf16.mxu0 0
        %2782 = vmatpush1.bf16.msra.mxu0 0
        %2783 = vmatprep.subr.bf16.mxu0 0
        %2784 = vmatpush1.bf16.msra.mxu0 0
        %2785 = vmatprep.subr.bf16.mxu0 0
        %2786 = vmatpush1.bf16.msra.mxu0 0
        %2787 = vmatprep.subr.bf16.mxu0 0
        %2788 = vmatpush1.bf16.msra.mxu0 0
        %2789 = vmatprep.subr.bf16.mxu0 0
        %2790 = vmatpush1.bf16.msra.mxu0 0
        %2791 = vmatprep.subr.bf16.mxu0 0
        %2792 = vmatpush1.bf16.msra.mxu0 0
        %2793 = vmatprep.subr.bf16.mxu0 0
        %2794 = vmatpush1.bf16.msra.mxu0 0
        %2795 = vmatprep.mubr.bf16.mxu0 0
        %2796 = vmatmul.mubr.bf16.gmra.mrb[0].mxu0 %v2657
        %v2797 = vpop.f32.mrb[0].mxu0
        %v2798 = vadd.f32 %v2615, %v2797
        %v2799 = vpop.f32.mrb[0].mxu0
        %v2800 = vpop.f32.mrb[0].mxu0
        %v2801 = vpop.f32.mrb[0].mxu0
        %2802 = vdwg.mxu0
        %v2807 = vunpack.c.l.b16 %v2567
        %v2808 = vunpack.c.l.b16 %v2568
        %v2809 = vunpack.c.l.b16 %v2569
        %v2810 = vunpack.c.l.b16 %v2570
        %v2811 = vpack.c.b16 %v2808, %v2807
        %v2812 = vpack.c.b16 %v2810, %v2809
        %2815 = vmatprep.subr.bf16.mxu0 0
        %2816 = vmatpush1.bf16.msra.mxu0 %v2811
        %2817 = vmatprep.subr.bf16.mxu0 0
        %2818 = vmatpush1.bf16.msra.mxu0 %v2812
        %2819 = vmatprep.subr.bf16.mxu0 0
        %2820 = vmatpush1.bf16.msra.mxu0 0
        %2821 = vmatprep.subr.bf16.mxu0 0
        %2822 = vmatpush1.bf16.msra.mxu0 0
        %2823 = vmatprep.subr.bf16.mxu0 0
        %2824 = vmatpush1.bf16.msra.mxu0 0
        %2825 = vmatprep.subr.bf16.mxu0 0
        %2826 = vmatpush1.bf16.msra.mxu0 0
        %2827 = vmatprep.subr.bf16.mxu0 0
        %2828 = vmatpush1.bf16.msra.mxu0 0
        %2829 = vmatprep.subr.bf16.mxu0 0
        %2830 = vmatpush1.bf16.msra.mxu0 0
        %2831 = vmatprep.subr.bf16.mxu0 0
        %2832 = vmatpush1.bf16.msra.mxu0 0
        %2833 = vmatprep.subr.bf16.mxu0 0
        %2834 = vmatpush1.bf16.msra.mxu0 0
        %2835 = vmatprep.subr.bf16.mxu0 0
        %2836 = vmatpush1.bf16.msra.mxu0 0
        %2837 = vmatprep.subr.bf16.mxu0 0
        %2838 = vmatpush1.bf16.msra.mxu0 0
        %2839 = vmatprep.subr.bf16.mxu0 0
        %2840 = vmatpush1.bf16.msra.mxu0 0
        %2841 = vmatprep.subr.bf16.mxu0 0
        %2842 = vmatpush1.bf16.msra.mxu0 0
        %2843 = vmatprep.subr.bf16.mxu0 0
        %2844 = vmatpush1.bf16.msra.mxu0 0
        %2845 = vmatprep.subr.bf16.mxu0 0
        %2846 = vmatpush1.bf16.msra.mxu0 0
        %2847 = vmatprep.mubr.bf16.mxu0 0
        %2848 = vmatmul.mubr.bf16.gmra.mrb[0].mxu0 %v2657
        %v2849 = vpop.f32.mrb[0].mxu0
        %v2850 = vadd.f32 %v2619, %v2849
        %v2851 = vpop.f32.mrb[0].mxu0
        %v2852 = vpop.f32.mrb[0].mxu0
        %v2853 = vpop.f32.mrb[0].mxu0
        %2854 = vdwg.mxu0
        %v2859 = vunpack.c.l.b16 %v2571
        %v2860 = vunpack.c.l.b16 %v2572
        %v2861 = vunpack.c.l.b16 %v2573
        %v2862 = vunpack.c.l.b16 %v2574
        %v2863 = vpack.c.b16 %v2860, %v2859
        %v2864 = vpack.c.b16 %v2862, %v2861
        %2867 = vmatprep.subr.bf16.mxu0 0
        %2868 = vmatpush1.bf16.msra.mxu0 %v2863
        %2869 = vmatprep.subr.bf16.mxu0 0
        %2870 = vmatpush1.bf16.msra.mxu0 %v2864
        %2871 = vmatprep.subr.bf16.mxu0 0
        %2872 = vmatpush1.bf16.msra.mxu0 0
        %2873 = vmatprep.subr.bf16.mxu0 0
        %2874 = vmatpush1.bf16.msra.mxu0 0
        %2875 = vmatprep.subr.bf16.mxu0 0
        %2876 = vmatpush1.bf16.msra.mxu0 0
        %2877 = vmatprep.subr.bf16.mxu0 0
        %2878 = vmatpush1.bf16.msra.mxu0 0
        %2879 = vmatprep.subr.bf16.mxu0 0
        %2880 = vmatpush1.bf16.msra.mxu0 0
        %2881 = vmatprep.subr.bf16.mxu0 0
        %2882 = vmatpush1.bf16.msra.mxu0 0
        %2883 = vmatprep.subr.bf16.mxu0 0
        %2884 = vmatpush1.bf16.msra.mxu0 0
        %2885 = vmatprep.subr.bf16.mxu0 0
        %2886 = vmatpush1.bf16.msra.mxu0 0
        %2887 = vmatprep.subr.bf16.mxu0 0
        %2888 = vmatpush1.bf16.msra.mxu0 0
        %2889 = vmatprep.subr.bf16.mxu0 0
        %2890 = vmatpush1.bf16.msra.mxu0 0
        %2891 = vmatprep.subr.bf16.mxu0 0
        %2892 = vmatpush1.bf16.msra.mxu0 0
        %2893 = vmatprep.subr.bf16.mxu0 0
        %2894 = vmatpush1.bf16.msra.mxu0 0
        %2895 = vmatprep.subr.bf16.mxu0 0
        %2896 = vmatpush1.bf16.msra.mxu0 0
        %2897 = vmatprep.subr.bf16.mxu0 0
        %2898 = vmatpush1.bf16.msra.mxu0 0
        %2899 = vmatprep.mubr.bf16.mxu0 0
        %2900 = vmatmul.mubr.bf16.gmra.mrb[0].mxu0 %v2657
        %v2901 = vpop.f32.mrb[0].mxu0
        %v2902 = vadd.f32 %v2623, %v2901
        %v2903 = vpop.f32.mrb[0].mxu0
        %v2904 = vpop.f32.mrb[0].mxu0
        %v2905 = vpop.f32.mrb[0].mxu0
        %2906 = vdwg.mxu0
        %v2911 = vunpack.c.l.b16 %v2575
        %v2912 = vunpack.c.l.b16 %v2576
        %v2913 = vunpack.c.l.b16 %v2577
        %v2914 = vunpack.c.l.b16 %v2578
        %v2915 = vpack.c.b16 %v2912, %v2911
        %v2916 = vpack.c.b16 %v2914, %v2913
        %2919 = vmatprep.subr.bf16.mxu0 0
        %2920 = vmatpush1.bf16.msra.mxu0 %v2915
        %2921 = vmatprep.subr.bf16.mxu0 0
        %2922 = vmatpush1.bf16.msra.mxu0 %v2916
        %2923 = vmatprep.subr.bf16.mxu0 0
        %2924 = vmatpush1.bf16.msra.mxu0 0
        %2925 = vmatprep.subr.bf16.mxu0 0
        %2926 = vmatpush1.bf16.msra.mxu0 0
        %2927 = vmatprep.subr.bf16.mxu0 0
        %2928 = vmatpush1.bf16.msra.mxu0 0
        %2929 = vmatprep.subr.bf16.mxu0 0
        %2930 = vmatpush1.bf16.msra.mxu0 0
        %2931 = vmatprep.subr.bf16.mxu0 0
        %2932 = vmatpush1.bf16.msra.mxu0 0
        %2933 = vmatprep.subr.bf16.mxu0 0
        %2934 = vmatpush1.bf16.msra.mxu0 0
        %2935 = vmatprep.subr.bf16.mxu0 0
        %2936 = vmatpush1.bf16.msra.mxu0 0
        %2937 = vmatprep.subr.bf16.mxu0 0
        %2938 = vmatpush1.bf16.msra.mxu0 0
        %2939 = vmatprep.subr.bf16.mxu0 0
        %2940 = vmatpush1.bf16.msra.mxu0 0
        %2941 = vmatprep.subr.bf16.mxu0 0
        %2942 = vmatpush1.bf16.msra.mxu0 0
        %2943 = vmatprep.subr.bf16.mxu0 0
        %2944 = vmatpush1.bf16.msra.mxu0 0
        %2945 = vmatprep.subr.bf16.mxu0 0
        %2946 = vmatpush1.bf16.msra.mxu0 0
        %2947 = vmatprep.subr.bf16.mxu0 0
        %2948 = vmatpush1.bf16.msra.mxu0 0
        %2949 = vmatprep.subr.bf16.mxu0 0
        %2950 = vmatpush1.bf16.msra.mxu0 0
        %2951 = vmatprep.mubr.bf16.mxu0 0
        %2952 = vmatmul.mubr.bf16.gmra.mrb[0].mxu0 %v2657
        %v2953 = vpop.f32.mrb[0].mxu0
        %v2954 = vadd.f32 %v2627, %v2953
        %v2955 = vpop.f32.mrb[0].mxu0
        %v2956 = vpop.f32.mrb[0].mxu0
        %v2957 = vpop.f32.mrb[0].mxu0
        %2958 = vdwg.mxu0
        %v2963 = vunpack.c.l.b16 %v2579
        %v2964 = vunpack.c.l.b16 %v2580
        %v2965 = vunpack.c.l.b16 %v2581
        %v2966 = vunpack.c.l.b16 %v2582
        %v2967 = vpack.c.b16 %v2964, %v2963
        %v2968 = vpack.c.b16 %v2966, %v2965
        %2971 = vmatprep.subr.bf16.mxu0 0
        %2972 = vmatpush1.bf16.msra.mxu0 %v2967
        %2973 = vmatprep.subr.bf16.mxu0 0
        %2974 = vmatpush1.bf16.msra.mxu0 %v2968
        %2975 = vmatprep.subr.bf16.mxu0 0
        %2976 = vmatpush1.bf16.msra.mxu0 0
        %2977 = vmatprep.subr.bf16.mxu0 0
        %2978 = vmatpush1.bf16.msra.mxu0 0
        %2979 = vmatprep.subr.bf16.mxu0 0
        %2980 = vmatpush1.bf16.msra.mxu0 0
        %2981 = vmatprep.subr.bf16.mxu0 0
        %2982 = vmatpush1.bf16.msra.mxu0 0
        %2983 = vmatprep.subr.bf16.mxu0 0
        %2984 = vmatpush1.bf16.msra.mxu0 0
        %2985 = vmatprep.subr.bf16.mxu0 0
        %2986 = vmatpush1.bf16.msra.mxu0 0
        %2987 = vmatprep.subr.bf16.mxu0 0
        %2988 = vmatpush1.bf16.msra.mxu0 0
        %2989 = vmatprep.subr.bf16.mxu0 0
        %2990 = vmatpush1.bf16.msra.mxu0 0
        %2991 = vmatprep.subr.bf16.mxu0 0
        %2992 = vmatpush1.bf16.msra.mxu0 0
        %2993 = vmatprep.subr.bf16.mxu0 0
        %2994 = vmatpush1.bf16.msra.mxu0 0
        %2995 = vmatprep.subr.bf16.mxu0 0
        %2996 = vmatpush1.bf16.msra.mxu0 0
        %2997 = vmatprep.subr.bf16.mxu0 0
        %2998 = vmatpush1.bf16.msra.mxu0 0
        %2999 = vmatprep.subr.bf16.mxu0 0
        %3000 = vmatpush1.bf16.msra.mxu0 0
        %3001 = vmatprep.subr.bf16.mxu0 0
        %3002 = vmatpush1.bf16.msra.mxu0 0
        %3003 = vmatprep.mubr.bf16.mxu0 0
        %3004 = vmatmul.mubr.bf16.gmra.mrb[0].mxu0 %v2657
        %v3005 = vpop.f32.mrb[0].mxu0
        %v3006 = vadd.f32 %v2631, %v3005
        %v3007 = vpop.f32.mrb[0].mxu0
        %v3008 = vpop.f32.mrb[0].mxu0
        %v3009 = vpop.f32.mrb[0].mxu0
        %3010 = vdwg.mxu0
        %v3015 = vunpack.c.l.b16 %v2583
        %v3016 = vunpack.c.l.b16 %v2584
        %v3017 = vunpack.c.l.b16 %v2585
        %v3018 = vunpack.c.l.b16 %v2586
        %v3019 = vpack.c.b16 %v3016, %v3015
        %v3020 = vpack.c.b16 %v3018, %v3017
        %3023 = vmatprep.subr.bf16.mxu0 0
        %3024 = vmatpush1.bf16.msra.mxu0 %v3019
        %3025 = vmatprep.subr.bf16.mxu0 0
        %3026 = vmatpush1.bf16.msra.mxu0 %v3020
        %3027 = vmatprep.subr.bf16.mxu0 0
        %3028 = vmatpush1.bf16.msra.mxu0 0
        %3029 = vmatprep.subr.bf16.mxu0 0
        %3030 = vmatpush1.bf16.msra.mxu0 0
        %3031 = vmatprep.subr.bf16.mxu0 0
        %3032 = vmatpush1.bf16.msra.mxu0 0
        %3033 = vmatprep.subr.bf16.mxu0 0
        %3034 = vmatpush1.bf16.msra.mxu0 0
        %3035 = vmatprep.subr.bf16.mxu0 0
        %3036 = vmatpush1.bf16.msra.mxu0 0
        %3037 = vmatprep.subr.bf16.mxu0 0
        %3038 = vmatpush1.bf16.msra.mxu0 0
        %3039 = vmatprep.subr.bf16.mxu0 0
        %3040 = vmatpush1.bf16.msra.mxu0 0
        %3041 = vmatprep.subr.bf16.mxu0 0
        %3042 = vmatpush1.bf16.msra.mxu0 0
        %3043 = vmatprep.subr.bf16.mxu0 0
        %3044 = vmatpush1.bf16.msra.mxu0 0
        %3045 = vmatprep.subr.bf16.mxu0 0
        %3046 = vmatpush1.bf16.msra.mxu0 0
        %3047 = vmatprep.subr.bf16.mxu0 0
        %3048 = vmatpush1.bf16.msra.mxu0 0
        %3049 = vmatprep.subr.bf16.mxu0 0
        %3050 = vmatpush1.bf16.msra.mxu0 0
        %3051 = vmatprep.subr.bf16.mxu0 0
        %3052 = vmatpush1.bf16.msra.mxu0 0
        %3053 = vmatprep.subr.bf16.mxu0 0
        %3054 = vmatpush1.bf16.msra.mxu0 0
        %3055 = vmatprep.mubr.bf16.mxu0 0
        %3056 = vmatmul.mubr.bf16.gmra.mrb[0].mxu0 %v2657
        %v3057 = vpop.f32.mrb[0].mxu0
        %v3058 = vadd.f32 %v2635, %v3057
        %v3059 = vpop.f32.mrb[0].mxu0
        %v3060 = vpop.f32.mrb[0].mxu0
        %v3061 = vpop.f32.mrb[0].mxu0
        %3062 = vdwg.mxu0
        %v3063 = vpack.c.bf16 %v2694, %v2694
        %v3064 = vpack.c.bf16 %v2746, %v2746
        %v3065 = vpack.c.bf16 %v2798, %v2798
        %v3066 = vpack.c.bf16 %v2850, %v2850
        %v3067 = vpack.c.bf16 %v2902, %v2902
        %v3068 = vpack.c.bf16 %v2954, %v2954
        %v3069 = vpack.c.bf16 %v3006, %v3006
        %v3070 = vpack.c.bf16 %v3058, %v3058
        %3072 = vrot.lane.b32.xlu0 %v3063, 124
        %v3073 = vpop.permute.xlu0 %3072
        %v3075 = vsel %vm1060, %v3063, 0
        %v3078 = vsel %vm1060, %v3073, 0
        %3080 = vmatprep.subr.bf16.mxu0 0
        %3081 = vmatpush1.bf16.xpose.msra.mxu0 %v3078
        %3082 = vmatprep.subr.bf16.mxu0 0
        %3083 = vmatpush1.bf16.xpose.msra.mxu0 0
        %3084 = vmatprep.subr.bf16.mxu0 0
        %3085 = vmatpush1.bf16.xpose.msra.mxu0 0
        %3086 = vmatprep.subr.bf16.mxu0 0
        %3087 = vmatpush1.bf16.xpose.msra.mxu0 0
        %3088 = vmatprep.subr.bf16.mxu0 0
        %3089 = vmatpush1.bf16.xpose.msra.mxu0 0
        %3090 = vmatprep.subr.bf16.mxu0 0
        %3091 = vmatpush1.bf16.xpose.msra.mxu0 0
        %3092 = vmatprep.subr.bf16.mxu0 0
        %3093 = vmatpush1.bf16.xpose.msra.mxu0 0
        %3094 = vmatprep.subr.bf16.mxu0 0
        %3095 = vmatpush1.bf16.xpose.msra.mxu0 0
        %3096 = vmatprep.subr.bf16.mxu0 0
        %3097 = vmatpush1.bf16.xpose.msra.mxu0 0
        %3098 = vmatprep.subr.bf16.mxu0 0
        %3099 = vmatpush1.bf16.xpose.msra.mxu0 0
        %3100 = vmatprep.subr.bf16.mxu0 0
        %3101 = vmatpush1.bf16.xpose.msra.mxu0 0
        %3102 = vmatprep.subr.bf16.mxu0 0
        %3103 = vmatpush1.bf16.xpose.msra.mxu0 0
        %3104 = vmatprep.subr.bf16.mxu0 0
        %3105 = vmatpush1.bf16.xpose.msra.mxu0 0
        %3106 = vmatprep.subr.bf16.mxu0 0
        %3107 = vmatpush1.bf16.xpose.msra.mxu0 0
        %3108 = vmatprep.subr.bf16.mxu0 0
        %3109 = vmatpush1.bf16.xpose.msra.mxu0 0
        %3110 = vmatprep.subr.bf16.mxu0 0
        %3111 = vmatpush1.bf16.xpose.msra.mxu0 0
        %3112 = vmatprep.mubr.bf16.mxu0 0
        %3113 = vmatmul.mubr.bf16.gmra.mrb[0].mxu0 %v3075
        %v3114 = vpop.f32.mrb[0].mxu0
        %v3115 = vadd.f32 %v538, %v3114
        %v3116 = vpop.f32.mrb[0].mxu0
        %v3117 = vpop.f32.mrb[0].mxu0
        %v3118 = vpop.f32.mrb[0].mxu0
        %3119 = vdwg.mxu0
        %3121 = vrot.lane.b32.xlu0 %v3064, 124
        %v3122 = vpop.permute.xlu0 %3121
        %v3124 = vsel %vm1060, %v3064, 0
        %v3127 = vsel %vm1060, %v3122, 0
        %3129 = vmatprep.subr.bf16.mxu0 0
        %3130 = vmatpush1.bf16.xpose.msra.mxu0 %v3127
        %3131 = vmatprep.subr.bf16.mxu0 0
        %3132 = vmatpush1.bf16.xpose.msra.mxu0 0
        %3133 = vmatprep.subr.bf16.mxu0 0
        %3134 = vmatpush1.bf16.xpose.msra.mxu0 0
        %3135 = vmatprep.subr.bf16.mxu0 0
        %3136 = vmatpush1.bf16.xpose.msra.mxu0 0
        %3137 = vmatprep.subr.bf16.mxu0 0
        %3138 = vmatpush1.bf16.xpose.msra.mxu0 0
        %3139 = vmatprep.subr.bf16.mxu0 0
        %3140 = vmatpush1.bf16.xpose.msra.mxu0 0
        %3141 = vmatprep.subr.bf16.mxu0 0
        %3142 = vmatpush1.bf16.xpose.msra.mxu0 0
        %3143 = vmatprep.subr.bf16.mxu0 0
        %3144 = vmatpush1.bf16.xpose.msra.mxu0 0
        %3145 = vmatprep.subr.bf16.mxu0 0
        %3146 = vmatpush1.bf16.xpose.msra.mxu0 0
        %3147 = vmatprep.subr.bf16.mxu0 0
        %3148 = vmatpush1.bf16.xpose.msra.mxu0 0
        %3149 = vmatprep.subr.bf16.mxu0 0
        %3150 = vmatpush1.bf16.xpose.msra.mxu0 0
        %3151 = vmatprep.subr.bf16.mxu0 0
        %3152 = vmatpush1.bf16.xpose.msra.mxu0 0
        %3153 = vmatprep.subr.bf16.mxu0 0
        %3154 = vmatpush1.bf16.xpose.msra.mxu0 0
        %3155 = vmatprep.subr.bf16.mxu0 0
        %3156 = vmatpush1.bf16.xpose.msra.mxu0 0
        %3157 = vmatprep.subr.bf16.mxu0 0
        %3158 = vmatpush1.bf16.xpose.msra.mxu0 0
        %3159 = vmatprep.subr.bf16.mxu0 0
        %3160 = vmatpush1.bf16.xpose.msra.mxu0 0
        %3161 = vmatprep.mubr.bf16.mxu0 0
        %3162 = vmatmul.mubr.bf16.gmra.mrb[0].mxu0 %v3124
        %v3163 = vpop.f32.mrb[0].mxu0
        %v3164 = vadd.f32 %v538, %v3163
        %v3165 = vpop.f32.mrb[0].mxu0
        %v3166 = vpop.f32.mrb[0].mxu0
        %v3167 = vpop.f32.mrb[0].mxu0
        %3168 = vdwg.mxu0
        %3170 = vrot.lane.b32.xlu0 %v3065, 124
        %v3171 = vpop.permute.xlu0 %3170
        %v3173 = vsel %vm1060, %v3065, 0
        %v3176 = vsel %vm1060, %v3171, 0
        %3178 = vmatprep.subr.bf16.mxu0 0
        %3179 = vmatpush1.bf16.xpose.msra.mxu0 %v3176
        %3180 = vmatprep.subr.bf16.mxu0 0
        %3181 = vmatpush1.bf16.xpose.msra.mxu0 0
        %3182 = vmatprep.subr.bf16.mxu0 0
        %3183 = vmatpush1.bf16.xpose.msra.mxu0 0
        %3184 = vmatprep.subr.bf16.mxu0 0
        %3185 = vmatpush1.bf16.xpose.msra.mxu0 0
        %3186 = vmatprep.subr.bf16.mxu0 0
        %3187 = vmatpush1.bf16.xpose.msra.mxu0 0
        %3188 = vmatprep.subr.bf16.mxu0 0
        %3189 = vmatpush1.bf16.xpose.msra.mxu0 0
        %3190 = vmatprep.subr.bf16.mxu0 0
        %3191 = vmatpush1.bf16.xpose.msra.mxu0 0
        %3192 = vmatprep.subr.bf16.mxu0 0
        %3193 = vmatpush1.bf16.xpose.msra.mxu0 0
        %3194 = vmatprep.subr.bf16.mxu0 0
        %3195 = vmatpush1.bf16.xpose.msra.mxu0 0
        %3196 = vmatprep.subr.bf16.mxu0 0
        %3197 = vmatpush1.bf16.xpose.msra.mxu0 0
        %3198 = vmatprep.subr.bf16.mxu0 0
        %3199 = vmatpush1.bf16.xpose.msra.mxu0 0
        %3200 = vmatprep.subr.bf16.mxu0 0
        %3201 = vmatpush1.bf16.xpose.msra.mxu0 0
        %3202 = vmatprep.subr.bf16.mxu0 0
        %3203 = vmatpush1.bf16.xpose.msra.mxu0 0
        %3204 = vmatprep.subr.bf16.mxu0 0
        %3205 = vmatpush1.bf16.xpose.msra.mxu0 0
        %3206 = vmatprep.subr.bf16.mxu0 0
        %3207 = vmatpush1.bf16.xpose.msra.mxu0 0
        %3208 = vmatprep.subr.bf16.mxu0 0
        %3209 = vmatpush1.bf16.xpose.msra.mxu0 0
        %3210 = vmatprep.mubr.bf16.mxu0 0
        %3211 = vmatmul.mubr.bf16.gmra.mrb[0].mxu0 %v3173
        %v3212 = vpop.f32.mrb[0].mxu0
        %v3213 = vadd.f32 %v538, %v3212
        %v3214 = vpop.f32.mrb[0].mxu0
        %v3215 = vpop.f32.mrb[0].mxu0
        %v3216 = vpop.f32.mrb[0].mxu0
        %3217 = vdwg.mxu0
        %3219 = vrot.lane.b32.xlu0 %v3066, 124
        %v3220 = vpop.permute.xlu0 %3219
        %v3222 = vsel %vm1060, %v3066, 0
        %v3225 = vsel %vm1060, %v3220, 0
        %3227 = vmatprep.subr.bf16.mxu0 0
        %3228 = vmatpush1.bf16.xpose.msra.mxu0 %v3225
        %3229 = vmatprep.subr.bf16.mxu0 0
        %3230 = vmatpush1.bf16.xpose.msra.mxu0 0
        %3231 = vmatprep.subr.bf16.mxu0 0
        %3232 = vmatpush1.bf16.xpose.msra.mxu0 0
        %3233 = vmatprep.subr.bf16.mxu0 0
        %3234 = vmatpush1.bf16.xpose.msra.mxu0 0
        %3235 = vmatprep.subr.bf16.mxu0 0
        %3236 = vmatpush1.bf16.xpose.msra.mxu0 0
        %3237 = vmatprep.subr.bf16.mxu0 0
        %3238 = vmatpush1.bf16.xpose.msra.mxu0 0
        %3239 = vmatprep.subr.bf16.mxu0 0
        %3240 = vmatpush1.bf16.xpose.msra.mxu0 0
        %3241 = vmatprep.subr.bf16.mxu0 0
        %3242 = vmatpush1.bf16.xpose.msra.mxu0 0
        %3243 = vmatprep.subr.bf16.mxu0 0
        %3244 = vmatpush1.bf16.xpose.msra.mxu0 0
        %3245 = vmatprep.subr.bf16.mxu0 0
        %3246 = vmatpush1.bf16.xpose.msra.mxu0 0
        %3247 = vmatprep.subr.bf16.mxu0 0
        %3248 = vmatpush1.bf16.xpose.msra.mxu0 0
        %3249 = vmatprep.subr.bf16.mxu0 0
        %3250 = vmatpush1.bf16.xpose.msra.mxu0 0
        %3251 = vmatprep.subr.bf16.mxu0 0
        %3252 = vmatpush1.bf16.xpose.msra.mxu0 0
        %3253 = vmatprep.subr.bf16.mxu0 0
        %3254 = vmatpush1.bf16.xpose.msra.mxu0 0
        %3255 = vmatprep.subr.bf16.mxu0 0
        %3256 = vmatpush1.bf16.xpose.msra.mxu0 0
        %3257 = vmatprep.subr.bf16.mxu0 0
        %3258 = vmatpush1.bf16.xpose.msra.mxu0 0
        %3259 = vmatprep.mubr.bf16.mxu0 0
        %3260 = vmatmul.mubr.bf16.gmra.mrb[0].mxu0 %v3222
        %v3261 = vpop.f32.mrb[0].mxu0
        %v3262 = vadd.f32 %v538, %v3261
        %v3263 = vpop.f32.mrb[0].mxu0
        %v3264 = vpop.f32.mrb[0].mxu0
        %v3265 = vpop.f32.mrb[0].mxu0
        %3266 = vdwg.mxu0
        %3268 = vrot.lane.b32.xlu0 %v3067, 124
        %v3269 = vpop.permute.xlu0 %3268
        %v3271 = vsel %vm1060, %v3067, 0
        %v3274 = vsel %vm1060, %v3269, 0
        %3276 = vmatprep.subr.bf16.mxu0 0
        %3277 = vmatpush1.bf16.xpose.msra.mxu0 %v3274
        %3278 = vmatprep.subr.bf16.mxu0 0
        %3279 = vmatpush1.bf16.xpose.msra.mxu0 0
        %3280 = vmatprep.subr.bf16.mxu0 0
        %3281 = vmatpush1.bf16.xpose.msra.mxu0 0
        %3282 = vmatprep.subr.bf16.mxu0 0
        %3283 = vmatpush1.bf16.xpose.msra.mxu0 0
        %3284 = vmatprep.subr.bf16.mxu0 0
        %3285 = vmatpush1.bf16.xpose.msra.mxu0 0
        %3286 = vmatprep.subr.bf16.mxu0 0
        %3287 = vmatpush1.bf16.xpose.msra.mxu0 0
        %3288 = vmatprep.subr.bf16.mxu0 0
        %3289 = vmatpush1.bf16.xpose.msra.mxu0 0
        %3290 = vmatprep.subr.bf16.mxu0 0
        %3291 = vmatpush1.bf16.xpose.msra.mxu0 0
        %3292 = vmatprep.subr.bf16.mxu0 0
        %3293 = vmatpush1.bf16.xpose.msra.mxu0 0
        %3294 = vmatprep.subr.bf16.mxu0 0
        %3295 = vmatpush1.bf16.xpose.msra.mxu0 0
        %3296 = vmatprep.subr.bf16.mxu0 0
        %3297 = vmatpush1.bf16.xpose.msra.mxu0 0
        %3298 = vmatprep.subr.bf16.mxu0 0
        %3299 = vmatpush1.bf16.xpose.msra.mxu0 0
        %3300 = vmatprep.subr.bf16.mxu0 0
        %3301 = vmatpush1.bf16.xpose.msra.mxu0 0
        %3302 = vmatprep.subr.bf16.mxu0 0
        %3303 = vmatpush1.bf16.xpose.msra.mxu0 0
        %3304 = vmatprep.subr.bf16.mxu0 0
        %3305 = vmatpush1.bf16.xpose.msra.mxu0 0
        %3306 = vmatprep.subr.bf16.mxu0 0
        %3307 = vmatpush1.bf16.xpose.msra.mxu0 0
        %3308 = vmatprep.mubr.bf16.mxu0 0
        %3309 = vmatmul.mubr.bf16.gmra.mrb[0].mxu0 %v3271
        %v3310 = vpop.f32.mrb[0].mxu0
        %v3311 = vadd.f32 %v538, %v3310
        %v3312 = vpop.f32.mrb[0].mxu0
        %v3313 = vpop.f32.mrb[0].mxu0
        %v3314 = vpop.f32.mrb[0].mxu0
        %3315 = vdwg.mxu0
        %3317 = vrot.lane.b32.xlu0 %v3068, 124
        %v3318 = vpop.permute.xlu0 %3317
        %v3320 = vsel %vm1060, %v3068, 0
        %v3323 = vsel %vm1060, %v3318, 0
        %3325 = vmatprep.subr.bf16.mxu0 0
        %3326 = vmatpush1.bf16.xpose.msra.mxu0 %v3323
        %3327 = vmatprep.subr.bf16.mxu0 0
        %3328 = vmatpush1.bf16.xpose.msra.mxu0 0
        %3329 = vmatprep.subr.bf16.mxu0 0
        %3330 = vmatpush1.bf16.xpose.msra.mxu0 0
        %3331 = vmatprep.subr.bf16.mxu0 0
        %3332 = vmatpush1.bf16.xpose.msra.mxu0 0
        %3333 = vmatprep.subr.bf16.mxu0 0
        %3334 = vmatpush1.bf16.xpose.msra.mxu0 0
        %3335 = vmatprep.subr.bf16.mxu0 0
        %3336 = vmatpush1.bf16.xpose.msra.mxu0 0
        %3337 = vmatprep.subr.bf16.mxu0 0
        %3338 = vmatpush1.bf16.xpose.msra.mxu0 0
        %3339 = vmatprep.subr.bf16.mxu0 0
        %3340 = vmatpush1.bf16.xpose.msra.mxu0 0
        %3341 = vmatprep.subr.bf16.mxu0 0
        %3342 = vmatpush1.bf16.xpose.msra.mxu0 0
        %3343 = vmatprep.subr.bf16.mxu0 0
        %3344 = vmatpush1.bf16.xpose.msra.mxu0 0
        %3345 = vmatprep.subr.bf16.mxu0 0
        %3346 = vmatpush1.bf16.xpose.msra.mxu0 0
        %3347 = vmatprep.subr.bf16.mxu0 0
        %3348 = vmatpush1.bf16.xpose.msra.mxu0 0
        %3349 = vmatprep.subr.bf16.mxu0 0
        %3350 = vmatpush1.bf16.xpose.msra.mxu0 0
        %3351 = vmatprep.subr.bf16.mxu0 0
        %3352 = vmatpush1.bf16.xpose.msra.mxu0 0
        %3353 = vmatprep.subr.bf16.mxu0 0
        %3354 = vmatpush1.bf16.xpose.msra.mxu0 0
        %3355 = vmatprep.subr.bf16.mxu0 0
        %3356 = vmatpush1.bf16.xpose.msra.mxu0 0
        %3357 = vmatprep.mubr.bf16.mxu0 0
        %3358 = vmatmul.mubr.bf16.gmra.mrb[0].mxu0 %v3320
        %v3359 = vpop.f32.mrb[0].mxu0
        %v3360 = vadd.f32 %v538, %v3359
        %v3361 = vpop.f32.mrb[0].mxu0
        %v3362 = vpop.f32.mrb[0].mxu0
        %v3363 = vpop.f32.mrb[0].mxu0
        %3364 = vdwg.mxu0
        %3366 = vrot.lane.b32.xlu0 %v3069, 124
        %v3367 = vpop.permute.xlu0 %3366
        %v3369 = vsel %vm1060, %v3069, 0
        %v3372 = vsel %vm1060, %v3367, 0
        %3374 = vmatprep.subr.bf16.mxu0 0
        %3375 = vmatpush1.bf16.xpose.msra.mxu0 %v3372
        %3376 = vmatprep.subr.bf16.mxu0 0
        %3377 = vmatpush1.bf16.xpose.msra.mxu0 0
        %3378 = vmatprep.subr.bf16.mxu0 0
        %3379 = vmatpush1.bf16.xpose.msra.mxu0 0
        %3380 = vmatprep.subr.bf16.mxu0 0
        %3381 = vmatpush1.bf16.xpose.msra.mxu0 0
        %3382 = vmatprep.subr.bf16.mxu0 0
        %3383 = vmatpush1.bf16.xpose.msra.mxu0 0
        %3384 = vmatprep.subr.bf16.mxu0 0
        %3385 = vmatpush1.bf16.xpose.msra.mxu0 0
        %3386 = vmatprep.subr.bf16.mxu0 0
        %3387 = vmatpush1.bf16.xpose.msra.mxu0 0
        %3388 = vmatprep.subr.bf16.mxu0 0
        %3389 = vmatpush1.bf16.xpose.msra.mxu0 0
        %3390 = vmatprep.subr.bf16.mxu0 0
        %3391 = vmatpush1.bf16.xpose.msra.mxu0 0
        %3392 = vmatprep.subr.bf16.mxu0 0
        %3393 = vmatpush1.bf16.xpose.msra.mxu0 0
        %3394 = vmatprep.subr.bf16.mxu0 0
        %3395 = vmatpush1.bf16.xpose.msra.mxu0 0
        %3396 = vmatprep.subr.bf16.mxu0 0
        %3397 = vmatpush1.bf16.xpose.msra.mxu0 0
        %3398 = vmatprep.subr.bf16.mxu0 0
        %3399 = vmatpush1.bf16.xpose.msra.mxu0 0
        %3400 = vmatprep.subr.bf16.mxu0 0
        %3401 = vmatpush1.bf16.xpose.msra.mxu0 0
        %3402 = vmatprep.subr.bf16.mxu0 0
        %3403 = vmatpush1.bf16.xpose.msra.mxu0 0
        %3404 = vmatprep.subr.bf16.mxu0 0
        %3405 = vmatpush1.bf16.xpose.msra.mxu0 0
        %3406 = vmatprep.mubr.bf16.mxu0 0
        %3407 = vmatmul.mubr.bf16.gmra.mrb[0].mxu0 %v3369
        %v3408 = vpop.f32.mrb[0].mxu0
        %v3409 = vadd.f32 %v538, %v3408
        %v3410 = vpop.f32.mrb[0].mxu0
        %v3411 = vpop.f32.mrb[0].mxu0
        %v3412 = vpop.f32.mrb[0].mxu0
        %3413 = vdwg.mxu0
        %3415 = vrot.lane.b32.xlu0 %v3070, 124
        %v3416 = vpop.permute.xlu0 %3415
        %v3418 = vsel %vm1060, %v3070, 0
        %v3421 = vsel %vm1060, %v3416, 0
        %3423 = vmatprep.subr.bf16.mxu0 0
        %3424 = vmatpush1.bf16.xpose.msra.mxu0 %v3421
        %3425 = vmatprep.subr.bf16.mxu0 0
        %3426 = vmatpush1.bf16.xpose.msra.mxu0 0
        %3427 = vmatprep.subr.bf16.mxu0 0
        %3428 = vmatpush1.bf16.xpose.msra.mxu0 0
        %3429 = vmatprep.subr.bf16.mxu0 0
        %3430 = vmatpush1.bf16.xpose.msra.mxu0 0
        %3431 = vmatprep.subr.bf16.mxu0 0
        %3432 = vmatpush1.bf16.xpose.msra.mxu0 0
        %3433 = vmatprep.subr.bf16.mxu0 0
        %3434 = vmatpush1.bf16.xpose.msra.mxu0 0
        %3435 = vmatprep.subr.bf16.mxu0 0
        %3436 = vmatpush1.bf16.xpose.msra.mxu0 0
        %3437 = vmatprep.subr.bf16.mxu0 0
        %3438 = vmatpush1.bf16.xpose.msra.mxu0 0
        %3439 = vmatprep.subr.bf16.mxu0 0
        %3440 = vmatpush1.bf16.xpose.msra.mxu0 0
        %3441 = vmatprep.subr.bf16.mxu0 0
        %3442 = vmatpush1.bf16.xpose.msra.mxu0 0
        %3443 = vmatprep.subr.bf16.mxu0 0
        %3444 = vmatpush1.bf16.xpose.msra.mxu0 0
        %3445 = vmatprep.subr.bf16.mxu0 0
        %3446 = vmatpush1.bf16.xpose.msra.mxu0 0
        %3447 = vmatprep.subr.bf16.mxu0 0
        %3448 = vmatpush1.bf16.xpose.msra.mxu0 0
        %3449 = vmatprep.subr.bf16.mxu0 0
        %3450 = vmatpush1.bf16.xpose.msra.mxu0 0
        %3451 = vmatprep.subr.bf16.mxu0 0
        %3452 = vmatpush1.bf16.xpose.msra.mxu0 0
        %3453 = vmatprep.subr.bf16.mxu0 0
        %3454 = vmatpush1.bf16.xpose.msra.mxu0 0
        %3455 = vmatprep.mubr.bf16.mxu0 0
        %3456 = vmatmul.mubr.bf16.gmra.mrb[0].mxu0 %v3418
        %v3457 = vpop.f32.mrb[0].mxu0
        %v3458 = vadd.f32 %v538, %v3457
        %v3459 = vpop.f32.mrb[0].mxu0
        %v3460 = vpop.f32.mrb[0].mxu0
        %v3461 = vpop.f32.mrb[0].mxu0
        %3462 = vdwg.mxu0
        %v3463 = vsel %vm1450, %v3115, -inf
        %3464 = vmax.xlane.f32.xlu0 %v3463
        %v3465 = vpop.xlane.xlu0 %3464
        %v3466 = vsel %vm1450, %v3164, -inf
        %3467 = vmax.xlane.f32.xlu0 %v3466
        %v3468 = vpop.xlane.xlu0 %3467
        %v3469 = vsel %vm1450, %v3213, -inf
        %3470 = vmax.xlane.f32.xlu0 %v3469
        %v3471 = vpop.xlane.xlu0 %3470
        %v3472 = vsel %vm1450, %v3262, -inf
        %3473 = vmax.xlane.f32.xlu0 %v3472
        %v3474 = vpop.xlane.xlu0 %3473
        %v3475 = vsel %vm1450, %v3311, -inf
        %3476 = vmax.xlane.f32.xlu0 %v3475
        %v3477 = vpop.xlane.xlu0 %3476
        %v3478 = vsel %vm1450, %v3360, -inf
        %3479 = vmax.xlane.f32.xlu0 %v3478
        %v3480 = vpop.xlane.xlu0 %3479
        %v3481 = vsel %vm1450, %v3409, -inf
        %3482 = vmax.xlane.f32.xlu0 %v3481
        %v3483 = vpop.xlane.xlu0 %3482
        %v3484 = vsel %vm1450, %v3458, -inf
        %3485 = vmax.xlane.f32.xlu0 %v3484
        %v3486 = vpop.xlane.xlu0 %3485
        %v3487 = vsub.f32 %v3115, %v3465
        %v3488 = vsub.f32 %v3164, %v3468
        %v3489 = vsub.f32 %v3213, %v3471
        %v3490 = vsub.f32 %v3262, %v3474
        %v3491 = vsub.f32 %v3311, %v3477
        %v3492 = vsub.f32 %v3360, %v3480
        %v3493 = vsub.f32 %v3409, %v3483
        %v3494 = vsub.f32 %v3458, %v3486
        %v3495 = vmul.f32 %v3487, 1.442695
        %v3496 = vpow.pop %v3495
        %v3497 = vmul.f32 %v3488, 1.442695
        %v3498 = vpow.pop %v3497
        %v3499 = vmul.f32 %v3489, 1.442695
        %v3500 = vpow.pop %v3499
        %v3501 = vmul.f32 %v3490, 1.442695
        %v3502 = vpow.pop %v3501
        %v3503 = vmul.f32 %v3491, 1.442695
        %v3504 = vpow.pop %v3503
        %v3505 = vmul.f32 %v3492, 1.442695
        %v3506 = vpow.pop %v3505
        %v3507 = vmul.f32 %v3493, 1.442695
        %v3508 = vpow.pop %v3507
        %v3509 = vmul.f32 %v3494, 1.442695
        %v3510 = vpow.pop %v3509
        %v3511 = vsel %vm1450, %v3496, 0.0
        %3512 = vadd.xlane.f32.xlu0 %v3511
        %v3513 = vpop.xlane.xlu0 %3512
        %v3514 = vsel %vm1450, %v3498, 0.0
        %3515 = vadd.xlane.f32.xlu0 %v3514
        %v3516 = vpop.xlane.xlu0 %3515
        %v3517 = vsel %vm1450, %v3500, 0.0
        %3518 = vadd.xlane.f32.xlu0 %v3517
        %v3519 = vpop.xlane.xlu0 %3518
        %v3520 = vsel %vm1450, %v3502, 0.0
        %3521 = vadd.xlane.f32.xlu0 %v3520
        %v3522 = vpop.xlane.xlu0 %3521
        %v3523 = vsel %vm1450, %v3504, 0.0
        %3524 = vadd.xlane.f32.xlu0 %v3523
        %v3525 = vpop.xlane.xlu0 %3524
        %v3526 = vsel %vm1450, %v3506, 0.0
        %3527 = vadd.xlane.f32.xlu0 %v3526
        %v3528 = vpop.xlane.xlu0 %3527
        %v3529 = vsel %vm1450, %v3508, 0.0
        %3530 = vadd.xlane.f32.xlu0 %v3529
        %v3531 = vpop.xlane.xlu0 %3530
        %v3532 = vsel %vm1450, %v3510, 0.0
        %3533 = vadd.xlane.f32.xlu0 %v3532
        %v3534 = vpop.xlane.xlu0 %3533
        %v3535 = vrcp.pop %v3513
        %v3536 = vrcp.pop %v3516
        %v3537 = vrcp.pop %v3519
        %v3538 = vrcp.pop %v3522
        %v3539 = vrcp.pop %v3525
        %v3540 = vrcp.pop %v3528
        %v3541 = vrcp.pop %v3531
        %v3542 = vrcp.pop %v3534
        %v3543 = vmul.f32 %v3496, %v3535
        %v3544 = vmul.f32 %v3498, %v3536
        %v3545 = vmul.f32 %v3500, %v3537
        %v3546 = vmul.f32 %v3502, %v3538
        %v3547 = vmul.f32 %v3504, %v3539
        %v3548 = vmul.f32 %v3506, %v3540
        %v3549 = vmul.f32 %v3508, %v3541
        %v3550 = vmul.f32 %v3510, %v3542
        %v3551 = vpack.c.bf16 %v3543, %v3543
        %v3552 = vpack.c.bf16 %v3544, %v3544
        %v3553 = vpack.c.bf16 %v3545, %v3545
        %v3554 = vpack.c.bf16 %v3546, %v3546
        %v3555 = vpack.c.bf16 %v3547, %v3547
        %v3556 = vpack.c.bf16 %v3548, %v3548
        %v3557 = vpack.c.bf16 %v3549, %v3549
        %v3558 = vpack.c.bf16 %v3550, %v3550
        %3559 = vrot.lane.b32.xlu0 %v3063, 120
        %v3560 = vpop.permute.xlu0 %3559
        %v3562 = vsel %vm1450, %v3551, 0
        %v3565 = vsel %vm1552, %v3560, 0
        %3567 = vmatprep.subr.bf16.mxu0 0
        %3568 = vmatpush1.bf16.msra.mxu0 %v3565
        %3569 = vmatprep.subr.bf16.mxu0 0
        %3570 = vmatpush1.bf16.msra.mxu0 0
        %3571 = vmatprep.subr.bf16.mxu0 0
        %3572 = vmatpush1.bf16.msra.mxu0 0
        %3573 = vmatprep.subr.bf16.mxu0 0
        %3574 = vmatpush1.bf16.msra.mxu0 0
        %3575 = vmatprep.subr.bf16.mxu0 0
        %3576 = vmatpush1.bf16.msra.mxu0 0
        %3577 = vmatprep.subr.bf16.mxu0 0
        %3578 = vmatpush1.bf16.msra.mxu0 0
        %3579 = vmatprep.subr.bf16.mxu0 0
        %3580 = vmatpush1.bf16.msra.mxu0 0
        %3581 = vmatprep.subr.bf16.mxu0 0
        %3582 = vmatpush1.bf16.msra.mxu0 0
        %3583 = vmatprep.subr.bf16.mxu0 0
        %3584 = vmatpush1.bf16.msra.mxu0 0
        %3585 = vmatprep.subr.bf16.mxu0 0
        %3586 = vmatpush1.bf16.msra.mxu0 0
        %3587 = vmatprep.subr.bf16.mxu0 0
        %3588 = vmatpush1.bf16.msra.mxu0 0
        %3589 = vmatprep.subr.bf16.mxu0 0
        %3590 = vmatpush1.bf16.msra.mxu0 0
        %3591 = vmatprep.subr.bf16.mxu0 0
        %3592 = vmatpush1.bf16.msra.mxu0 0
        %3593 = vmatprep.subr.bf16.mxu0 0
        %3594 = vmatpush1.bf16.msra.mxu0 0
        %3595 = vmatprep.subr.bf16.mxu0 0
        %3596 = vmatpush1.bf16.msra.mxu0 0
        %3597 = vmatprep.subr.bf16.mxu0 0
        %3598 = vmatpush1.bf16.msra.mxu0 0
        %3599 = vmatprep.mubr.bf16.mxu0 0
        %3600 = vmatmul.mubr.bf16.gmra.mrb[0].mxu0 %v3562
        %v3601 = vpop.f32.mrb[0].mxu0
        %v3602 = vadd.f32 0.0, %v3601
        %v3603 = vpop.f32.mrb[0].mxu0
        %v3604 = vpop.f32.mrb[0].mxu0
        %v3605 = vpop.f32.mrb[0].mxu0
        %3606 = vdwg.mxu0
        %3607 = vrot.lane.b32.xlu0 %v3064, 120
        %v3608 = vpop.permute.xlu0 %3607
        %v3610 = vsel %vm1450, %v3552, 0
        %v3613 = vsel %vm1552, %v3608, 0
        %3615 = vmatprep.subr.bf16.mxu0 0
        %3616 = vmatpush1.bf16.msra.mxu0 %v3613
        %3617 = vmatprep.subr.bf16.mxu0 0
        %3618 = vmatpush1.bf16.msra.mxu0 0
        %3619 = vmatprep.subr.bf16.mxu0 0
        %3620 = vmatpush1.bf16.msra.mxu0 0
        %3621 = vmatprep.subr.bf16.mxu0 0
        %3622 = vmatpush1.bf16.msra.mxu0 0
        %3623 = vmatprep.subr.bf16.mxu0 0
        %3624 = vmatpush1.bf16.msra.mxu0 0
        %3625 = vmatprep.subr.bf16.mxu0 0
        %3626 = vmatpush1.bf16.msra.mxu0 0
        %3627 = vmatprep.subr.bf16.mxu0 0
        %3628 = vmatpush1.bf16.msra.mxu0 0
        %3629 = vmatprep.subr.bf16.mxu0 0
        %3630 = vmatpush1.bf16.msra.mxu0 0
        %3631 = vmatprep.subr.bf16.mxu0 0
        %3632 = vmatpush1.bf16.msra.mxu0 0
        %3633 = vmatprep.subr.bf16.mxu0 0
        %3634 = vmatpush1.bf16.msra.mxu0 0
        %3635 = vmatprep.subr.bf16.mxu0 0
        %3636 = vmatpush1.bf16.msra.mxu0 0
        %3637 = vmatprep.subr.bf16.mxu0 0
        %3638 = vmatpush1.bf16.msra.mxu0 0
        %3639 = vmatprep.subr.bf16.mxu0 0
        %3640 = vmatpush1.bf16.msra.mxu0 0
        %3641 = vmatprep.subr.bf16.mxu0 0
        %3642 = vmatpush1.bf16.msra.mxu0 0
        %3643 = vmatprep.subr.bf16.mxu0 0
        %3644 = vmatpush1.bf16.msra.mxu0 0
        %3645 = vmatprep.subr.bf16.mxu0 0
        %3646 = vmatpush1.bf16.msra.mxu0 0
        %3647 = vmatprep.mubr.bf16.mxu0 0
        %3648 = vmatmul.mubr.bf16.gmra.mrb[0].mxu0 %v3610
        %v3649 = vpop.f32.mrb[0].mxu0
        %v3650 = vadd.f32 0.0, %v3649
        %v3651 = vpop.f32.mrb[0].mxu0
        %v3652 = vpop.f32.mrb[0].mxu0
        %v3653 = vpop.f32.mrb[0].mxu0
        %3654 = vdwg.mxu0
        %3655 = vrot.lane.b32.xlu0 %v3065, 120
        %v3656 = vpop.permute.xlu0 %3655
        %v3658 = vsel %vm1450, %v3553, 0
        %v3661 = vsel %vm1552, %v3656, 0
        %3663 = vmatprep.subr.bf16.mxu0 0
        %3664 = vmatpush1.bf16.msra.mxu0 %v3661
        %3665 = vmatprep.subr.bf16.mxu0 0
        %3666 = vmatpush1.bf16.msra.mxu0 0
        %3667 = vmatprep.subr.bf16.mxu0 0
        %3668 = vmatpush1.bf16.msra.mxu0 0
        %3669 = vmatprep.subr.bf16.mxu0 0
        %3670 = vmatpush1.bf16.msra.mxu0 0
        %3671 = vmatprep.subr.bf16.mxu0 0
        %3672 = vmatpush1.bf16.msra.mxu0 0
        %3673 = vmatprep.subr.bf16.mxu0 0
        %3674 = vmatpush1.bf16.msra.mxu0 0
        %3675 = vmatprep.subr.bf16.mxu0 0
        %3676 = vmatpush1.bf16.msra.mxu0 0
        %3677 = vmatprep.subr.bf16.mxu0 0
        %3678 = vmatpush1.bf16.msra.mxu0 0
        %3679 = vmatprep.subr.bf16.mxu0 0
        %3680 = vmatpush1.bf16.msra.mxu0 0
        %3681 = vmatprep.subr.bf16.mxu0 0
        %3682 = vmatpush1.bf16.msra.mxu0 0
        %3683 = vmatprep.subr.bf16.mxu0 0
        %3684 = vmatpush1.bf16.msra.mxu0 0
        %3685 = vmatprep.subr.bf16.mxu0 0
        %3686 = vmatpush1.bf16.msra.mxu0 0
        %3687 = vmatprep.subr.bf16.mxu0 0
        %3688 = vmatpush1.bf16.msra.mxu0 0
        %3689 = vmatprep.subr.bf16.mxu0 0
        %3690 = vmatpush1.bf16.msra.mxu0 0
        %3691 = vmatprep.subr.bf16.mxu0 0
        %3692 = vmatpush1.bf16.msra.mxu0 0
        %3693 = vmatprep.subr.bf16.mxu0 0
        %3694 = vmatpush1.bf16.msra.mxu0 0
        %3695 = vmatprep.mubr.bf16.mxu0 0
        %3696 = vmatmul.mubr.bf16.gmra.mrb[0].mxu0 %v3658
        %v3697 = vpop.f32.mrb[0].mxu0
        %v3698 = vadd.f32 0.0, %v3697
        %v3699 = vpop.f32.mrb[0].mxu0
        %v3700 = vpop.f32.mrb[0].mxu0
        %v3701 = vpop.f32.mrb[0].mxu0
        %3702 = vdwg.mxu0
        %3703 = vrot.lane.b32.xlu0 %v3066, 120
        %v3704 = vpop.permute.xlu0 %3703
        %v3706 = vsel %vm1450, %v3554, 0
        %v3709 = vsel %vm1552, %v3704, 0
        %3711 = vmatprep.subr.bf16.mxu0 0
        %3712 = vmatpush1.bf16.msra.mxu0 %v3709
        %3713 = vmatprep.subr.bf16.mxu0 0
        %3714 = vmatpush1.bf16.msra.mxu0 0
        %3715 = vmatprep.subr.bf16.mxu0 0
        %3716 = vmatpush1.bf16.msra.mxu0 0
        %3717 = vmatprep.subr.bf16.mxu0 0
        %3718 = vmatpush1.bf16.msra.mxu0 0
        %3719 = vmatprep.subr.bf16.mxu0 0
        %3720 = vmatpush1.bf16.msra.mxu0 0
        %3721 = vmatprep.subr.bf16.mxu0 0
        %3722 = vmatpush1.bf16.msra.mxu0 0
        %3723 = vmatprep.subr.bf16.mxu0 0
        %3724 = vmatpush1.bf16.msra.mxu0 0
        %3725 = vmatprep.subr.bf16.mxu0 0
        %3726 = vmatpush1.bf16.msra.mxu0 0
        %3727 = vmatprep.subr.bf16.mxu0 0
        %3728 = vmatpush1.bf16.msra.mxu0 0
        %3729 = vmatprep.subr.bf16.mxu0 0
        %3730 = vmatpush1.bf16.msra.mxu0 0
        %3731 = vmatprep.subr.bf16.mxu0 0
        %3732 = vmatpush1.bf16.msra.mxu0 0
        %3733 = vmatprep.subr.bf16.mxu0 0
        %3734 = vmatpush1.bf16.msra.mxu0 0
        %3735 = vmatprep.subr.bf16.mxu0 0
        %3736 = vmatpush1.bf16.msra.mxu0 0
        %3737 = vmatprep.subr.bf16.mxu0 0
        %3738 = vmatpush1.bf16.msra.mxu0 0
        %3739 = vmatprep.subr.bf16.mxu0 0
        %3740 = vmatpush1.bf16.msra.mxu0 0
        %3741 = vmatprep.subr.bf16.mxu0 0
        %3742 = vmatpush1.bf16.msra.mxu0 0
        %3743 = vmatprep.mubr.bf16.mxu0 0
        %3744 = vmatmul.mubr.bf16.gmra.mrb[0].mxu0 %v3706
        %v3745 = vpop.f32.mrb[0].mxu0
        %v3746 = vadd.f32 0.0, %v3745
        %v3747 = vpop.f32.mrb[0].mxu0
        %v3748 = vpop.f32.mrb[0].mxu0
        %v3749 = vpop.f32.mrb[0].mxu0
        %3750 = vdwg.mxu0
        %3751 = vrot.lane.b32.xlu0 %v3067, 120
        %v3752 = vpop.permute.xlu0 %3751
        %v3754 = vsel %vm1450, %v3555, 0
        %v3757 = vsel %vm1552, %v3752, 0
        %3759 = vmatprep.subr.bf16.mxu0 0
        %3760 = vmatpush1.bf16.msra.mxu0 %v3757
        %3761 = vmatprep.subr.bf16.mxu0 0
        %3762 = vmatpush1.bf16.msra.mxu0 0
        %3763 = vmatprep.subr.bf16.mxu0 0
        %3764 = vmatpush1.bf16.msra.mxu0 0
        %3765 = vmatprep.subr.bf16.mxu0 0
        %3766 = vmatpush1.bf16.msra.mxu0 0
        %3767 = vmatprep.subr.bf16.mxu0 0
        %3768 = vmatpush1.bf16.msra.mxu0 0
        %3769 = vmatprep.subr.bf16.mxu0 0
        %3770 = vmatpush1.bf16.msra.mxu0 0
        %3771 = vmatprep.subr.bf16.mxu0 0
        %3772 = vmatpush1.bf16.msra.mxu0 0
        %3773 = vmatprep.subr.bf16.mxu0 0
        %3774 = vmatpush1.bf16.msra.mxu0 0
        %3775 = vmatprep.subr.bf16.mxu0 0
        %3776 = vmatpush1.bf16.msra.mxu0 0
        %3777 = vmatprep.subr.bf16.mxu0 0
        %3778 = vmatpush1.bf16.msra.mxu0 0
        %3779 = vmatprep.subr.bf16.mxu0 0
        %3780 = vmatpush1.bf16.msra.mxu0 0
        %3781 = vmatprep.subr.bf16.mxu0 0
        %3782 = vmatpush1.bf16.msra.mxu0 0
        %3783 = vmatprep.subr.bf16.mxu0 0
        %3784 = vmatpush1.bf16.msra.mxu0 0
        %3785 = vmatprep.subr.bf16.mxu0 0
        %3786 = vmatpush1.bf16.msra.mxu0 0
        %3787 = vmatprep.subr.bf16.mxu0 0
        %3788 = vmatpush1.bf16.msra.mxu0 0
        %3789 = vmatprep.subr.bf16.mxu0 0
        %3790 = vmatpush1.bf16.msra.mxu0 0
        %3791 = vmatprep.mubr.bf16.mxu0 0
        %3792 = vmatmul.mubr.bf16.gmra.mrb[0].mxu0 %v3754
        %v3793 = vpop.f32.mrb[0].mxu0
        %v3794 = vadd.f32 0.0, %v3793
        %v3795 = vpop.f32.mrb[0].mxu0
        %v3796 = vpop.f32.mrb[0].mxu0
        %v3797 = vpop.f32.mrb[0].mxu0
        %3798 = vdwg.mxu0
        %3799 = vrot.lane.b32.xlu0 %v3068, 120
        %v3800 = vpop.permute.xlu0 %3799
        %v3802 = vsel %vm1450, %v3556, 0
        %v3805 = vsel %vm1552, %v3800, 0
        %3807 = vmatprep.subr.bf16.mxu0 0
        %3808 = vmatpush1.bf16.msra.mxu0 %v3805
        %3809 = vmatprep.subr.bf16.mxu0 0
        %3810 = vmatpush1.bf16.msra.mxu0 0
        %3811 = vmatprep.subr.bf16.mxu0 0
        %3812 = vmatpush1.bf16.msra.mxu0 0
        %3813 = vmatprep.subr.bf16.mxu0 0
        %3814 = vmatpush1.bf16.msra.mxu0 0
        %3815 = vmatprep.subr.bf16.mxu0 0
        %3816 = vmatpush1.bf16.msra.mxu0 0
        %3817 = vmatprep.subr.bf16.mxu0 0
        %3818 = vmatpush1.bf16.msra.mxu0 0
        %3819 = vmatprep.subr.bf16.mxu0 0
        %3820 = vmatpush1.bf16.msra.mxu0 0
        %3821 = vmatprep.subr.bf16.mxu0 0
        %3822 = vmatpush1.bf16.msra.mxu0 0
        %3823 = vmatprep.subr.bf16.mxu0 0
        %3824 = vmatpush1.bf16.msra.mxu0 0
        %3825 = vmatprep.subr.bf16.mxu0 0
        %3826 = vmatpush1.bf16.msra.mxu0 0
        %3827 = vmatprep.subr.bf16.mxu0 0
        %3828 = vmatpush1.bf16.msra.mxu0 0
        %3829 = vmatprep.subr.bf16.mxu0 0
        %3830 = vmatpush1.bf16.msra.mxu0 0
        %3831 = vmatprep.subr.bf16.mxu0 0
        %3832 = vmatpush1.bf16.msra.mxu0 0
        %3833 = vmatprep.subr.bf16.mxu0 0
        %3834 = vmatpush1.bf16.msra.mxu0 0
        %3835 = vmatprep.subr.bf16.mxu0 0
        %3836 = vmatpush1.bf16.msra.mxu0 0
        %3837 = vmatprep.subr.bf16.mxu0 0
        %3838 = vmatpush1.bf16.msra.mxu0 0
        %3839 = vmatprep.mubr.bf16.mxu0 0
        %3840 = vmatmul.mubr.bf16.gmra.mrb[0].mxu0 %v3802
        %v3841 = vpop.f32.mrb[0].mxu0
        %v3842 = vadd.f32 0.0, %v3841
        %v3843 = vpop.f32.mrb[0].mxu0
        %v3844 = vpop.f32.mrb[0].mxu0
        %v3845 = vpop.f32.mrb[0].mxu0
        %3846 = vdwg.mxu0
        %3847 = vrot.lane.b32.xlu0 %v3069, 120
        %v3848 = vpop.permute.xlu0 %3847
        %v3850 = vsel %vm1450, %v3557, 0
        %v3853 = vsel %vm1552, %v3848, 0
        %3855 = vmatprep.subr.bf16.mxu0 0
        %3856 = vmatpush1.bf16.msra.mxu0 %v3853
        %3857 = vmatprep.subr.bf16.mxu0 0
        %3858 = vmatpush1.bf16.msra.mxu0 0
        %3859 = vmatprep.subr.bf16.mxu0 0
        %3860 = vmatpush1.bf16.msra.mxu0 0
        %3861 = vmatprep.subr.bf16.mxu0 0
        %3862 = vmatpush1.bf16.msra.mxu0 0
        %3863 = vmatprep.subr.bf16.mxu0 0
        %3864 = vmatpush1.bf16.msra.mxu0 0
        %3865 = vmatprep.subr.bf16.mxu0 0
        %3866 = vmatpush1.bf16.msra.mxu0 0
        %3867 = vmatprep.subr.bf16.mxu0 0
        %3868 = vmatpush1.bf16.msra.mxu0 0
        %3869 = vmatprep.subr.bf16.mxu0 0
        %3870 = vmatpush1.bf16.msra.mxu0 0
        %3871 = vmatprep.subr.bf16.mxu0 0
        %3872 = vmatpush1.bf16.msra.mxu0 0
        %3873 = vmatprep.subr.bf16.mxu0 0
        %3874 = vmatpush1.bf16.msra.mxu0 0
        %3875 = vmatprep.subr.bf16.mxu0 0
        %3876 = vmatpush1.bf16.msra.mxu0 0
        %3877 = vmatprep.subr.bf16.mxu0 0
        %3878 = vmatpush1.bf16.msra.mxu0 0
        %3879 = vmatprep.subr.bf16.mxu0 0
        %3880 = vmatpush1.bf16.msra.mxu0 0
        %3881 = vmatprep.subr.bf16.mxu0 0
        %3882 = vmatpush1.bf16.msra.mxu0 0
        %3883 = vmatprep.subr.bf16.mxu0 0
        %3884 = vmatpush1.bf16.msra.mxu0 0
        %3885 = vmatprep.subr.bf16.mxu0 0
        %3886 = vmatpush1.bf16.msra.mxu0 0
        %3887 = vmatprep.mubr.bf16.mxu0 0
        %3888 = vmatmul.mubr.bf16.gmra.mrb[0].mxu0 %v3850
        %v3889 = vpop.f32.mrb[0].mxu0
        %v3890 = vadd.f32 0.0, %v3889
        %v3891 = vpop.f32.mrb[0].mxu0
        %v3892 = vpop.f32.mrb[0].mxu0
        %v3893 = vpop.f32.mrb[0].mxu0
        %3894 = vdwg.mxu0
        %3895 = vrot.lane.b32.xlu0 %v3070, 120
        %v3896 = vpop.permute.xlu0 %3895
        %v3898 = vsel %vm1450, %v3558, 0
        %v3901 = vsel %vm1552, %v3896, 0
        %3903 = vmatprep.subr.bf16.mxu0 0
        %3904 = vmatpush1.bf16.msra.mxu0 %v3901
        %3905 = vmatprep.subr.bf16.mxu0 0
        %3906 = vmatpush1.bf16.msra.mxu0 0
        %3907 = vmatprep.subr.bf16.mxu0 0
        %3908 = vmatpush1.bf16.msra.mxu0 0
        %3909 = vmatprep.subr.bf16.mxu0 0
        %3910 = vmatpush1.bf16.msra.mxu0 0
        %3911 = vmatprep.subr.bf16.mxu0 0
        %3912 = vmatpush1.bf16.msra.mxu0 0
        %3913 = vmatprep.subr.bf16.mxu0 0
        %3914 = vmatpush1.bf16.msra.mxu0 0
        %3915 = vmatprep.subr.bf16.mxu0 0
        %3916 = vmatpush1.bf16.msra.mxu0 0
        %3917 = vmatprep.subr.bf16.mxu0 0
        %3918 = vmatpush1.bf16.msra.mxu0 0
        %3919 = vmatprep.subr.bf16.mxu0 0
        %3920 = vmatpush1.bf16.msra.mxu0 0
        %3921 = vmatprep.subr.bf16.mxu0 0
        %3922 = vmatpush1.bf16.msra.mxu0 0
        %3923 = vmatprep.subr.bf16.mxu0 0
        %3924 = vmatpush1.bf16.msra.mxu0 0
        %3925 = vmatprep.subr.bf16.mxu0 0
        %3926 = vmatpush1.bf16.msra.mxu0 0
        %3927 = vmatprep.subr.bf16.mxu0 0
        %3928 = vmatpush1.bf16.msra.mxu0 0
        %3929 = vmatprep.subr.bf16.mxu0 0
        %3930 = vmatpush1.bf16.msra.mxu0 0
        %3931 = vmatprep.subr.bf16.mxu0 0
        %3932 = vmatpush1.bf16.msra.mxu0 0
        %3933 = vmatprep.subr.bf16.mxu0 0
        %3934 = vmatpush1.bf16.msra.mxu0 0
        %3935 = vmatprep.mubr.bf16.mxu0 0
        %3936 = vmatmul.mubr.bf16.gmra.mrb[0].mxu0 %v3898
        %v3937 = vpop.f32.mrb[0].mxu0
        %v3938 = vadd.f32 0.0, %v3937
        %v3939 = vpop.f32.mrb[0].mxu0
        %v3940 = vpop.f32.mrb[0].mxu0
        %v3941 = vpop.f32.mrb[0].mxu0
        %3942 = vdwg.mxu0
        %v3943 = vpack.c.bf16 %v3602, %v3602
        %v3944 = vpack.c.bf16 %v3650, %v3650
        %v3945 = vpack.c.bf16 %v3698, %v3698
        %v3946 = vpack.c.bf16 %v3746, %v3746
        %v3947 = vpack.c.bf16 %v3794, %v3794
        %v3948 = vpack.c.bf16 %v3842, %v3842
        %v3949 = vpack.c.bf16 %v3890, %v3890
        %v3950 = vpack.c.bf16 %v3938, %v3938
        %s3951 = scalar_lea.vmem %s4, 16
        %v3952 = vld [vmem:[%s3951] sm:$0x3]
        %v3953 = vld [vmem:[%s3951 + $0x2] sm:$0x3]
        %v3954 = vld [vmem:[%s3951 + $0x4] sm:$0x3]
        %v3955 = vld [vmem:[%s3951 + $0x6] sm:$0x3]
        %v3956 = vld [vmem:[%s3951 + $0x8] sm:$0x3]
        %v3957 = vld [vmem:[%s3951 + $0xa] sm:$0x3]
        %v3958 = vld [vmem:[%s3951 + $0xc] sm:$0x3]
        %v3959 = vld [vmem:[%s3951 + $0xe] sm:$0x3]
        %v3961 = vsel %vm1060, %v3943, 0
        %v3964 = vsel %vm1951, %v3952, 0
        %3966 = vmatprep.subr.bf16.mxu0 0
        %3967 = vmatpush1.bf16.msra.mxu0 %v3964
        %3968 = vmatprep.subr.bf16.mxu0 0
        %3969 = vmatpush1.bf16.msra.mxu0 0
        %3970 = vmatprep.subr.bf16.mxu0 0
        %3971 = vmatpush1.bf16.msra.mxu0 0
        %3972 = vmatprep.subr.bf16.mxu0 0
        %3973 = vmatpush1.bf16.msra.mxu0 0
        %3974 = vmatprep.subr.bf16.mxu0 0
        %3975 = vmatpush1.bf16.msra.mxu0 0
        %3976 = vmatprep.subr.bf16.mxu0 0
        %3977 = vmatpush1.bf16.msra.mxu0 0
        %3978 = vmatprep.subr.bf16.mxu0 0
        %3979 = vmatpush1.bf16.msra.mxu0 0
        %3980 = vmatprep.subr.bf16.mxu0 0
        %3981 = vmatpush1.bf16.msra.mxu0 0
        %3982 = vmatprep.subr.bf16.mxu0 0
        %3983 = vmatpush1.bf16.msra.mxu0 0
        %3984 = vmatprep.subr.bf16.mxu0 0
        %3985 = vmatpush1.bf16.msra.mxu0 0
        %3986 = vmatprep.subr.bf16.mxu0 0
        %3987 = vmatpush1.bf16.msra.mxu0 0
        %3988 = vmatprep.subr.bf16.mxu0 0
        %3989 = vmatpush1.bf16.msra.mxu0 0
        %3990 = vmatprep.subr.bf16.mxu0 0
        %3991 = vmatpush1.bf16.msra.mxu0 0
        %3992 = vmatprep.subr.bf16.mxu0 0
        %3993 = vmatpush1.bf16.msra.mxu0 0
        %3994 = vmatprep.subr.bf16.mxu0 0
        %3995 = vmatpush1.bf16.msra.mxu0 0
        %3996 = vmatprep.subr.bf16.mxu0 0
        %3997 = vmatpush1.bf16.msra.mxu0 0
        %3998 = vmatprep.mubr.bf16.mxu0 0
        %3999 = vmatmul.mubr.bf16.gmra.mrb[0].mxu0 %v3961
        %v4000 = vpop.f32.mrb[0].mxu0
        %v4001 = vadd.f32 0.0, %v4000
        %v4002 = vpop.f32.mrb[0].mxu0
        %v4003 = vpop.f32.mrb[0].mxu0
        %v4004 = vpop.f32.mrb[0].mxu0
        %4005 = vdwg.mxu0
        %v4007 = vsel %vm1060, %v3944, 0
        %v4010 = vsel %vm1951, %v3953, 0
        %4012 = vmatprep.subr.bf16.mxu0 0
        %4013 = vmatpush1.bf16.msra.mxu0 %v4010
        %4014 = vmatprep.subr.bf16.mxu0 0
        %4015 = vmatpush1.bf16.msra.mxu0 0
        %4016 = vmatprep.subr.bf16.mxu0 0
        %4017 = vmatpush1.bf16.msra.mxu0 0
        %4018 = vmatprep.subr.bf16.mxu0 0
        %4019 = vmatpush1.bf16.msra.mxu0 0
        %4020 = vmatprep.subr.bf16.mxu0 0
        %4021 = vmatpush1.bf16.msra.mxu0 0
        %4022 = vmatprep.subr.bf16.mxu0 0
        %4023 = vmatpush1.bf16.msra.mxu0 0
        %4024 = vmatprep.subr.bf16.mxu0 0
        %4025 = vmatpush1.bf16.msra.mxu0 0
        %4026 = vmatprep.subr.bf16.mxu0 0
        %4027 = vmatpush1.bf16.msra.mxu0 0
        %4028 = vmatprep.subr.bf16.mxu0 0
        %4029 = vmatpush1.bf16.msra.mxu0 0
        %4030 = vmatprep.subr.bf16.mxu0 0
        %4031 = vmatpush1.bf16.msra.mxu0 0
        %4032 = vmatprep.subr.bf16.mxu0 0
        %4033 = vmatpush1.bf16.msra.mxu0 0
        %4034 = vmatprep.subr.bf16.mxu0 0
        %4035 = vmatpush1.bf16.msra.mxu0 0
        %4036 = vmatprep.subr.bf16.mxu0 0
        %4037 = vmatpush1.bf16.msra.mxu0 0
        %4038 = vmatprep.subr.bf16.mxu0 0
        %4039 = vmatpush1.bf16.msra.mxu0 0
        %4040 = vmatprep.subr.bf16.mxu0 0
        %4041 = vmatpush1.bf16.msra.mxu0 0
        %4042 = vmatprep.subr.bf16.mxu0 0
        %4043 = vmatpush1.bf16.msra.mxu0 0
        %4044 = vmatprep.mubr.bf16.mxu0 0
        %4045 = vmatmul.mubr.bf16.gmra.mrb[0].mxu0 %v4007
        %v4046 = vpop.f32.mrb[0].mxu0
        %v4047 = vadd.f32 0.0, %v4046
        %v4048 = vpop.f32.mrb[0].mxu0
        %v4049 = vpop.f32.mrb[0].mxu0
        %v4050 = vpop.f32.mrb[0].mxu0
        %4051 = vdwg.mxu0
        %v4053 = vsel %vm1060, %v3945, 0
        %v4056 = vsel %vm1951, %v3954, 0
        %4058 = vmatprep.subr.bf16.mxu0 0
        %4059 = vmatpush1.bf16.msra.mxu0 %v4056
        %4060 = vmatprep.subr.bf16.mxu0 0
        %4061 = vmatpush1.bf16.msra.mxu0 0
        %4062 = vmatprep.subr.bf16.mxu0 0
        %4063 = vmatpush1.bf16.msra.mxu0 0
        %4064 = vmatprep.subr.bf16.mxu0 0
        %4065 = vmatpush1.bf16.msra.mxu0 0
        %4066 = vmatprep.subr.bf16.mxu0 0
        %4067 = vmatpush1.bf16.msra.mxu0 0
        %4068 = vmatprep.subr.bf16.mxu0 0
        %4069 = vmatpush1.bf16.msra.mxu0 0
        %4070 = vmatprep.subr.bf16.mxu0 0
        %4071 = vmatpush1.bf16.msra.mxu0 0
        %4072 = vmatprep.subr.bf16.mxu0 0
        %4073 = vmatpush1.bf16.msra.mxu0 0
        %4074 = vmatprep.subr.bf16.mxu0 0
        %4075 = vmatpush1.bf16.msra.mxu0 0
        %4076 = vmatprep.subr.bf16.mxu0 0
        %4077 = vmatpush1.bf16.msra.mxu0 0
        %4078 = vmatprep.subr.bf16.mxu0 0
        %4079 = vmatpush1.bf16.msra.mxu0 0
        %4080 = vmatprep.subr.bf16.mxu0 0
        %4081 = vmatpush1.bf16.msra.mxu0 0
        %4082 = vmatprep.subr.bf16.mxu0 0
        %4083 = vmatpush1.bf16.msra.mxu0 0
        %4084 = vmatprep.subr.bf16.mxu0 0
        %4085 = vmatpush1.bf16.msra.mxu0 0
        %4086 = vmatprep.subr.bf16.mxu0 0
        %4087 = vmatpush1.bf16.msra.mxu0 0
        %4088 = vmatprep.subr.bf16.mxu0 0
        %4089 = vmatpush1.bf16.msra.mxu0 0
        %4090 = vmatprep.mubr.bf16.mxu0 0
        %4091 = vmatmul.mubr.bf16.gmra.mrb[0].mxu0 %v4053
        %v4092 = vpop.f32.mrb[0].mxu0
        %v4093 = vadd.f32 0.0, %v4092
        %v4094 = vpop.f32.mrb[0].mxu0
        %v4095 = vpop.f32.mrb[0].mxu0
        %v4096 = vpop.f32.mrb[0].mxu0
        %4097 = vdwg.mxu0
        %v4099 = vsel %vm1060, %v3946, 0
        %v4102 = vsel %vm1951, %v3955, 0
        %4104 = vmatprep.subr.bf16.mxu0 0
        %4105 = vmatpush1.bf16.msra.mxu0 %v4102
        %4106 = vmatprep.subr.bf16.mxu0 0
        %4107 = vmatpush1.bf16.msra.mxu0 0
        %4108 = vmatprep.subr.bf16.mxu0 0
        %4109 = vmatpush1.bf16.msra.mxu0 0
        %4110 = vmatprep.subr.bf16.mxu0 0
        %4111 = vmatpush1.bf16.msra.mxu0 0
        %4112 = vmatprep.subr.bf16.mxu0 0
        %4113 = vmatpush1.bf16.msra.mxu0 0
        %4114 = vmatprep.subr.bf16.mxu0 0
        %4115 = vmatpush1.bf16.msra.mxu0 0
        %4116 = vmatprep.subr.bf16.mxu0 0
        %4117 = vmatpush1.bf16.msra.mxu0 0
        %4118 = vmatprep.subr.bf16.mxu0 0
        %4119 = vmatpush1.bf16.msra.mxu0 0
        %4120 = vmatprep.subr.bf16.mxu0 0
        %4121 = vmatpush1.bf16.msra.mxu0 0
        %4122 = vmatprep.subr.bf16.mxu0 0
        %4123 = vmatpush1.bf16.msra.mxu0 0
        %4124 = vmatprep.subr.bf16.mxu0 0
        %4125 = vmatpush1.bf16.msra.mxu0 0
        %4126 = vmatprep.subr.bf16.mxu0 0
        %4127 = vmatpush1.bf16.msra.mxu0 0
        %4128 = vmatprep.subr.bf16.mxu0 0
        %4129 = vmatpush1.bf16.msra.mxu0 0
        %4130 = vmatprep.subr.bf16.mxu0 0
        %4131 = vmatpush1.bf16.msra.mxu0 0
        %4132 = vmatprep.subr.bf16.mxu0 0
        %4133 = vmatpush1.bf16.msra.mxu0 0
        %4134 = vmatprep.subr.bf16.mxu0 0
        %4135 = vmatpush1.bf16.msra.mxu0 0
        %4136 = vmatprep.mubr.bf16.mxu0 0
        %4137 = vmatmul.mubr.bf16.gmra.mrb[0].mxu0 %v4099
        %v4138 = vpop.f32.mrb[0].mxu0
        %v4139 = vadd.f32 0.0, %v4138
        %v4140 = vpop.f32.mrb[0].mxu0
        %v4141 = vpop.f32.mrb[0].mxu0
        %v4142 = vpop.f32.mrb[0].mxu0
        %4143 = vdwg.mxu0
        %v4145 = vsel %vm1060, %v3947, 0
        %v4148 = vsel %vm1951, %v3956, 0
        %4150 = vmatprep.subr.bf16.mxu0 0
        %4151 = vmatpush1.bf16.msra.mxu0 %v4148
        %4152 = vmatprep.subr.bf16.mxu0 0
        %4153 = vmatpush1.bf16.msra.mxu0 0
        %4154 = vmatprep.subr.bf16.mxu0 0
        %4155 = vmatpush1.bf16.msra.mxu0 0
        %4156 = vmatprep.subr.bf16.mxu0 0
        %4157 = vmatpush1.bf16.msra.mxu0 0
        %4158 = vmatprep.subr.bf16.mxu0 0
        %4159 = vmatpush1.bf16.msra.mxu0 0
        %4160 = vmatprep.subr.bf16.mxu0 0
        %4161 = vmatpush1.bf16.msra.mxu0 0
        %4162 = vmatprep.subr.bf16.mxu0 0
        %4163 = vmatpush1.bf16.msra.mxu0 0
        %4164 = vmatprep.subr.bf16.mxu0 0
        %4165 = vmatpush1.bf16.msra.mxu0 0
        %4166 = vmatprep.subr.bf16.mxu0 0
        %4167 = vmatpush1.bf16.msra.mxu0 0
        %4168 = vmatprep.subr.bf16.mxu0 0
        %4169 = vmatpush1.bf16.msra.mxu0 0
        %4170 = vmatprep.subr.bf16.mxu0 0
        %4171 = vmatpush1.bf16.msra.mxu0 0
        %4172 = vmatprep.subr.bf16.mxu0 0
        %4173 = vmatpush1.bf16.msra.mxu0 0
        %4174 = vmatprep.subr.bf16.mxu0 0
        %4175 = vmatpush1.bf16.msra.mxu0 0
        %4176 = vmatprep.subr.bf16.mxu0 0
        %4177 = vmatpush1.bf16.msra.mxu0 0
        %4178 = vmatprep.subr.bf16.mxu0 0
        %4179 = vmatpush1.bf16.msra.mxu0 0
        %4180 = vmatprep.subr.bf16.mxu0 0
        %4181 = vmatpush1.bf16.msra.mxu0 0
        %4182 = vmatprep.mubr.bf16.mxu0 0
        %4183 = vmatmul.mubr.bf16.gmra.mrb[0].mxu0 %v4145
        %v4184 = vpop.f32.mrb[0].mxu0
        %v4185 = vadd.f32 0.0, %v4184
        %v4186 = vpop.f32.mrb[0].mxu0
        %v4187 = vpop.f32.mrb[0].mxu0
        %v4188 = vpop.f32.mrb[0].mxu0
        %4189 = vdwg.mxu0
        %v4191 = vsel %vm1060, %v3948, 0
        %v4194 = vsel %vm1951, %v3957, 0
        %4196 = vmatprep.subr.bf16.mxu0 0
        %4197 = vmatpush1.bf16.msra.mxu0 %v4194
        %4198 = vmatprep.subr.bf16.mxu0 0
        %4199 = vmatpush1.bf16.msra.mxu0 0
        %4200 = vmatprep.subr.bf16.mxu0 0
        %4201 = vmatpush1.bf16.msra.mxu0 0
        %4202 = vmatprep.subr.bf16.mxu0 0
        %4203 = vmatpush1.bf16.msra.mxu0 0
        %4204 = vmatprep.subr.bf16.mxu0 0
        %4205 = vmatpush1.bf16.msra.mxu0 0
        %4206 = vmatprep.subr.bf16.mxu0 0
        %4207 = vmatpush1.bf16.msra.mxu0 0
        %4208 = vmatprep.subr.bf16.mxu0 0
        %4209 = vmatpush1.bf16.msra.mxu0 0
        %4210 = vmatprep.subr.bf16.mxu0 0
        %4211 = vmatpush1.bf16.msra.mxu0 0
        %4212 = vmatprep.subr.bf16.mxu0 0
        %4213 = vmatpush1.bf16.msra.mxu0 0
        %4214 = vmatprep.subr.bf16.mxu0 0
        %4215 = vmatpush1.bf16.msra.mxu0 0
        %4216 = vmatprep.subr.bf16.mxu0 0
        %4217 = vmatpush1.bf16.msra.mxu0 0
        %4218 = vmatprep.subr.bf16.mxu0 0
        %4219 = vmatpush1.bf16.msra.mxu0 0
        %4220 = vmatprep.subr.bf16.mxu0 0
        %4221 = vmatpush1.bf16.msra.mxu0 0
        %4222 = vmatprep.subr.bf16.mxu0 0
        %4223 = vmatpush1.bf16.msra.mxu0 0
        %4224 = vmatprep.subr.bf16.mxu0 0
        %4225 = vmatpush1.bf16.msra.mxu0 0
        %4226 = vmatprep.subr.bf16.mxu0 0
        %4227 = vmatpush1.bf16.msra.mxu0 0
        %4228 = vmatprep.mubr.bf16.mxu0 0
        %4229 = vmatmul.mubr.bf16.gmra.mrb[0].mxu0 %v4191
        %v4230 = vpop.f32.mrb[0].mxu0
        %v4231 = vadd.f32 0.0, %v4230
        %v4232 = vpop.f32.mrb[0].mxu0
        %v4233 = vpop.f32.mrb[0].mxu0
        %v4234 = vpop.f32.mrb[0].mxu0
        %4235 = vdwg.mxu0
        %v4237 = vsel %vm1060, %v3949, 0
        %v4240 = vsel %vm1951, %v3958, 0
        %4242 = vmatprep.subr.bf16.mxu0 0
        %4243 = vmatpush1.bf16.msra.mxu0 %v4240
        %4244 = vmatprep.subr.bf16.mxu0 0
        %4245 = vmatpush1.bf16.msra.mxu0 0
        %4246 = vmatprep.subr.bf16.mxu0 0
        %4247 = vmatpush1.bf16.msra.mxu0 0
        %4248 = vmatprep.subr.bf16.mxu0 0
        %4249 = vmatpush1.bf16.msra.mxu0 0
        %4250 = vmatprep.subr.bf16.mxu0 0
        %4251 = vmatpush1.bf16.msra.mxu0 0
        %4252 = vmatprep.subr.bf16.mxu0 0
        %4253 = vmatpush1.bf16.msra.mxu0 0
        %4254 = vmatprep.subr.bf16.mxu0 0
        %4255 = vmatpush1.bf16.msra.mxu0 0
        %4256 = vmatprep.subr.bf16.mxu0 0
        %4257 = vmatpush1.bf16.msra.mxu0 0
        %4258 = vmatprep.subr.bf16.mxu0 0
        %4259 = vmatpush1.bf16.msra.mxu0 0
        %4260 = vmatprep.subr.bf16.mxu0 0
        %4261 = vmatpush1.bf16.msra.mxu0 0
        %4262 = vmatprep.subr.bf16.mxu0 0
        %4263 = vmatpush1.bf16.msra.mxu0 0
        %4264 = vmatprep.subr.bf16.mxu0 0
        %4265 = vmatpush1.bf16.msra.mxu0 0
        %4266 = vmatprep.subr.bf16.mxu0 0
        %4267 = vmatpush1.bf16.msra.mxu0 0
        %4268 = vmatprep.subr.bf16.mxu0 0
        %4269 = vmatpush1.bf16.msra.mxu0 0
        %4270 = vmatprep.subr.bf16.mxu0 0
        %4271 = vmatpush1.bf16.msra.mxu0 0
        %4272 = vmatprep.subr.bf16.mxu0 0
        %4273 = vmatpush1.bf16.msra.mxu0 0
        %4274 = vmatprep.mubr.bf16.mxu0 0
        %4275 = vmatmul.mubr.bf16.gmra.mrb[0].mxu0 %v4237
        %v4276 = vpop.f32.mrb[0].mxu0
        %v4277 = vadd.f32 0.0, %v4276
        %v4278 = vpop.f32.mrb[0].mxu0
        %v4279 = vpop.f32.mrb[0].mxu0
        %v4280 = vpop.f32.mrb[0].mxu0
        %4281 = vdwg.mxu0
        %v4283 = vsel %vm1060, %v3950, 0
        %v4286 = vsel %vm1951, %v3959, 0
        %4288 = vmatprep.subr.bf16.mxu0 0
        %4289 = vmatpush1.bf16.msra.mxu0 %v4286
        %4290 = vmatprep.subr.bf16.mxu0 0
        %4291 = vmatpush1.bf16.msra.mxu0 0
        %4292 = vmatprep.subr.bf16.mxu0 0
        %4293 = vmatpush1.bf16.msra.mxu0 0
        %4294 = vmatprep.subr.bf16.mxu0 0
        %4295 = vmatpush1.bf16.msra.mxu0 0
        %4296 = vmatprep.subr.bf16.mxu0 0
        %4297 = vmatpush1.bf16.msra.mxu0 0
        %4298 = vmatprep.subr.bf16.mxu0 0
        %4299 = vmatpush1.bf16.msra.mxu0 0
        %4300 = vmatprep.subr.bf16.mxu0 0
        %4301 = vmatpush1.bf16.msra.mxu0 0
        %4302 = vmatprep.subr.bf16.mxu0 0
        %4303 = vmatpush1.bf16.msra.mxu0 0
        %4304 = vmatprep.subr.bf16.mxu0 0
        %4305 = vmatpush1.bf16.msra.mxu0 0
        %4306 = vmatprep.subr.bf16.mxu0 0
        %4307 = vmatpush1.bf16.msra.mxu0 0
        %4308 = vmatprep.subr.bf16.mxu0 0
        %4309 = vmatpush1.bf16.msra.mxu0 0
        %4310 = vmatprep.subr.bf16.mxu0 0
        %4311 = vmatpush1.bf16.msra.mxu0 0
        %4312 = vmatprep.subr.bf16.mxu0 0
        %4313 = vmatpush1.bf16.msra.mxu0 0
        %4314 = vmatprep.subr.bf16.mxu0 0
        %4315 = vmatpush1.bf16.msra.mxu0 0
        %4316 = vmatprep.subr.bf16.mxu0 0
        %4317 = vmatpush1.bf16.msra.mxu0 0
        %4318 = vmatprep.subr.bf16.mxu0 0
        %4319 = vmatpush1.bf16.msra.mxu0 0
        %4320 = vmatprep.mubr.bf16.mxu0 0
        %4321 = vmatmul.mubr.bf16.gmra.mrb[0].mxu0 %v4283
        %v4322 = vpop.f32.mrb[0].mxu0
        %v4323 = vadd.f32 0.0, %v4322
        %v4324 = vpop.f32.mrb[0].mxu0
        %v4325 = vpop.f32.mrb[0].mxu0
        %v4326 = vpop.f32.mrb[0].mxu0
        %4327 = vdwg.mxu0
        %v4328 = vsel %vm641, %v4001, 0.0
        %v4329 = vsel %vm641, %v4047, 0.0
        %v4330 = vadd.f32 %v4328, %v4329
        %v4331 = vsel %vm641, %v4093, 0.0
        %v4332 = vadd.f32 %v4330, %v4331
        %v4333 = vsel %vm641, %v4139, 0.0
        %v4334 = vadd.f32 %v4332, %v4333
        %v4335 = vsel %vm641, %v4185, 0.0
        %v4336 = vadd.f32 %v4334, %v4335
        %v4337 = vsel %vm641, %v4231, 0.0
        %v4338 = vadd.f32 %v4336, %v4337
        %v4339 = vsel %vm641, %v4277, 0.0
        %v4340 = vadd.f32 %v4338, %v4339
        %v4341 = vsel %vm641, %v4323, 0.0
        %v4342 = vadd.f32 %v4340, %v4341
        %s4343 = scalar_lea.vmem %s5, 1
        %v4344 = vld [vmem:[%s4343] sm:$0x1]
        %v4346 = vlaneseq
        %v4347 = vshrl.u32 %v4346, 7
        %v4348 = vsub.s32 0, %v4347
        %v4349 = vrot.slane %v4344, %v4348
        %v4351 = vadd.f32 %v4342, %v4349
        %v4352 = vadd.f32 %v2552, %v4351
        %s4353 = scalar_lea.vmem %s6, 1
        %v4354 = vld [vmem:[%s4353] sm:$0x1]
        %s4355 = scalar_lea.vmem %s7, 1
        %v4356 = vld [vmem:[%s4355] sm:$0x1]
        %v4357 = vsel %vm641, %v4352, 0.0
        %4358 = vadd.xlane.f32.xlu0 %v4357
        %v4359 = vpop.xlane.xlu0 %4358
        %v4360 = vmul.f32 %v4359, %v2346
        %v4361 = vsub.f32 %v4352, %v4360
        %v4362 = vmul.f32 %v4361, %v4361
        %v4363 = vsel %vm641, %v4362, 0.0
        %4364 = vadd.xlane.f32.xlu0 %v4363
        %v4365 = vpop.xlane.xlu0 %4364
        %v4366 = vmul.f32 %v4365, %v2346
        %v4367 = vadd.f32 %v4366, 1e-05
        %v4368 = vrsqrt.pop %v4367
        %v4369 = vmul.f32 %v4361, %v4368
        %v4371 = vlaneseq
        %v4372 = vshrl.u32 %v4371, 7
        %v4373 = vsub.s32 0, %v4372
        %v4374 = vrot.slane %v4354, %v4373
        %v4376 = vmul.f32 %v4369, %v4374
        %v4378 = vlaneseq
        %v4379 = vshrl.u32 %v4378, 7
        %v4380 = vsub.s32 0, %v4379
        %v4381 = vrot.slane %v4356, %v4380
        %v4383 = vadd.f32 %v4376, %v4381
        %v4384 = vpack.c.bf16 %v4383, %v4383
        %s4385 = scalar_lea.vmem %s10, 16
        %v4386 = vld [vmem:[%s4385] sm:$0xf]
        %v4387 = vld [vmem:[%s4385 + $0x4] sm:$0xf]
        %v4388 = vld [vmem:[%s4385 + $0x8] sm:$0xf]
        %v4389 = vld [vmem:[%s4385 + $0xc] sm:$0xf]
        %s4390 = scalar_lea.vmem %s11, 1
        %v4391 = vld [vmem:[%s4390] sm:$0x1]
        %v4393 = vlaneseq
        %v4394 = vshrl.u32 %v4393, 7
        %v4395 = vsub.s32 0, %v4394
        %v4396 = vrot.slane %v4391, %v4395
        %v4402 = vunpack.c.l.b16 %v4386
        %v4403 = vunpack.c.l.b16 %v4387
        %v4404 = vunpack.c.l.b16 %v4388
        %v4405 = vunpack.c.l.b16 %v4389
        %v4406 = vpack.c.b16 %v4403, %v4402
        %v4407 = vpack.c.b16 %v4405, %v4404
        %v4411 = vsel %vm641, %v4384, 0
        %4413 = vmatprep.subr.bf16.mxu0 0
        %4414 = vmatpush1.bf16.msra.mxu0 %v4406
        %4415 = vmatprep.subr.bf16.mxu0 0
        %4416 = vmatpush1.bf16.msra.mxu0 %v4407
        %4417 = vmatprep.subr.bf16.mxu0 0
        %4418 = vmatpush1.bf16.msra.mxu0 0
        %4419 = vmatprep.subr.bf16.mxu0 0
        %4420 = vmatpush1.bf16.msra.mxu0 0
        %4421 = vmatprep.subr.bf16.mxu0 0
        %4422 = vmatpush1.bf16.msra.mxu0 0
        %4423 = vmatprep.subr.bf16.mxu0 0
        %4424 = vmatpush1.bf16.msra.mxu0 0
        %4425 = vmatprep.subr.bf16.mxu0 0
        %4426 = vmatpush1.bf16.msra.mxu0 0
        %4427 = vmatprep.subr.bf16.mxu0 0
        %4428 = vmatpush1.bf16.msra.mxu0 0
        %4429 = vmatprep.subr.bf16.mxu0 0
        %4430 = vmatpush1.bf16.msra.mxu0 0
        %4431 = vmatprep.subr.bf16.mxu0 0
        %4432 = vmatpush1.bf16.msra.mxu0 0
        %4433 = vmatprep.subr.bf16.mxu0 0
        %4434 = vmatpush1.bf16.msra.mxu0 0
        %4435 = vmatprep.subr.bf16.mxu0 0
        %4436 = vmatpush1.bf16.msra.mxu0 0
        %4437 = vmatprep.subr.bf16.mxu0 0
        %4438 = vmatpush1.bf16.msra.mxu0 0
        %4439 = vmatprep.subr.bf16.mxu0 0
        %4440 = vmatpush1.bf16.msra.mxu0 0
        %4441 = vmatprep.subr.bf16.mxu0 0
        %4442 = vmatpush1.bf16.msra.mxu0 0
        %4443 = vmatprep.subr.bf16.mxu0 0
        %4444 = vmatpush1.bf16.msra.mxu0 0
        %4445 = vmatprep.mubr.bf16.mxu0 0
        %4446 = vmatmul.mubr.bf16.gmra.mrb[0].mxu0 %v4411
        %v4447 = vpop.f32.mrb[0].mxu0
        %v4448 = vadd.f32 %v4396, %v4447
        %v4449 = vpop.f32.mrb[0].mxu0
        %v4450 = vpop.f32.mrb[0].mxu0
        %v4451 = vpop.f32.mrb[0].mxu0
        %4452 = vdwg.mxu0
        %v4453 = vmax.f32 %v4448, 0.0
        %v4454 = vpack.c.bf16 %v4453, %v4453
        %s4455 = scalar_lea.vmem %s12, 32
        %v4456 = vld [vmem:[%s4455] sm:$0xf]
        %v4457 = vld [vmem:[%s4455 + $0x4] sm:$0xf]
        %v4458 = vld [vmem:[%s4455 + $0x8] sm:$0xf]
        %v4459 = vld [vmem:[%s4455 + $0xc] sm:$0xf]
        %v4460 = vld [vmem:[%s4455 + $0x10] sm:$0xf]
        %v4461 = vld [vmem:[%s4455 + $0x14] sm:$0xf]
        %v4462 = vld [vmem:[%s4455 + $0x18] sm:$0xf]
        %v4463 = vld [vmem:[%s4455 + $0x1c] sm:$0xf]
        %s4464 = scalar_lea.vmem %s13, 1
        %v4465 = vld [vmem:[%s4464] sm:$0x1]
        %v4467 = vlaneseq
        %v4468 = vshrl.u32 %v4467, 7
        %v4469 = vsub.s32 0, %v4468
        %v4470 = vrot.slane %v4465, %v4469
        %v4480 = vunpack.c.l.b16 %v4456
        %v4481 = vunpack.c.l.b16 %v4457
        %v4482 = vunpack.c.l.b16 %v4458
        %v4483 = vunpack.c.l.b16 %v4459
        %v4484 = vunpack.c.l.b16 %v4460
        %v4485 = vunpack.c.l.b16 %v4461
        %v4486 = vunpack.c.l.b16 %v4462
        %v4487 = vunpack.c.l.b16 %v4463
        %v4488 = vpack.c.b16 %v4481, %v4480
        %v4489 = vpack.c.b16 %v4483, %v4482
        %v4490 = vpack.c.b16 %v4485, %v4484
        %v4491 = vpack.c.b16 %v4487, %v4486
        %v4497 = vsel %vm2479, %v4454, 0
        %4499 = vmatprep.subr.bf16.mxu0 0
        %4500 = vmatpush1.bf16.msra.mxu0 %v4488
        %4501 = vmatprep.subr.bf16.mxu0 0
        %4502 = vmatpush1.bf16.msra.mxu0 %v4489
        %4503 = vmatprep.subr.bf16.mxu0 0
        %4504 = vmatpush1.bf16.msra.mxu0 %v4490
        %4505 = vmatprep.subr.bf16.mxu0 0
        %4506 = vmatpush1.bf16.msra.mxu0 %v4491
        %4507 = vmatprep.subr.bf16.mxu0 0
        %4508 = vmatpush1.bf16.msra.mxu0 0
        %4509 = vmatprep.subr.bf16.mxu0 0
        %4510 = vmatpush1.bf16.msra.mxu0 0
        %4511 = vmatprep.subr.bf16.mxu0 0
        %4512 = vmatpush1.bf16.msra.mxu0 0
        %4513 = vmatprep.subr.bf16.mxu0 0
        %4514 = vmatpush1.bf16.msra.mxu0 0
        %4515 = vmatprep.subr.bf16.mxu0 0
        %4516 = vmatpush1.bf16.msra.mxu0 0
        %4517 = vmatprep.subr.bf16.mxu0 0
        %4518 = vmatpush1.bf16.msra.mxu0 0
        %4519 = vmatprep.subr.bf16.mxu0 0
        %4520 = vmatpush1.bf16.msra.mxu0 0
        %4521 = vmatprep.subr.bf16.mxu0 0
        %4522 = vmatpush1.bf16.msra.mxu0 0
        %4523 = vmatprep.subr.bf16.mxu0 0
        %4524 = vmatpush1.bf16.msra.mxu0 0
        %4525 = vmatprep.subr.bf16.mxu0 0
        %4526 = vmatpush1.bf16.msra.mxu0 0
        %4527 = vmatprep.subr.bf16.mxu0 0
        %4528 = vmatpush1.bf16.msra.mxu0 0
        %4529 = vmatprep.subr.bf16.mxu0 0
        %4530 = vmatpush1.bf16.msra.mxu0 0
        %4531 = vmatprep.mubr.bf16.mxu0 0
        %4532 = vmatmul.mubr.bf16.gmra.mrb[0].mxu0 %v4497
        %v4533 = vpop.f32.mrb[0].mxu0
        %v4534 = vadd.f32 %v4470, %v4533
        %v4535 = vpop.f32.mrb[0].mxu0
        %v4536 = vpop.f32.mrb[0].mxu0
        %v4537 = vpop.f32.mrb[0].mxu0
        %4538 = vdwg.mxu0
        %v4539 = vadd.f32 %v4383, %v4534
        %s4540 = scalar_lea.vmem %s8, 1
        %v4541 = vld [vmem:[%s4540] sm:$0x1]
        %s4542 = scalar_lea.vmem %s9, 1
        %v4543 = vld [vmem:[%s4542] sm:$0x1]
        %v4544 = vsel %vm641, %v4539, 0.0
        %4545 = vadd.xlane.f32.xlu0 %v4544
        %v4546 = vpop.xlane.xlu0 %4545
        %v4547 = vmul.f32 %v4546, %v2346
        %v4548 = vsub.f32 %v4539, %v4547
        %v4549 = vmul.f32 %v4548, %v4548
        %v4550 = vsel %vm641, %v4549, 0.0
        %4551 = vadd.xlane.f32.xlu0 %v4550
        %v4552 = vpop.xlane.xlu0 %4551
        %v4553 = vmul.f32 %v4552, %v2346
        %v4554 = vadd.f32 %v4553, 1e-05
        %v4555 = vrsqrt.pop %v4554
        %v4556 = vmul.f32 %v4548, %v4555
        %v4558 = vlaneseq
        %v4559 = vshrl.u32 %v4558, 7
        %v4560 = vsub.s32 0, %v4559
        %v4561 = vrot.slane %v4541, %v4560
        %v4563 = vmul.f32 %v4556, %v4561
        %v4565 = vlaneseq
        %v4566 = vshrl.u32 %v4565, 7
        %v4567 = vsub.s32 0, %v4566
        %v4568 = vrot.slane %v4543, %v4567
        %v4570 = vadd.f32 %v4563, %v4568
        %v4571 = vpack.c.bf16 %v4570, %v4570
        %v4572 = vld [vmem:[%s14] sm:$0xf]
        %v4573 = vld [vmem:[%s14 + $0x4] sm:$0xf]
        %v4574 = vld [vmem:[%s14 + $0x8] sm:$0xf]
        %v4575 = vld [vmem:[%s14 + $0xc] sm:$0xf]
        %v4576 = vld [vmem:[%s15] sm:$0x1]
        %v4578 = vlaneseq
        %v4579 = vshrl.u32 %v4578, 7
        %v4580 = vsub.s32 0, %v4579
        %v4581 = vrot.slane %v4576, %v4580
        %v4587 = vunpack.c.l.b16 %v4572
        %v4588 = vunpack.c.l.b16 %v4573
        %v4589 = vunpack.c.l.b16 %v4574
        %v4590 = vunpack.c.l.b16 %v4575
        %v4591 = vpack.c.b16 %v4588, %v4587
        %v4592 = vpack.c.b16 %v4590, %v4589
        %v4596 = vsel %vm641, %v4571, 0
        %4598 = vmatprep.subr.bf16.mxu0 0
        %4599 = vmatpush1.bf16.msra.mxu0 %v4591
        %4600 = vmatprep.subr.bf16.mxu0 0
        %4601 = vmatpush1.bf16.msra.mxu0 %v4592
        %4602 = vmatprep.subr.bf16.mxu0 0
        %4603 = vmatpush1.bf16.msra.mxu0 0
        %4604 = vmatprep.subr.bf16.mxu0 0
        %4605 = vmatpush1.bf16.msra.mxu0 0
        %4606 = vmatprep.subr.bf16.mxu0 0
        %4607 = vmatpush1.bf16.msra.mxu0 0
        %4608 = vmatprep.subr.bf16.mxu0 0
        %4609 = vmatpush1.bf16.msra.mxu0 0
        %4610 = vmatprep.subr.bf16.mxu0 0
        %4611 = vmatpush1.bf16.msra.mxu0 0
        %4612 = vmatprep.subr.bf16.mxu0 0
        %4613 = vmatpush1.bf16.msra.mxu0 0
        %4614 = vmatprep.subr.bf16.mxu0 0
        %4615 = vmatpush1.bf16.msra.mxu0 0
        %4616 = vmatprep.subr.bf16.mxu0 0
        %4617 = vmatpush1.bf16.msra.mxu0 0
        %4618 = vmatprep.subr.bf16.mxu0 0
        %4619 = vmatpush1.bf16.msra.mxu0 0
        %4620 = vmatprep.subr.bf16.mxu0 0
        %4621 = vmatpush1.bf16.msra.mxu0 0
        %4622 = vmatprep.subr.bf16.mxu0 0
        %4623 = vmatpush1.bf16.msra.mxu0 0
        %4624 = vmatprep.subr.bf16.mxu0 0
        %4625 = vmatpush1.bf16.msra.mxu0 0
        %4626 = vmatprep.subr.bf16.mxu0 0
        %4627 = vmatpush1.bf16.msra.mxu0 0
        %4628 = vmatprep.subr.bf16.mxu0 0
        %4629 = vmatpush1.bf16.msra.mxu0 0
        %4630 = vmatprep.mubr.bf16.mxu0 0
        %4631 = vmatmul.mubr.bf16.gmra.mrb[0].mxu0 %v4596
        %v4632 = vpop.f32.mrb[0].mxu0
        %v4633 = vadd.f32 %v4581, %v4632
        %v4634 = vpop.f32.mrb[0].mxu0
        %v4635 = vpop.f32.mrb[0].mxu0
        %v4636 = vpop.f32.mrb[0].mxu0
        %4637 = vdwg.mxu0
        %4638 = vst [vmem:[%s523] sm:$0xff] %v4633
        %s4639 = sand.u32 %s384, 1
        %s4640 = scalar_lea.sflag [#allocation3], %s4639
        %s4641 = sand.u32 %s384, 1
        %s4642 = smul.addr %s4641, 8
        %s4643 = scalar_lea.vmem [#allocation2], %s4642
        // Predicated region
        $region85: #{tpu_custom_call.1} parent=83 // pred_check
          %p4644 = pneg %p394
        $region86: #{tpu_custom_call.1} parent=83 // pred_check_branch
          %4646 = sbr.rel (%p4644) target = $region88
        $region87: #{tpu_custom_call.1} parent=83 // pred_region
          %s4648 = ssub.s32 128, 128
          %4649 = vsyncadd %s4640, %s4648
          %s4650 = smul.addr %s30, 128
          %s4651 = scalar_lea.hbm %s16, %s4650
          %s4653 = sshll.u32 %s4643, 4
          %s4654 = int_to_ptr.vmem [resolvable:$true] %s4653
          %4656 = dma.vmem_to_hbm [thread:$0]  %s4654, 128, %s4651, %s4640
        $region88: #{tpu_custom_call.1} parent=83 // pred_fallthru
          _
      $region84: #{tpu_custom_call.1} parent=5 // pred_fallthru
        _
      %p4657 = scmp.le.s32.totalorder 2, %s25
      // Predicated region
      $region89: #{tpu_custom_call.1} parent=5 // pred_check
        %p4658 = pneg %p4657
      $region90: #{tpu_custom_call.1} parent=5 // pred_check_branch
        %4660 = sbr.rel (%p4658) target = $region92
      $region91: #{tpu_custom_call.1} parent=5 // pred_region
        %s4661 = ssub.s32 %s25, 2
        // Predicated region
        $region93: #{tpu_custom_call.1} parent=91 // pred_check
          %p4662 = pneg %p400
        $region94: #{tpu_custom_call.1} parent=91 // pred_check_branch
          %4664 = sbr.rel (%p4662) target = $region96
        $region95: #{tpu_custom_call.1} parent=91 // pred_region
          %s4665 = sand.u32 %s385, 1
          %s4666 = scalar_lea.sflag [#allocation3], %s4665
          %s4667 = sand.u32 %s385, 1
          %s4668 = smul.addr %s4667, 8
          %s4669 = scalar_lea.vmem [#allocation2], %s4668
          %4670 = dma.done %s4666, 128
        $region96: #{tpu_custom_call.1} parent=91 // pred_fallthru
          _
      $region92: #{tpu_custom_call.1} parent=5 // pred_fallthru
        _
    $region6: #{tpu_custom_call.1} parent=1 // loop_footer
      %s29 = sadd.s32 1, %s25
    $region7: #{tpu_custom_call.1} parent=1 // loop_footer_branch
      %24 = sbr.rel target = $region3
    $region8: #{tpu_custom_call.1} parent=1 // loop_exit
      _
    %4671 = vsyncpa [#allocation3], 1
    %s4672 = scalar_lea.sflag [#allocation3], 1
    %4673 = vsyncpa %s4672, 1

</llo_original>
